<compile_context>
chip_gen: v7x
topology: tpu7x:2x2x1
jax: 0.10.0
libtpu: 0.0.40
codegen_flags: <defaults>
</compile_context>

<pallas_src>
import jax
import jax.numpy as jnp
from jax.experimental import pallas as pl
from jax.experimental.pallas import tpu as pltpu

FILTER_SIZES = (3, 4, 5)
MAX_FS = max(FILTER_SIZES)
MIN_FS = min(FILTER_SIZES)
NEG_INF = -1e30          # finite "minus infinity" carried through the matmul
T_CHUNK = 16             # window positions per inner time step
BT_ALIGN = 16            # batch-tile multiple (bf16 sublane packing)


def _round_up(v, m):
    return (v + m - 1) // m * m


# --------------------------------------------------------------------------- #
# Kernel
# --------------------------------------------------------------------------- #
def textcnn_kernel(x_ref, w_ref, b_ref, out_ref):
    """One grid step = one batch tile.

    x_ref  : (l_time, bt, ea)    time-leading, flag-augmented input (compute dtype)
    w_ref  : (MAX_FS, ea, n_out) per-tap fused filter banks (compute dtype)
    b_ref  : (1, n_out)          fused biases (f32)
    out_ref: (bt, n_out)         pooled features, lane-dense (f32)
    """
    l_time, bt, ea = x_ref.shape
    n_out = out_ref.shape[1]
    l_cmp = l_time - (MAX_FS - 1)          # multiple of T_CHUNK (wrapper pads)
    n_chunks = l_cmp // T_CHUNK

    # Hoist the (small) per-tap weight loads out of the time loop.
    w_taps = [w_ref[i] for i in range(MAX_FS)]       # each (ea, n_out)

    def chunk_max(c, running_max):
        s = c * T_CHUNK
        acc = jnp.zeros((T_CHUNK * bt, n_out), jnp.float32)
        for i in range(MAX_FS):                       # static tap unroll
            # Leading-dim slice + merge: layout-trivial (bt % sublane tile == 0).
            xi = x_ref[pl.ds(s + i, T_CHUNK)]         # (T_CHUNK, bt, ea)
            xi = xi.reshape(T_CHUNK * bt, ea)
            acc = acc + jnp.dot(xi, w_taps[i],
                                preferred_element_type=jnp.float32)
        acc = acc.reshape(T_CHUNK, bt, n_out)
        # Invalid window positions hold ~-1e30 (flag channel) -> max drops them.
        return jnp.maximum(running_max, jnp.max(acc, axis=0))

    init = jnp.full((bt, n_out), NEG_INF, jnp.float32)
    if n_chunks == 1:
        pooled = chunk_max(0, init)
    else:
        pooled = jax.lax.fori_loop(0, n_chunks, chunk_max, init,
                                   unroll=(n_chunks <= 8))
    # Bias + ReLU hoisted past the time max (exact: monotone in the conv value).
    out_ref[...] = jnp.maximum(pooled + b_ref[...], 0.0)


# --------------------------------------------------------------------------- #
# Wrapper
# --------------------------------------------------------------------------- #
def _pack_params(params, embed_dim, n_filters, n_out):
    """(fs, E, F) conv weights -> (MAX_FS, E+1, n_out) fused per-tap banks.

    Filter banks are packed contiguously along the output (lane) dim: columns
    [k*F, (k+1)*F) belong to FILTER_SIZES[k]; the tail up to n_out is zero.
    Channel E of tap fs-1 carries the -1e30 flag weight used for masking.
    """
    ea = embed_dim + 1
    w_all = jnp.zeros((MAX_FS, ea, n_out), jnp.float32)
    b_all = jnp.zeros((1, n_out), jnp.float32)
    for k, ((w, b), fs) in enumerate(zip(params, FILTER_SIZES)):
        c0 = k * n_filters
        w_all = w_all.at[:fs, :embed_dim, c0:c0 + n_filters].set(w)
        w_all = w_all.at[fs - 1, embed_dim, c0:c0 + n_filters].set(NEG_INF)
        b_all = b_all.at[:, c0:c0 + n_filters].set(b)
    return w_all, b_all


def textcnn_forward(x, params, n_filters, compute_dtype=jnp.bfloat16):
    """x: (B, L, E) f32.  params: [(w3,b3),(w4,b4),(w5,b5)], w:(fs,E,F), b:(1,F)."""
    B, L, E = x.shape
    n_fs = len(FILTER_SIZES)
    if L < MAX_FS:
        raise ValueError(f"seq_len {L} must be >= max filter size {MAX_FS}")

    ea = E + 1                                    # +1 validity-flag channel
    n_out = _round_up(n_fs * n_filters, 128)      # lane-dense fused output width
    l_cmp = _round_up(L - MIN_FS + 1, T_CHUNK)    # window positions (chunk-padded)
    l_time = l_cmp + MAX_FS - 1

    # ---- batch tile selection (L-aware, megacore-aware) --------------------- #
    itemsize = jnp.dtype(compute_dtype).itemsize
    lane_pad = _round_up(ea, 128)

    def vmem_est(bt_):                            # rough per-step VMEM footprint
        x_bytes = 2 * l_time * bt_ * lane_pad * itemsize         # dbl-buffered in
        w_bytes = 2 * MAX_FS * lane_pad * n_out * itemsize
        acc_bytes = (T_CHUNK * bt_ + 2 * bt_) * n_out * 4        # chunk acc + max
        out_bytes = 2 * bt_ * n_out * 4
        return x_bytes + w_bytes + acc_bytes + out_bytes

    if B <= BT_ALIGN:
        # One step: splitting pure batch padding across cores buys nothing.
        bt = BT_ALIGN
    else:
        # >=2 grid steps so both v7x TensorCores get real work.
        bt = min(32, _round_up(pl.cdiv(B, 2), BT_ALIGN))
    while bt > BT_ALIGN and vmem_est(bt) > 6 * 1024 * 1024:
        bt -= BT_ALIGN    # stay far under v5e's 16 MiB / v7x's 32 MiB scoped VMEM
    b_pad = _round_up(B, bt)

    # ---- operand packing ----------------------------------------------------- #
    w_all, b_all = _pack_params(params, E, n_filters, n_out)
    w_all = w_all.astype(compute_dtype)           # bf16 weights: native MXU path

    # Time-leading, flag-augmented input: channel E is 1.0 on time-padding rows.
    xp = jnp.zeros((l_time, b_pad, ea), compute_dtype)
    xp = xp.at[:L, :B, :E].set(jnp.transpose(x, (1, 0, 2)).astype(compute_dtype))
    xp = xp.at[L:, :, E].set(1.0)

    out = pl.pallas_call(
        textcnn_kernel,
        out_shape=jax.ShapeDtypeStruct((b_pad, n_out), jnp.float32),
        grid=(b_pad // bt,),
        in_specs=[
            pl.BlockSpec((l_time, bt, ea), lambda b: (0, b, 0)),
            pl.BlockSpec((MAX_FS, ea, n_out), lambda b: (0, 0, 0)),
            pl.BlockSpec((1, n_out), lambda b: (0, 0)),
        ],
        out_specs=pl.BlockSpec((bt, n_out), lambda b: (b, 0)),
        compiler_params=pltpu.CompilerParams(
            dimension_semantics=("parallel",),
            vmem_limit_bytes=32 * 1024 * 1024),
    )(xp, w_all, b_all)

    # Single contiguous strip: batch-padding rows and lane-padding columns.
    return out[:B, :n_fs * n_filters]


# --------------------------------------------------------------------------- #
# Pure-JAX reference (mirrors the PyTorch forward, eval mode, f32)
# --------------------------------------------------------------------------- #
def textcnn_reference(x, params, n_filters):
    B, L, _ = x.shape
    outs = []
    for (w, bias), fs in zip(params, FILTER_SIZES):
        t_out = L - fs + 1
        acc = jnp.zeros((B, t_out, n_filters), jnp.float32)
        for i in range(fs):
            acc += jnp.einsum('ble,ef->blf', x[:, i:i + t_out, :], w[i])
        acc = jax.nn.relu(acc + bias[0])
        outs.append(jnp.max(acc, axis=1))
    return jnp.concatenate(outs, axis=1)


def init_params(key, embed_dim, n_filters):
    """Synthetic params with nn.Conv2d shapes (F,1,fs,E) mapped to (fs,E,F)."""
    params = []
    for fs in FILTER_SIZES:
        key, wk, bk = jax.random.split(key, 3)
        w_torch = jax.random.normal(wk, (n_filters, fs, embed_dim),
                                    jnp.float32) * 0.1       # (F, fs, E)
        w = jnp.transpose(w_torch, (1, 2, 0))                 # (fs, E, F)
        b = jax.random.normal(bk, (1, n_filters), jnp.float32) * 0.01
        params.append((w, b))
    return params


if __name__ == "__main__":
    # Main config: matches the module defaults (n_filters=100, fs=(3,4,5)).
    B, L, E = 2, 16, 32
    n_filters = 100

    key = jax.random.PRNGKey(0)
    key, xk = jax.random.split(key)
    x = jax.random.normal(xk, (B, L, E), jnp.float32)
    params = init_params(key, E, n_filters)
    ref = textcnn_reference(x, params, n_filters)

    # f32 operands.
    feats32 = jax.block_until_ready(
        textcnn_forward(x, params, n_filters, compute_dtype=jnp.float32))
    assert feats32.shape == (B, n_filters * len(FILTER_SIZES)), feats32.shape
    err32 = float(jnp.max(jnp.abs(feats32 - ref)))
    assert jnp.allclose(feats32, ref, atol=2e-2, rtol=2e-2), err32

    # bf16 matmul operands (default MXU path); f32 accumulate -> looser check.
    feats_bf = jax.block_until_ready(
        textcnn_forward(x, params, n_filters, compute_dtype=jnp.bfloat16))
    errbf = float(jnp.max(jnp.abs(feats_bf - ref)))
    assert jnp.allclose(feats_bf, ref, atol=8e-2, rtol=8e-2), errbf

    # Off-grid shapes exercise every padding path (B, L, E, F all unaligned).
    B2, L2, E2, F2 = 5, 12, 24, 36
    key, xk2, pk2 = jax.random.split(key, 3)
    x2 = jax.random.normal(xk2, (B2, L2, E2), jnp.float32)
    params2 = init_params(pk2, E2, F2)
    ref2 = textcnn_reference(x2, params2, F2)
    feats2 = jax.block_until_ready(
        textcnn_forward(x2, params2, F2, compute_dtype=jnp.float32))
    assert feats2.shape == (B2, F2 * len(FILTER_SIZES)), feats2.shape
    err2 = float(jnp.max(jnp.abs(feats2 - ref2)))
    assert jnp.allclose(feats2, ref2, atol=2e-2, rtol=2e-2), err2

    # Longer sequence + larger batch: exercises the in-kernel time-chunk loop
    # (rolled fori_loop running max) and the multi-step "parallel" batch grid.
    B3, L3, E3, F3 = 40, 200, 32, 64
    key, xk3, pk3 = jax.random.split(key, 3)
    x3 = jax.random.normal(xk3, (B3, L3, E3), jnp.float32)
    params3 = init_params(pk3, E3, F3)
    ref3 = textcnn_reference(x3, params3, F3)
    feats3 = jax.block_until_ready(
        textcnn_forward(x3, params3, F3, compute_dtype=jnp.float32))
    assert feats3.shape == (B3, F3 * len(FILTER_SIZES)), feats3.shape
    err3 = float(jnp.max(jnp.abs(feats3 - ref3)))
    assert jnp.allclose(feats3, ref3, atol=2e-2, rtol=2e-2), err3

    print("KERNEL_OK")
</pallas_src>

<mosaic_0001>
module attributes {stable_mosaic.version = 11 : i64} {
  func.func @textcnn_kernel(%arg0: i32, %arg1: memref<20x16x33xf32, #tpu.memory_space<vmem>>, %arg2: memref<5x33x384xf32, #tpu.memory_space<vmem>>, %arg3: memref<1x384xf32, #tpu.memory_space<vmem>>, %arg4: memref<16x384xf32, #tpu.memory_space<vmem>>) attributes {dimension_semantics = [#tpu.dimension_semantics<parallel>], iteration_bounds = array<i64: 1>, scalar_prefetch = 0 : i64, scratch_operands = 0 : i64, tpu.core_type = #tpu.core_type<tc>, window_params = [{transform_indices = @transform_0, window_bounds = array<i64: 20, 16, 33>}, {pipeline_mode = #tpu.pipeline_mode<synchronous>, transform_indices = @transform_1, window_bounds = array<i64: 5, 33, 384>}, {pipeline_mode = #tpu.pipeline_mode<synchronous>, transform_indices = @transform_2, window_bounds = array<i64: 1, 384>}, {transform_indices = @transform_3, window_bounds = array<i64: 16, 384>}]} {
    %c0 = arith.constant 0 : index
    %c0_0 = arith.constant 0 : index
    %c0_1 = arith.constant 0 : index
    %0 = vector.load %arg2[%c0, %c0_0, %c0_1] : memref<5x33x384xf32, #tpu.memory_space<vmem>>, vector<1x33x384xf32>
    %1 = vector.shape_cast %0 : vector<1x33x384xf32> to vector<33x384xf32>
    %c1 = arith.constant 1 : index
    %c0_2 = arith.constant 0 : index
    %c0_3 = arith.constant 0 : index
    %2 = vector.load %arg2[%c1, %c0_2, %c0_3] : memref<5x33x384xf32, #tpu.memory_space<vmem>>, vector<1x33x384xf32>
    %3 = vector.shape_cast %2 : vector<1x33x384xf32> to vector<33x384xf32>
    %c2 = arith.constant 2 : index
    %c0_4 = arith.constant 0 : index
    %c0_5 = arith.constant 0 : index
    %4 = vector.load %arg2[%c2, %c0_4, %c0_5] : memref<5x33x384xf32, #tpu.memory_space<vmem>>, vector<1x33x384xf32>
    %5 = vector.shape_cast %4 : vector<1x33x384xf32> to vector<33x384xf32>
    %c3 = arith.constant 3 : index
    %c0_6 = arith.constant 0 : index
    %c0_7 = arith.constant 0 : index
    %6 = vector.load %arg2[%c3, %c0_6, %c0_7] : memref<5x33x384xf32, #tpu.memory_space<vmem>>, vector<1x33x384xf32>
    %7 = vector.shape_cast %6 : vector<1x33x384xf32> to vector<33x384xf32>
    %c4 = arith.constant 4 : index
    %c0_8 = arith.constant 0 : index
    %c0_9 = arith.constant 0 : index
    %8 = vector.load %arg2[%c4, %c0_8, %c0_9] : memref<5x33x384xf32, #tpu.memory_space<vmem>>, vector<1x33x384xf32>
    %9 = vector.shape_cast %8 : vector<1x33x384xf32> to vector<33x384xf32>
    %cst = arith.constant -1.000000e+30 : f32
    %10 = vector.broadcast %cst : f32 to vector<16x384xf32>
    %cst_10 = arith.constant 0.000000e+00 : f32
    %11 = vector.broadcast %cst_10 : f32 to vector<256x384xf32>
    %c0_11 = arith.constant 0 : index
    %c0_12 = arith.constant 0 : index
    %c0_13 = arith.constant 0 : index
    %12 = vector.load %arg1[%c0_11, %c0_12, %c0_13] : memref<20x16x33xf32, #tpu.memory_space<vmem>>, vector<16x16x33xf32>
    %13 = vector.shape_cast %12 : vector<16x16x33xf32> to vector<256x33xf32>
    %cst_14 = arith.constant dense<0.000000e+00> : vector<256x384xf32>
    %14 = tpu.matmul %13, %1, %cst_14 {dimension_numbers = #tpu.dot_dimension_numbers<[1], [0], [0], [1], [0, 0, 1, 1], [], []>} : vector<256x33xf32>, vector<33x384xf32>, vector<256x384xf32> -> vector<256x384xf32>
    %15 = arith.addf %11, %14 : vector<256x384xf32>
    %c1_15 = arith.constant 1 : index
    %c0_16 = arith.constant 0 : index
    %c0_17 = arith.constant 0 : index
    %16 = vector.load %arg1[%c1_15, %c0_16, %c0_17] : memref<20x16x33xf32, #tpu.memory_space<vmem>>, vector<16x16x33xf32>
    %17 = vector.shape_cast %16 : vector<16x16x33xf32> to vector<256x33xf32>
    %cst_18 = arith.constant dense<0.000000e+00> : vector<256x384xf32>
    %18 = tpu.matmul %17, %3, %cst_18 {dimension_numbers = #tpu.dot_dimension_numbers<[1], [0], [0], [1], [0, 0, 1, 1], [], []>} : vector<256x33xf32>, vector<33x384xf32>, vector<256x384xf32> -> vector<256x384xf32>
    %19 = arith.addf %15, %18 : vector<256x384xf32>
    %c2_19 = arith.constant 2 : index
    %c0_20 = arith.constant 0 : index
    %c0_21 = arith.constant 0 : index
    %20 = vector.load %arg1[%c2_19, %c0_20, %c0_21] : memref<20x16x33xf32, #tpu.memory_space<vmem>>, vector<16x16x33xf32>
    %21 = vector.shape_cast %20 : vector<16x16x33xf32> to vector<256x33xf32>
    %cst_22 = arith.constant dense<0.000000e+00> : vector<256x384xf32>
    %22 = tpu.matmul %21, %5, %cst_22 {dimension_numbers = #tpu.dot_dimension_numbers<[1], [0], [0], [1], [0, 0, 1, 1], [], []>} : vector<256x33xf32>, vector<33x384xf32>, vector<256x384xf32> -> vector<256x384xf32>
    %23 = arith.addf %19, %22 : vector<256x384xf32>
    %c3_23 = arith.constant 3 : index
    %c0_24 = arith.constant 0 : index
    %c0_25 = arith.constant 0 : index
    %24 = vector.load %arg1[%c3_23, %c0_24, %c0_25] : memref<20x16x33xf32, #tpu.memory_space<vmem>>, vector<16x16x33xf32>
    %25 = vector.shape_cast %24 : vector<16x16x33xf32> to vector<256x33xf32>
    %cst_26 = arith.constant dense<0.000000e+00> : vector<256x384xf32>
    %26 = tpu.matmul %25, %7, %cst_26 {dimension_numbers = #tpu.dot_dimension_numbers<[1], [0], [0], [1], [0, 0, 1, 1], [], []>} : vector<256x33xf32>, vector<33x384xf32>, vector<256x384xf32> -> vector<256x384xf32>
    %27 = arith.addf %23, %26 : vector<256x384xf32>
    %c4_27 = arith.constant 4 : index
    %c0_28 = arith.constant 0 : index
    %c0_29 = arith.constant 0 : index
    %28 = vector.load %arg1[%c4_27, %c0_28, %c0_29] : memref<20x16x33xf32, #tpu.memory_space<vmem>>, vector<16x16x33xf32>
    %29 = vector.shape_cast %28 : vector<16x16x33xf32> to vector<256x33xf32>
    %cst_30 = arith.constant dense<0.000000e+00> : vector<256x384xf32>
    %30 = tpu.matmul %29, %9, %cst_30 {dimension_numbers = #tpu.dot_dimension_numbers<[1], [0], [0], [1], [0, 0, 1, 1], [], []>} : vector<256x33xf32>, vector<33x384xf32>, vector<256x384xf32> -> vector<256x384xf32>
    %31 = arith.addf %27, %30 : vector<256x384xf32>
    %32 = vector.shape_cast %31 : vector<256x384xf32> to vector<16x16x384xf32>
    %cst_31 = arith.constant dense<0xFF800000> : vector<16x384xf32>
    %33 = vector.multi_reduction <maximumf>, %32, %cst_31 [0] : vector<16x16x384xf32> to vector<16x384xf32>
    %34 = arith.maximumf %10, %33 : vector<16x384xf32>
    %c0_32 = arith.constant 0 : index
    %c0_33 = arith.constant 0 : index
    %35 = vector.load %arg3[%c0_32, %c0_33] : memref<1x384xf32, #tpu.memory_space<vmem>>, vector<1x384xf32>
    %36 = vector.broadcast %35 : vector<1x384xf32> to vector<16x384xf32>
    %37 = arith.addf %34, %36 : vector<16x384xf32>
    %cst_34 = arith.constant 0.000000e+00 : f32
    %38 = vector.broadcast %cst_34 : f32 to vector<16x384xf32>
    %39 = arith.maximumf %37, %38 : vector<16x384xf32>
    %c0_35 = arith.constant 0 : index
    %c0_36 = arith.constant 0 : index
    %40 = vector.load %arg4[%c0_35, %c0_36] : memref<16x384xf32, #tpu.memory_space<vmem>>, vector<16x384xf32>
    tpu.vector_store %arg4[%c0_35, %c0_36], %39 {strides = array<i32>} : memref<16x384xf32, #tpu.memory_space<vmem>>, vector<16x384xf32>,
    return
  }
  func.func @transform_0(%arg0: i32) -> (i32, i32, i32) {
    %c0_i32 = arith.constant 0 : i32
    %c0_i32_0 = arith.constant 0 : i32
    %c0_i32_1 = arith.constant 0 : i32
    return %c0_i32, %arg0, %c0_i32_0 : i32, i32, i32
  }
  func.func @transform_1(%arg0: i32) -> (i32, i32, i32) {
    %c0_i32 = arith.constant 0 : i32
    %c0_i32_0 = arith.constant 0 : i32
    %c0_i32_1 = arith.constant 0 : i32
    %c0_i32_2 = arith.constant 0 : i32
    return %c0_i32, %c0_i32_0, %c0_i32_1 : i32, i32, i32
  }
  func.func @transform_2(%arg0: i32) -> (i32, i32) {
    %c0_i32 = arith.constant 0 : i32
    %c0_i32_0 = arith.constant 0 : i32
    %c0_i32_1 = arith.constant 0 : i32
    return %c0_i32, %c0_i32_0 : i32, i32
  }
  func.func @transform_3(%arg0: i32) -> (i32, i32) {
    %c0_i32 = arith.constant 0 : i32
    %c0_i32_0 = arith.constant 0 : i32
    return %arg0, %c0_i32 : i32, i32
  }
}

</mosaic_0001>

<llo_original>
// kernel: tpu_custom_call.1
$region0: #{tpu_custom_call.1}
  #allocation0 [shape = 'u32[]', space=smem, size = 0x4, offset = 0x4, fixed_abs, tag = 'smem constant byte address 0x4 - core index']
  #allocation1 [shape = 'u32[144,128]{1,0:T(1,128)}', space=vmem, size = 0x12000, scoped, tag = 'internal scratch']
  %s0 = inlined_call_operand.hbm [shape: f32[20,16,33], index: 0, kind: input, shape index: {}]
  %s1 = inlined_call_operand.hbm [shape: f32[5,33,384], index: 1, kind: input, shape index: {}]
  %s2 = inlined_call_operand.vmem [shape: f32[1,384], index: 2, kind: input, shape index: {}]
  %s3 = inlined_call_operand.hbm [shape: f32[16,384], index: 3, kind: output, shape index: {}]
  %s4 = sld [smem:[#allocation0]]
  $region30: #{tpu_custom_call.1} parent=0
    _
  %s6 = ssub.s32 1, %s4
  %s7 = scalar_select 0, %s6, %s4
  $region1: #{tpu_custom_call.1} parent=0
    #allocation2 [shape = 'u8[163840]{0}', space=vmem, size = 0x28000, scoped, tag = 'input window, operand 0, single buffered']
    #allocation3 [shape = 's32[1]{0}', space=sflag, size = 0x4, scoped, tag = 'scoped memory for tpu_custom_call.1']
    #allocation4 [shape = 's32[1]{0}', space=sflag, size = 0x4, scoped, tag = 'scoped memory for tpu_custom_call.1']
    #allocation5 [shape = 'u8[307200]{0}', space=vmem, size = 0x4b000, scoped, tag = 'input window, operand 1, single buffered']
    #allocation6 [shape = 's32[1]{0}', space=sflag, size = 0x4, scoped, tag = 'scoped memory for tpu_custom_call.1']
    #allocation7 [shape = 'u8[24576]{0}', space=vmem, size = 0x6000, scoped, tag = 'output window, operand 0, single buffered']
    %8 = vsyncpa [#allocation3], 0
    %9 = vsyncpa [#allocation6], 0
    %10 = vsyncpa [#allocation4], 0
    // Predicated region
    $region2: #{tpu_custom_call.1} parent=1 // pred_check
      _
    $region3: #{tpu_custom_call.1} parent=1 // pred_check_branch
      %12 = sbr.rel (0) target = $region5
    $region4: #{tpu_custom_call.1} parent=1 // pred_region
      %s14 = ssub.s32 5120, 5120
      %15 = vsyncadd [#allocation3], %s14
      %s16 = sshll.u32 [#allocation2], 4
      %s17 = int_to_ptr.vmem [resolvable:$true] %s16
      %22 = dma.hbm_to_vmem [thread:$0]  %s0, 5120, %s17, [#allocation3], 128, 128, 8
    $region5: #{tpu_custom_call.1} parent=1 // pred_fallthru
      _
    // Predicated region
    $region6: #{tpu_custom_call.1} parent=1 // pred_check
      _
    $region7: #{tpu_custom_call.1} parent=1 // pred_check_branch
      %24 = sbr.rel (0) target = $region9
    $region8: #{tpu_custom_call.1} parent=1 // pred_region
      %s26 = ssub.s32 9600, 9600
      %27 = vsyncadd [#allocation6], %s26
      %s28 = sshll.u32 [#allocation5], 4
      %s29 = int_to_ptr.vmem [resolvable:$true] %s28
      %34 = dma.hbm_to_vmem [thread:$0]  %s1, 9600, %s29, [#allocation6], 384, 384, 24
    $region9: #{tpu_custom_call.1} parent=1 // pred_fallthru
      _
    // Predicated region
    $region10: #{tpu_custom_call.1} parent=1 // pred_check
      _
    $region11: #{tpu_custom_call.1} parent=1 // pred_check_branch
      %36 = sbr.rel (0) target = $region13
    $region12: #{tpu_custom_call.1} parent=1 // pred_region
      _
    $region13: #{tpu_custom_call.1} parent=1 // pred_fallthru
      _
    // Predicated region
    $region14: #{tpu_custom_call.1} parent=1 // pred_check
      _
    $region15: #{tpu_custom_call.1} parent=1 // pred_check_branch
      %38 = sbr.rel (0) target = $region17
    $region16: #{tpu_custom_call.1} parent=1 // pred_region
      %39 = dma.done [#allocation3], 5120
    $region17: #{tpu_custom_call.1} parent=1 // pred_fallthru
      _
    // Predicated region
    $region18: #{tpu_custom_call.1} parent=1 // pred_check
      _
    $region19: #{tpu_custom_call.1} parent=1 // pred_check_branch
      %41 = sbr.rel (0) target = $region21
    $region20: #{tpu_custom_call.1} parent=1 // pred_region
      %42 = dma.done [#allocation6], 9600
    $region21: #{tpu_custom_call.1} parent=1 // pred_fallthru
      _
    %v43 = vld [vmem:[#allocation5] sm:$0xff]
    %v44 = vld [vmem:[#allocation5 + $0x8] sm:$0xff]
    %v45 = vld [vmem:[#allocation5 + $0x10] sm:$0xff]
    %v46 = vld [vmem:[#allocation5 + $0x18] sm:$0xff]
    %v47 = vld [vmem:[#allocation5 + $0x20] sm:$0xff]
    %v48 = vld [vmem:[#allocation5 + $0x28] sm:$0xff]
    %v49 = vld [vmem:[#allocation5 + $0x30] sm:$0xff]
    %v50 = vld [vmem:[#allocation5 + $0x38] sm:$0xff]
    %v51 = vld [vmem:[#allocation5 + $0x40] sm:$0xff]
    %v52 = vld [vmem:[#allocation5 + $0x48] sm:$0xff]
    %v53 = vld [vmem:[#allocation5 + $0x50] sm:$0xff]
    %v54 = vld [vmem:[#allocation5 + $0x58] sm:$0xff]
    %v55 = vld [vmem:[#allocation5 + $0x60] sm:$0x1]
    %v56 = vld [vmem:[#allocation5 + $0x68] sm:$0x1]
    %v57 = vld [vmem:[#allocation5 + $0x70] sm:$0x1]
    %s58 = scalar_lea.vmem [#allocation5], 120
    %v59 = vld [vmem:[%s58] sm:$0xff]
    %v60 = vld [vmem:[%s58 + $0x8] sm:$0xff]
    %v61 = vld [vmem:[%s58 + $0x10] sm:$0xff]
    %v62 = vld [vmem:[%s58 + $0x18] sm:$0xff]
    %v63 = vld [vmem:[%s58 + $0x20] sm:$0xff]
    %v64 = vld [vmem:[%s58 + $0x28] sm:$0xff]
    %v65 = vld [vmem:[%s58 + $0x30] sm:$0xff]
    %v66 = vld [vmem:[%s58 + $0x38] sm:$0xff]
    %v67 = vld [vmem:[%s58 + $0x40] sm:$0xff]
    %v68 = vld [vmem:[%s58 + $0x48] sm:$0xff]
    %v69 = vld [vmem:[%s58 + $0x50] sm:$0xff]
    %v70 = vld [vmem:[%s58 + $0x58] sm:$0xff]
    %v71 = vld [vmem:[%s58 + $0x60] sm:$0x1]
    %v72 = vld [vmem:[%s58 + $0x68] sm:$0x1]
    %v73 = vld [vmem:[%s58 + $0x70] sm:$0x1]
    %s74 = scalar_lea.vmem [#allocation5], 240
    %v75 = vld [vmem:[%s74] sm:$0xff]
    %v76 = vld [vmem:[%s74 + $0x8] sm:$0xff]
    %v77 = vld [vmem:[%s74 + $0x10] sm:$0xff]
    %v78 = vld [vmem:[%s74 + $0x18] sm:$0xff]
    %v79 = vld [vmem:[%s74 + $0x20] sm:$0xff]
    %v80 = vld [vmem:[%s74 + $0x28] sm:$0xff]
    %v81 = vld [vmem:[%s74 + $0x30] sm:$0xff]
    %v82 = vld [vmem:[%s74 + $0x38] sm:$0xff]
    %v83 = vld [vmem:[%s74 + $0x40] sm:$0xff]
    %v84 = vld [vmem:[%s74 + $0x48] sm:$0xff]
    %v85 = vld [vmem:[%s74 + $0x50] sm:$0xff]
    %v86 = vld [vmem:[%s74 + $0x58] sm:$0xff]
    %v87 = vld [vmem:[%s74 + $0x60] sm:$0x1]
    %v88 = vld [vmem:[%s74 + $0x68] sm:$0x1]
    %v89 = vld [vmem:[%s74 + $0x70] sm:$0x1]
    %s90 = scalar_lea.vmem [#allocation5], 360
    %v91 = vld [vmem:[%s90] sm:$0xff]
    %v92 = vld [vmem:[%s90 + $0x8] sm:$0xff]
    %v93 = vld [vmem:[%s90 + $0x10] sm:$0xff]
    %v94 = vld [vmem:[%s90 + $0x18] sm:$0xff]
    %v95 = vld [vmem:[%s90 + $0x20] sm:$0xff]
    %v96 = vld [vmem:[%s90 + $0x28] sm:$0xff]
    %v97 = vld [vmem:[%s90 + $0x30] sm:$0xff]
    %v98 = vld [vmem:[%s90 + $0x38] sm:$0xff]
    %v99 = vld [vmem:[%s90 + $0x40] sm:$0xff]
    %v100 = vld [vmem:[%s90 + $0x48] sm:$0xff]
    %v101 = vld [vmem:[%s90 + $0x50] sm:$0xff]
    %v102 = vld [vmem:[%s90 + $0x58] sm:$0xff]
    %v103 = vld [vmem:[%s90 + $0x60] sm:$0x1]
    %v104 = vld [vmem:[%s90 + $0x68] sm:$0x1]
    %v105 = vld [vmem:[%s90 + $0x70] sm:$0x1]
    %s106 = scalar_lea.vmem [#allocation5], 480
    %v107 = vld [vmem:[%s106] sm:$0xff]
    %v108 = vld [vmem:[%s106 + $0x8] sm:$0xff]
    %v109 = vld [vmem:[%s106 + $0x10] sm:$0xff]
    %v110 = vld [vmem:[%s106 + $0x18] sm:$0xff]
    %v111 = vld [vmem:[%s106 + $0x20] sm:$0xff]
    %v112 = vld [vmem:[%s106 + $0x28] sm:$0xff]
    %v113 = vld [vmem:[%s106 + $0x30] sm:$0xff]
    %v114 = vld [vmem:[%s106 + $0x38] sm:$0xff]
    %v115 = vld [vmem:[%s106 + $0x40] sm:$0xff]
    %v116 = vld [vmem:[%s106 + $0x48] sm:$0xff]
    %v117 = vld [vmem:[%s106 + $0x50] sm:$0xff]
    %v118 = vld [vmem:[%s106 + $0x58] sm:$0xff]
    %v119 = vld [vmem:[%s106 + $0x60] sm:$0x1]
    %v120 = vld [vmem:[%s106 + $0x68] sm:$0x1]
    %v121 = vld [vmem:[%s106 + $0x70] sm:$0x1]
    %v122 = vld [vmem:[#allocation2] sm:$0xff]
    %v123 = vld [vmem:[#allocation2 + $0x8] sm:$0xff]
    %v124 = vld [vmem:[#allocation2 + $0x10] sm:$0xff]
    %v125 = vld [vmem:[#allocation2 + $0x18] sm:$0xff]
    %v126 = vld [vmem:[#allocation2 + $0x20] sm:$0xff]
    %v127 = vld [vmem:[#allocation2 + $0x28] sm:$0xff]
    %v128 = vld [vmem:[#allocation2 + $0x30] sm:$0xff]
    %v129 = vld [vmem:[#allocation2 + $0x38] sm:$0xff]
    %v130 = vld [vmem:[#allocation2 + $0x40] sm:$0xff]
    %v131 = vld [vmem:[#allocation2 + $0x48] sm:$0xff]
    %v132 = vld [vmem:[#allocation2 + $0x50] sm:$0xff]
    %v133 = vld [vmem:[#allocation2 + $0x58] sm:$0xff]
    %v134 = vld [vmem:[#allocation2 + $0x60] sm:$0xff]
    %v135 = vld [vmem:[#allocation2 + $0x68] sm:$0xff]
    %v136 = vld [vmem:[#allocation2 + $0x70] sm:$0xff]
    %v137 = vld [vmem:[#allocation2 + $0x78] sm:$0xff]
    %v138 = vld [vmem:[#allocation2 + $0x80] sm:$0xff]
    %v139 = vld [vmem:[#allocation2 + $0x88] sm:$0xff]
    %v140 = vld [vmem:[#allocation2 + $0x90] sm:$0xff]
    %v141 = vld [vmem:[#allocation2 + $0x98] sm:$0xff]
    %v142 = vld [vmem:[#allocation2 + $0xa0] sm:$0xff]
    %v143 = vld [vmem:[#allocation2 + $0xa8] sm:$0xff]
    %v144 = vld [vmem:[#allocation2 + $0xb0] sm:$0xff]
    %v145 = vld [vmem:[#allocation2 + $0xb8] sm:$0xff]
    %v146 = vld [vmem:[#allocation2 + $0xc0] sm:$0xff]
    %v147 = vld [vmem:[#allocation2 + $0xc8] sm:$0xff]
    %v148 = vld [vmem:[#allocation2 + $0xd0] sm:$0xff]
    %v149 = vld [vmem:[#allocation2 + $0xd8] sm:$0xff]
    %v150 = vld [vmem:[#allocation2 + $0xe0] sm:$0xff]
    %v151 = vld [vmem:[#allocation2 + $0xe8] sm:$0xff]
    %v152 = vld [vmem:[#allocation2 + $0xf0] sm:$0xff]
    %v153 = vld [vmem:[#allocation2 + $0xf8] sm:$0xff]
    %s154 = scalar_lea.vmem [#allocation2], 16
    %v155 = vld [vmem:[%s154] sm:$0xff]
    %v156 = vld [vmem:[%s154 + $0x8] sm:$0xff]
    %v157 = vld [vmem:[%s154 + $0x10] sm:$0xff]
    %v158 = vld [vmem:[%s154 + $0x18] sm:$0xff]
    %v159 = vld [vmem:[%s154 + $0x20] sm:$0xff]
    %v160 = vld [vmem:[%s154 + $0x28] sm:$0xff]
    %v161 = vld [vmem:[%s154 + $0x30] sm:$0xff]
    %v162 = vld [vmem:[%s154 + $0x38] sm:$0xff]
    %v163 = vld [vmem:[%s154 + $0x40] sm:$0xff]
    %v164 = vld [vmem:[%s154 + $0x48] sm:$0xff]
    %v165 = vld [vmem:[%s154 + $0x50] sm:$0xff]
    %v166 = vld [vmem:[%s154 + $0x58] sm:$0xff]
    %v167 = vld [vmem:[%s154 + $0x60] sm:$0xff]
    %v168 = vld [vmem:[%s154 + $0x68] sm:$0xff]
    %v169 = vld [vmem:[%s154 + $0x70] sm:$0xff]
    %v170 = vld [vmem:[%s154 + $0x78] sm:$0xff]
    %v171 = vld [vmem:[%s154 + $0x80] sm:$0xff]
    %v172 = vld [vmem:[%s154 + $0x88] sm:$0xff]
    %v173 = vld [vmem:[%s154 + $0x90] sm:$0xff]
    %v174 = vld [vmem:[%s154 + $0x98] sm:$0xff]
    %v175 = vld [vmem:[%s154 + $0xa0] sm:$0xff]
    %v176 = vld [vmem:[%s154 + $0xa8] sm:$0xff]
    %v177 = vld [vmem:[%s154 + $0xb0] sm:$0xff]
    %v178 = vld [vmem:[%s154 + $0xb8] sm:$0xff]
    %v179 = vld [vmem:[%s154 + $0xc0] sm:$0xff]
    %v180 = vld [vmem:[%s154 + $0xc8] sm:$0xff]
    %v181 = vld [vmem:[%s154 + $0xd0] sm:$0xff]
    %v182 = vld [vmem:[%s154 + $0xd8] sm:$0xff]
    %v183 = vld [vmem:[%s154 + $0xe0] sm:$0xff]
    %v184 = vld [vmem:[%s154 + $0xe8] sm:$0xff]
    %v185 = vld [vmem:[%s154 + $0xf0] sm:$0xff]
    %v186 = vld [vmem:[%s154 + $0xf8] sm:$0xff]
    %vm187 = vcmask 269312
    %v189 = vsel %vm187, %v155, 0
    %v192 = vsel %vm187, %v156, 0
    %v195 = vsel %vm187, %v157, 0
    %v198 = vsel %vm187, %v158, 0
    %v201 = vsel %vm187, %v159, 0
    %v204 = vsel %vm187, %v160, 0
    %v207 = vsel %vm187, %v161, 0
    %v210 = vsel %vm187, %v162, 0
    %v213 = vsel %vm187, %v163, 0
    %v216 = vsel %vm187, %v164, 0
    %v219 = vsel %vm187, %v165, 0
    %v222 = vsel %vm187, %v166, 0
    %v225 = vsel %vm187, %v167, 0
    %v228 = vsel %vm187, %v168, 0
    %v231 = vsel %vm187, %v169, 0
    %v234 = vsel %vm187, %v170, 0
    %v237 = vsel %vm187, %v171, 0
    %v240 = vsel %vm187, %v172, 0
    %v243 = vsel %vm187, %v173, 0
    %v246 = vsel %vm187, %v174, 0
    %v249 = vsel %vm187, %v175, 0
    %v252 = vsel %vm187, %v176, 0
    %v255 = vsel %vm187, %v177, 0
    %v258 = vsel %vm187, %v178, 0
    %v261 = vsel %vm187, %v179, 0
    %v264 = vsel %vm187, %v180, 0
    %v267 = vsel %vm187, %v181, 0
    %v270 = vsel %vm187, %v182, 0
    %v273 = vsel %vm187, %v183, 0
    %v276 = vsel %vm187, %v184, 0
    %v279 = vsel %vm187, %v185, 0
    %v282 = vsel %vm187, %v186, 0
    %vm284 = vcmask 1040384
    %v286 = vsel %vm284, %v71, 0
    %v289 = vsel %vm284, %v72, 0
    %v292 = vsel %vm284, %v73, 0
    %294 = vmatprep.subr.mxu0 %v60
    %295 = vmatpush1.msra.mxu0 %v59
    %296 = vmatprep.subr.mxu0 %v63
    %297 = vmatpush1.msra.mxu0 %v62
    %298 = vmatprep.subr.mxu0 %v66
    %299 = vmatpush1.msra.mxu0 %v65
    %300 = vmatprep.subr.mxu0 %v69
    %301 = vmatpush1.msra.mxu0 %v68
    %302 = vmatprep.subr.mxu0 %v289
    %303 = vmatpush1.msra.mxu0 %v286
    %304 = vmatprep.subr.mxu0 0.0
    %305 = vmatpush1.msra.mxu0 0.0
    %306 = vmatprep.subr.mxu0 0.0
    %307 = vmatpush1.msra.mxu0 0.0
    %308 = vmatprep.subr.mxu0 0.0
    %309 = vmatpush1.msra.mxu0 0.0
    %310 = vmatprep.subr.mxu0 0.0
    %311 = vmatpush1.msra.mxu0 0.0
    %312 = vmatprep.subr.mxu0 0.0
    %313 = vmatpush1.msra.mxu0 0.0
    %314 = vmatprep.subr.mxu0 0.0
    %315 = vmatpush1.msra.mxu0 0.0
    %316 = vmatprep.subr.mxu0 0.0
    %317 = vmatpush1.msra.mxu0 0.0
    %318 = vmatprep.subr.mxu0 0.0
    %319 = vmatpush1.msra.mxu0 0.0
    %320 = vmatprep.subr.mxu0 0.0
    %321 = vmatpush1.msra.mxu0 0.0
    %322 = vmatprep.subr.mxu0 0.0
    %323 = vmatpush1.msra.mxu0 0.0
    %324 = vmatprep.subr.mxu0 0.0
    %325 = vmatpush1.msra.mxu0 0.0
    %326 = vmatprep.subr.mxu0 0.0
    %327 = vmatpush1.msra.mxu0 0.0
    %328 = vmatprep.subr.mxu0 0.0
    %329 = vmatpush1.msra.mxu0 0.0
    %330 = vmatprep.subr.mxu0 0.0
    %331 = vmatpush1.msra.mxu0 0.0
    %332 = vmatprep.subr.mxu0 0.0
    %333 = vmatpush1.msra.mxu0 0.0
    %334 = vmatprep.subr.mxu0 0.0
    %335 = vmatpush1.msra.mxu0 0.0
    %336 = vmatprep.subr.mxu0 0.0
    %337 = vmatpush1.msra.mxu0 0.0
    %338 = vmatprep.subr.mxu0 0.0
    %339 = vmatpush1.msra.mxu0 0.0
    %340 = vmatprep.subr.mxu0 0.0
    %341 = vmatpush1.msra.mxu0 0.0
    %342 = vmatprep.subr.mxu0 0.0
    %343 = vmatpush1.msra.mxu0 0.0
    %344 = vmatprep.subr.mxu0 0.0
    %345 = vmatpush1.msra.mxu0 0.0
    %346 = vmatprep.subr.mxu0 0.0
    %347 = vmatpush1.msra.mxu0 0.0
    %348 = vmatprep.subr.mxu0 0.0
    %349 = vmatpush1.msra.mxu0 0.0
    %350 = vmatprep.subr.mxu0 0.0
    %351 = vmatpush1.msra.mxu0 0.0
    %352 = vmatprep.subr.mxu0 0.0
    %353 = vmatpush1.msra.mxu0 0.0
    %354 = vmatprep.subr.mxu0 0.0
    %355 = vmatpush1.msra.mxu0 0.0
    %356 = vmatprep.subr.mxu0 0.0
    %357 = vmatpush1.msra.mxu0 0.0
    %358 = vmatprep.mubr.f32.mxu0 0.0
    %359 = vmatmul.mubr.f32.gmra.mrb[0].mxu0 %v189
    %v360 = vpop.f32.mrb[0].mxu0
    %v361 = vadd.f32 0.0, %v360
    %v362 = vpop.f32.mrb[0].mxu0
    %v363 = vadd.f32 0.0, %v362
    %364 = vmatprep.mubr.f32.mxu0 0.0
    %365 = vmatmul.mubr.f32.gmra.mrb[0].mxu0 %v192
    %v366 = vpop.f32.mrb[0].mxu0
    %v367 = vadd.f32 0.0, %v366
    %v368 = vpop.f32.mrb[0].mxu0
    %v369 = vadd.f32 0.0, %v368
    %370 = vmatprep.mubr.f32.mxu0 0.0
    %371 = vmatmul.mubr.f32.gmra.mrb[0].mxu0 %v195
    %v372 = vpop.f32.mrb[0].mxu0
    %v373 = vadd.f32 0.0, %v372
    %v374 = vpop.f32.mrb[0].mxu0
    %v375 = vadd.f32 0.0, %v374
    %376 = vmatprep.mubr.f32.mxu0 0.0
    %377 = vmatmul.mubr.f32.gmra.mrb[0].mxu0 %v198
    %v378 = vpop.f32.mrb[0].mxu0
    %v379 = vadd.f32 0.0, %v378
    %v380 = vpop.f32.mrb[0].mxu0
    %v381 = vadd.f32 0.0, %v380
    %382 = vmatprep.mubr.f32.mxu0 0.0
    %383 = vmatmul.mubr.f32.gmra.mrb[0].mxu0 %v201
    %v384 = vpop.f32.mrb[0].mxu0
    %v385 = vadd.f32 0.0, %v384
    %v386 = vpop.f32.mrb[0].mxu0
    %v387 = vadd.f32 0.0, %v386
    %388 = vmatprep.mubr.f32.mxu0 0.0
    %389 = vmatmul.mubr.f32.gmra.mrb[0].mxu0 %v204
    %v390 = vpop.f32.mrb[0].mxu0
    %v391 = vadd.f32 0.0, %v390
    %v392 = vpop.f32.mrb[0].mxu0
    %v393 = vadd.f32 0.0, %v392
    %394 = vmatprep.mubr.f32.mxu0 0.0
    %395 = vmatmul.mubr.f32.gmra.mrb[0].mxu0 %v207
    %v396 = vpop.f32.mrb[0].mxu0
    %v397 = vadd.f32 0.0, %v396
    %v398 = vpop.f32.mrb[0].mxu0
    %v399 = vadd.f32 0.0, %v398
    %400 = vmatprep.mubr.f32.mxu0 0.0
    %401 = vmatmul.mubr.f32.gmra.mrb[0].mxu0 %v210
    %v402 = vpop.f32.mrb[0].mxu0
    %v403 = vadd.f32 0.0, %v402
    %v404 = vpop.f32.mrb[0].mxu0
    %v405 = vadd.f32 0.0, %v404
    %406 = vmatprep.mubr.f32.mxu0 0.0
    %407 = vmatmul.mubr.f32.gmra.mrb[0].mxu0 %v213
    %v408 = vpop.f32.mrb[0].mxu0
    %v409 = vadd.f32 0.0, %v408
    %v410 = vpop.f32.mrb[0].mxu0
    %v411 = vadd.f32 0.0, %v410
    %412 = vmatprep.mubr.f32.mxu0 0.0
    %413 = vmatmul.mubr.f32.gmra.mrb[0].mxu0 %v216
    %v414 = vpop.f32.mrb[0].mxu0
    %v415 = vadd.f32 0.0, %v414
    %v416 = vpop.f32.mrb[0].mxu0
    %v417 = vadd.f32 0.0, %v416
    %418 = vmatprep.mubr.f32.mxu0 0.0
    %419 = vmatmul.mubr.f32.gmra.mrb[0].mxu0 %v219
    %v420 = vpop.f32.mrb[0].mxu0
    %v421 = vadd.f32 0.0, %v420
    %v422 = vpop.f32.mrb[0].mxu0
    %v423 = vadd.f32 0.0, %v422
    %424 = vmatprep.mubr.f32.mxu0 0.0
    %425 = vmatmul.mubr.f32.gmra.mrb[0].mxu0 %v222
    %v426 = vpop.f32.mrb[0].mxu0
    %v427 = vadd.f32 0.0, %v426
    %v428 = vpop.f32.mrb[0].mxu0
    %v429 = vadd.f32 0.0, %v428
    %430 = vmatprep.mubr.f32.mxu0 0.0
    %431 = vmatmul.mubr.f32.gmra.mrb[0].mxu0 %v225
    %v432 = vpop.f32.mrb[0].mxu0
    %v433 = vadd.f32 0.0, %v432
    %v434 = vpop.f32.mrb[0].mxu0
    %v435 = vadd.f32 0.0, %v434
    %436 = vmatprep.mubr.f32.mxu0 0.0
    %437 = vmatmul.mubr.f32.gmra.mrb[0].mxu0 %v228
    %v438 = vpop.f32.mrb[0].mxu0
    %v439 = vadd.f32 0.0, %v438
    %v440 = vpop.f32.mrb[0].mxu0
    %v441 = vadd.f32 0.0, %v440
    %442 = vmatprep.mubr.f32.mxu0 0.0
    %443 = vmatmul.mubr.f32.gmra.mrb[0].mxu0 %v231
    %v444 = vpop.f32.mrb[0].mxu0
    %v445 = vadd.f32 0.0, %v444
    %v446 = vpop.f32.mrb[0].mxu0
    %v447 = vadd.f32 0.0, %v446
    %448 = vmatprep.mubr.f32.mxu0 0.0
    %449 = vmatmul.mubr.f32.gmra.mrb[0].mxu0 %v234
    %v450 = vpop.f32.mrb[0].mxu0
    %v451 = vadd.f32 0.0, %v450
    %v452 = vpop.f32.mrb[0].mxu0
    %v453 = vadd.f32 0.0, %v452
    %454 = vmatprep.mubr.f32.mxu0 0.0
    %455 = vmatmul.mubr.f32.gmra.mrb[0].mxu0 %v237
    %v456 = vpop.f32.mrb[0].mxu0
    %v457 = vadd.f32 0.0, %v456
    %v458 = vpop.f32.mrb[0].mxu0
    %v459 = vadd.f32 0.0, %v458
    %460 = vmatprep.mubr.f32.mxu0 0.0
    %461 = vmatmul.mubr.f32.gmra.mrb[0].mxu0 %v240
    %v462 = vpop.f32.mrb[0].mxu0
    %v463 = vadd.f32 0.0, %v462
    %v464 = vpop.f32.mrb[0].mxu0
    %v465 = vadd.f32 0.0, %v464
    %466 = vmatprep.mubr.f32.mxu0 0.0
    %467 = vmatmul.mubr.f32.gmra.mrb[0].mxu0 %v243
    %v468 = vpop.f32.mrb[0].mxu0
    %v469 = vadd.f32 0.0, %v468
    %v470 = vpop.f32.mrb[0].mxu0
    %v471 = vadd.f32 0.0, %v470
    %472 = vmatprep.mubr.f32.mxu0 0.0
    %473 = vmatmul.mubr.f32.gmra.mrb[0].mxu0 %v246
    %v474 = vpop.f32.mrb[0].mxu0
    %v475 = vadd.f32 0.0, %v474
    %v476 = vpop.f32.mrb[0].mxu0
    %v477 = vadd.f32 0.0, %v476
    %478 = vmatprep.mubr.f32.mxu0 0.0
    %479 = vmatmul.mubr.f32.gmra.mrb[0].mxu0 %v249
    %v480 = vpop.f32.mrb[0].mxu0
    %v481 = vadd.f32 0.0, %v480
    %v482 = vpop.f32.mrb[0].mxu0
    %v483 = vadd.f32 0.0, %v482
    %484 = vmatprep.mubr.f32.mxu0 0.0
    %485 = vmatmul.mubr.f32.gmra.mrb[0].mxu0 %v252
    %v486 = vpop.f32.mrb[0].mxu0
    %v487 = vadd.f32 0.0, %v486
    %v488 = vpop.f32.mrb[0].mxu0
    %v489 = vadd.f32 0.0, %v488
    %490 = vmatprep.mubr.f32.mxu0 0.0
    %491 = vmatmul.mubr.f32.gmra.mrb[0].mxu0 %v255
    %v492 = vpop.f32.mrb[0].mxu0
    %v493 = vadd.f32 0.0, %v492
    %v494 = vpop.f32.mrb[0].mxu0
    %v495 = vadd.f32 0.0, %v494
    %496 = vmatprep.mubr.f32.mxu0 0.0
    %497 = vmatmul.mubr.f32.gmra.mrb[0].mxu0 %v258
    %v498 = vpop.f32.mrb[0].mxu0
    %v499 = vadd.f32 0.0, %v498
    %v500 = vpop.f32.mrb[0].mxu0
    %v501 = vadd.f32 0.0, %v500
    %502 = vmatprep.mubr.f32.mxu0 0.0
    %503 = vmatmul.mubr.f32.gmra.mrb[0].mxu0 %v261
    %v504 = vpop.f32.mrb[0].mxu0
    %v505 = vadd.f32 0.0, %v504
    %v506 = vpop.f32.mrb[0].mxu0
    %v507 = vadd.f32 0.0, %v506
    %508 = vmatprep.mubr.f32.mxu0 0.0
    %509 = vmatmul.mubr.f32.gmra.mrb[0].mxu0 %v264
    %v510 = vpop.f32.mrb[0].mxu0
    %v511 = vadd.f32 0.0, %v510
    %v512 = vpop.f32.mrb[0].mxu0
    %v513 = vadd.f32 0.0, %v512
    %514 = vmatprep.mubr.f32.mxu0 0.0
    %515 = vmatmul.mubr.f32.gmra.mrb[0].mxu0 %v267
    %v516 = vpop.f32.mrb[0].mxu0
    %v517 = vadd.f32 0.0, %v516
    %v518 = vpop.f32.mrb[0].mxu0
    %v519 = vadd.f32 0.0, %v518
    %520 = vmatprep.mubr.f32.mxu0 0.0
    %521 = vmatmul.mubr.f32.gmra.mrb[0].mxu0 %v270
    %v522 = vpop.f32.mrb[0].mxu0
    %v523 = vadd.f32 0.0, %v522
    %v524 = vpop.f32.mrb[0].mxu0
    %v525 = vadd.f32 0.0, %v524
    %526 = vmatprep.mubr.f32.mxu0 0.0
    %527 = vmatmul.mubr.f32.gmra.mrb[0].mxu0 %v273
    %v528 = vpop.f32.mrb[0].mxu0
    %v529 = vadd.f32 0.0, %v528
    %v530 = vpop.f32.mrb[0].mxu0
    %v531 = vadd.f32 0.0, %v530
    %532 = vmatprep.mubr.f32.mxu0 0.0
    %533 = vmatmul.mubr.f32.gmra.mrb[0].mxu0 %v276
    %v534 = vpop.f32.mrb[0].mxu0
    %v535 = vadd.f32 0.0, %v534
    %v536 = vpop.f32.mrb[0].mxu0
    %v537 = vadd.f32 0.0, %v536
    %538 = vmatprep.mubr.f32.mxu0 0.0
    %539 = vmatmul.mubr.f32.gmra.mrb[0].mxu0 %v279
    %v540 = vpop.f32.mrb[0].mxu0
    %v541 = vadd.f32 0.0, %v540
    %v542 = vpop.f32.mrb[0].mxu0
    %v543 = vadd.f32 0.0, %v542
    %544 = vmatprep.mubr.f32.mxu0 0.0
    %545 = vmatmul.mubr.f32.gmra.mrb[0].mxu0 %v282
    %v546 = vpop.f32.mrb[0].mxu0
    %v547 = vadd.f32 0.0, %v546
    %v548 = vpop.f32.mrb[0].mxu0
    %v549 = vadd.f32 0.0, %v548
    %550 = vdwg.mxu0
    %551 = vmatprep.subr.mxu0 0.0
    %552 = vmatpush1.msra.mxu0 %v61
    %553 = vmatprep.subr.mxu0 0.0
    %554 = vmatpush1.msra.mxu0 %v64
    %555 = vmatprep.subr.mxu0 0.0
    %556 = vmatpush1.msra.mxu0 %v67
    %557 = vmatprep.subr.mxu0 0.0
    %558 = vmatpush1.msra.mxu0 %v70
    %559 = vmatprep.subr.mxu0 0.0
    %560 = vmatpush1.msra.mxu0 %v292
    %561 = vmatprep.subr.mxu0 0.0
    %562 = vmatpush1.msra.mxu0 0.0
    %563 = vmatprep.subr.mxu0 0.0
    %564 = vmatpush1.msra.mxu0 0.0
    %565 = vmatprep.subr.mxu0 0.0
    %566 = vmatpush1.msra.mxu0 0.0
    %567 = vmatprep.subr.mxu0 0.0
    %568 = vmatpush1.msra.mxu0 0.0
    %569 = vmatprep.subr.mxu0 0.0
    %570 = vmatpush1.msra.mxu0 0.0
    %571 = vmatprep.subr.mxu0 0.0
    %572 = vmatpush1.msra.mxu0 0.0
    %573 = vmatprep.subr.mxu0 0.0
    %574 = vmatpush1.msra.mxu0 0.0
    %575 = vmatprep.subr.mxu0 0.0
    %576 = vmatpush1.msra.mxu0 0.0
    %577 = vmatprep.subr.mxu0 0.0
    %578 = vmatpush1.msra.mxu0 0.0
    %579 = vmatprep.subr.mxu0 0.0
    %580 = vmatpush1.msra.mxu0 0.0
    %581 = vmatprep.subr.mxu0 0.0
    %582 = vmatpush1.msra.mxu0 0.0
    %583 = vmatprep.subr.mxu0 0.0
    %584 = vmatpush1.msra.mxu0 0.0
    %585 = vmatprep.subr.mxu0 0.0
    %586 = vmatpush1.msra.mxu0 0.0
    %587 = vmatprep.subr.mxu0 0.0
    %588 = vmatpush1.msra.mxu0 0.0
    %589 = vmatprep.subr.mxu0 0.0
    %590 = vmatpush1.msra.mxu0 0.0
    %591 = vmatprep.subr.mxu0 0.0
    %592 = vmatpush1.msra.mxu0 0.0
    %593 = vmatprep.subr.mxu0 0.0
    %594 = vmatpush1.msra.mxu0 0.0
    %595 = vmatprep.subr.mxu0 0.0
    %596 = vmatpush1.msra.mxu0 0.0
    %597 = vmatprep.subr.mxu0 0.0
    %598 = vmatpush1.msra.mxu0 0.0
    %599 = vmatprep.subr.mxu0 0.0
    %600 = vmatpush1.msra.mxu0 0.0
    %601 = vmatprep.subr.mxu0 0.0
    %602 = vmatpush1.msra.mxu0 0.0
    %603 = vmatprep.subr.mxu0 0.0
    %604 = vmatpush1.msra.mxu0 0.0
    %605 = vmatprep.subr.mxu0 0.0
    %606 = vmatpush1.msra.mxu0 0.0
    %607 = vmatprep.subr.mxu0 0.0
    %608 = vmatpush1.msra.mxu0 0.0
    %609 = vmatprep.subr.mxu0 0.0
    %610 = vmatpush1.msra.mxu0 0.0
    %611 = vmatprep.subr.mxu0 0.0
    %612 = vmatpush1.msra.mxu0 0.0
    %613 = vmatprep.subr.mxu0 0.0
    %614 = vmatpush1.msra.mxu0 0.0
    %615 = vmatprep.mubr.f32.mxu0 0.0
    %616 = vmatmul.mubr.f32.gmra.mrb[0].mxu0 %v189
    %v617 = vpop.f32.mrb[0].mxu0
    %v618 = vadd.f32 0.0, %v617
    %v619 = vpop.f32.mrb[0].mxu0
    %620 = vmatprep.mubr.f32.mxu0 0.0
    %621 = vmatmul.mubr.f32.gmra.mrb[0].mxu0 %v192
    %v622 = vpop.f32.mrb[0].mxu0
    %v623 = vadd.f32 0.0, %v622
    %v624 = vpop.f32.mrb[0].mxu0
    %625 = vmatprep.mubr.f32.mxu0 0.0
    %626 = vmatmul.mubr.f32.gmra.mrb[0].mxu0 %v195
    %v627 = vpop.f32.mrb[0].mxu0
    %v628 = vadd.f32 0.0, %v627
    %v629 = vpop.f32.mrb[0].mxu0
    %630 = vmatprep.mubr.f32.mxu0 0.0
    %631 = vmatmul.mubr.f32.gmra.mrb[0].mxu0 %v198
    %v632 = vpop.f32.mrb[0].mxu0
    %v633 = vadd.f32 0.0, %v632
    %v634 = vpop.f32.mrb[0].mxu0
    %635 = vmatprep.mubr.f32.mxu0 0.0
    %636 = vmatmul.mubr.f32.gmra.mrb[0].mxu0 %v201
    %v637 = vpop.f32.mrb[0].mxu0
    %v638 = vadd.f32 0.0, %v637
    %v639 = vpop.f32.mrb[0].mxu0
    %640 = vmatprep.mubr.f32.mxu0 0.0
    %641 = vmatmul.mubr.f32.gmra.mrb[0].mxu0 %v204
    %v642 = vpop.f32.mrb[0].mxu0
    %v643 = vadd.f32 0.0, %v642
    %v644 = vpop.f32.mrb[0].mxu0
    %645 = vmatprep.mubr.f32.mxu0 0.0
    %646 = vmatmul.mubr.f32.gmra.mrb[0].mxu0 %v207
    %v647 = vpop.f32.mrb[0].mxu0
    %v648 = vadd.f32 0.0, %v647
    %v649 = vpop.f32.mrb[0].mxu0
    %650 = vmatprep.mubr.f32.mxu0 0.0
    %651 = vmatmul.mubr.f32.gmra.mrb[0].mxu0 %v210
    %v652 = vpop.f32.mrb[0].mxu0
    %v653 = vadd.f32 0.0, %v652
    %v654 = vpop.f32.mrb[0].mxu0
    %655 = vmatprep.mubr.f32.mxu0 0.0
    %656 = vmatmul.mubr.f32.gmra.mrb[0].mxu0 %v213
    %v657 = vpop.f32.mrb[0].mxu0
    %v658 = vadd.f32 0.0, %v657
    %v659 = vpop.f32.mrb[0].mxu0
    %660 = vmatprep.mubr.f32.mxu0 0.0
    %661 = vmatmul.mubr.f32.gmra.mrb[0].mxu0 %v216
    %v662 = vpop.f32.mrb[0].mxu0
    %v663 = vadd.f32 0.0, %v662
    %v664 = vpop.f32.mrb[0].mxu0
    %665 = vmatprep.mubr.f32.mxu0 0.0
    %666 = vmatmul.mubr.f32.gmra.mrb[0].mxu0 %v219
    %v667 = vpop.f32.mrb[0].mxu0
    %v668 = vadd.f32 0.0, %v667
    %v669 = vpop.f32.mrb[0].mxu0
    %670 = vmatprep.mubr.f32.mxu0 0.0
    %671 = vmatmul.mubr.f32.gmra.mrb[0].mxu0 %v222
    %v672 = vpop.f32.mrb[0].mxu0
    %v673 = vadd.f32 0.0, %v672
    %v674 = vpop.f32.mrb[0].mxu0
    %675 = vmatprep.mubr.f32.mxu0 0.0
    %676 = vmatmul.mubr.f32.gmra.mrb[0].mxu0 %v225
    %v677 = vpop.f32.mrb[0].mxu0
    %v678 = vadd.f32 0.0, %v677
    %v679 = vpop.f32.mrb[0].mxu0
    %680 = vmatprep.mubr.f32.mxu0 0.0
    %681 = vmatmul.mubr.f32.gmra.mrb[0].mxu0 %v228
    %v682 = vpop.f32.mrb[0].mxu0
    %v683 = vadd.f32 0.0, %v682
    %v684 = vpop.f32.mrb[0].mxu0
    %685 = vmatprep.mubr.f32.mxu0 0.0
    %686 = vmatmul.mubr.f32.gmra.mrb[0].mxu0 %v231
    %v687 = vpop.f32.mrb[0].mxu0
    %v688 = vadd.f32 0.0, %v687
    %v689 = vpop.f32.mrb[0].mxu0
    %690 = vmatprep.mubr.f32.mxu0 0.0
    %691 = vmatmul.mubr.f32.gmra.mrb[0].mxu0 %v234
    %v692 = vpop.f32.mrb[0].mxu0
    %v693 = vadd.f32 0.0, %v692
    %v694 = vpop.f32.mrb[0].mxu0
    %695 = vmatprep.mubr.f32.mxu0 0.0
    %696 = vmatmul.mubr.f32.gmra.mrb[0].mxu0 %v237
    %v697 = vpop.f32.mrb[0].mxu0
    %v698 = vadd.f32 0.0, %v697
    %v699 = vpop.f32.mrb[0].mxu0
    %700 = vmatprep.mubr.f32.mxu0 0.0
    %701 = vmatmul.mubr.f32.gmra.mrb[0].mxu0 %v240
    %v702 = vpop.f32.mrb[0].mxu0
    %v703 = vadd.f32 0.0, %v702
    %v704 = vpop.f32.mrb[0].mxu0
    %705 = vmatprep.mubr.f32.mxu0 0.0
    %706 = vmatmul.mubr.f32.gmra.mrb[0].mxu0 %v243
    %v707 = vpop.f32.mrb[0].mxu0
    %v708 = vadd.f32 0.0, %v707
    %v709 = vpop.f32.mrb[0].mxu0
    %710 = vmatprep.mubr.f32.mxu0 0.0
    %711 = vmatmul.mubr.f32.gmra.mrb[0].mxu0 %v246
    %v712 = vpop.f32.mrb[0].mxu0
    %v713 = vadd.f32 0.0, %v712
    %v714 = vpop.f32.mrb[0].mxu0
    %715 = vmatprep.mubr.f32.mxu0 0.0
    %716 = vmatmul.mubr.f32.gmra.mrb[0].mxu0 %v249
    %v717 = vpop.f32.mrb[0].mxu0
    %v718 = vadd.f32 0.0, %v717
    %v719 = vpop.f32.mrb[0].mxu0
    %720 = vmatprep.mubr.f32.mxu0 0.0
    %721 = vmatmul.mubr.f32.gmra.mrb[0].mxu0 %v252
    %v722 = vpop.f32.mrb[0].mxu0
    %v723 = vadd.f32 0.0, %v722
    %v724 = vpop.f32.mrb[0].mxu0
    %725 = vmatprep.mubr.f32.mxu0 0.0
    %726 = vmatmul.mubr.f32.gmra.mrb[0].mxu0 %v255
    %v727 = vpop.f32.mrb[0].mxu0
    %v728 = vadd.f32 0.0, %v727
    %v729 = vpop.f32.mrb[0].mxu0
    %730 = vmatprep.mubr.f32.mxu0 0.0
    %731 = vmatmul.mubr.f32.gmra.mrb[0].mxu0 %v258
    %v732 = vpop.f32.mrb[0].mxu0
    %v733 = vadd.f32 0.0, %v732
    %v734 = vpop.f32.mrb[0].mxu0
    %735 = vmatprep.mubr.f32.mxu0 0.0
    %736 = vmatmul.mubr.f32.gmra.mrb[0].mxu0 %v261
    %v737 = vpop.f32.mrb[0].mxu0
    %v738 = vadd.f32 0.0, %v737
    %v739 = vpop.f32.mrb[0].mxu0
    %740 = vmatprep.mubr.f32.mxu0 0.0
    %741 = vmatmul.mubr.f32.gmra.mrb[0].mxu0 %v264
    %v742 = vpop.f32.mrb[0].mxu0
    %v743 = vadd.f32 0.0, %v742
    %v744 = vpop.f32.mrb[0].mxu0
    %745 = vmatprep.mubr.f32.mxu0 0.0
    %746 = vmatmul.mubr.f32.gmra.mrb[0].mxu0 %v267
    %v747 = vpop.f32.mrb[0].mxu0
    %v748 = vadd.f32 0.0, %v747
    %v749 = vpop.f32.mrb[0].mxu0
    %750 = vmatprep.mubr.f32.mxu0 0.0
    %751 = vmatmul.mubr.f32.gmra.mrb[0].mxu0 %v270
    %v752 = vpop.f32.mrb[0].mxu0
    %v753 = vadd.f32 0.0, %v752
    %v754 = vpop.f32.mrb[0].mxu0
    %755 = vmatprep.mubr.f32.mxu0 0.0
    %756 = vmatmul.mubr.f32.gmra.mrb[0].mxu0 %v273
    %v757 = vpop.f32.mrb[0].mxu0
    %v758 = vadd.f32 0.0, %v757
    %v759 = vpop.f32.mrb[0].mxu0
    %760 = vmatprep.mubr.f32.mxu0 0.0
    %761 = vmatmul.mubr.f32.gmra.mrb[0].mxu0 %v276
    %v762 = vpop.f32.mrb[0].mxu0
    %v763 = vadd.f32 0.0, %v762
    %v764 = vpop.f32.mrb[0].mxu0
    %765 = vmatprep.mubr.f32.mxu0 0.0
    %766 = vmatmul.mubr.f32.gmra.mrb[0].mxu0 %v279
    %v767 = vpop.f32.mrb[0].mxu0
    %v768 = vadd.f32 0.0, %v767
    %v769 = vpop.f32.mrb[0].mxu0
    %770 = vmatprep.mubr.f32.mxu0 0.0
    %771 = vmatmul.mubr.f32.gmra.mrb[0].mxu0 %v282
    %v772 = vpop.f32.mrb[0].mxu0
    %v773 = vadd.f32 0.0, %v772
    %v774 = vpop.f32.mrb[0].mxu0
    %775 = vdwg.mxu0
    %v777 = vsel %vm187, %v122, 0
    %v780 = vsel %vm187, %v123, 0
    %v783 = vsel %vm187, %v124, 0
    %v786 = vsel %vm187, %v125, 0
    %v789 = vsel %vm187, %v126, 0
    %v792 = vsel %vm187, %v127, 0
    %v795 = vsel %vm187, %v128, 0
    %v798 = vsel %vm187, %v129, 0
    %v801 = vsel %vm187, %v130, 0
    %v804 = vsel %vm187, %v131, 0
    %v807 = vsel %vm187, %v132, 0
    %v810 = vsel %vm187, %v133, 0
    %v813 = vsel %vm187, %v134, 0
    %v816 = vsel %vm187, %v135, 0
    %v819 = vsel %vm187, %v136, 0
    %v822 = vsel %vm187, %v137, 0
    %v825 = vsel %vm187, %v138, 0
    %v828 = vsel %vm187, %v139, 0
    %v831 = vsel %vm187, %v140, 0
    %v834 = vsel %vm187, %v141, 0
    %v837 = vsel %vm187, %v142, 0
    %v840 = vsel %vm187, %v143, 0
    %v843 = vsel %vm187, %v144, 0
    %v846 = vsel %vm187, %v145, 0
    %v849 = vsel %vm187, %v146, 0
    %v852 = vsel %vm187, %v147, 0
    %v855 = vsel %vm187, %v148, 0
    %v858 = vsel %vm187, %v149, 0
    %v861 = vsel %vm187, %v150, 0
    %v864 = vsel %vm187, %v151, 0
    %v867 = vsel %vm187, %v152, 0
    %v870 = vsel %vm187, %v153, 0
    %v873 = vsel %vm284, %v55, 0
    %v876 = vsel %vm284, %v56, 0
    %v879 = vsel %vm284, %v57, 0
    %881 = vmatprep.subr.mxu0 %v44
    %882 = vmatpush1.msra.mxu0 %v43
    %883 = vmatprep.subr.mxu0 %v47
    %884 = vmatpush1.msra.mxu0 %v46
    %885 = vmatprep.subr.mxu0 %v50
    %886 = vmatpush1.msra.mxu0 %v49
    %887 = vmatprep.subr.mxu0 %v53
    %888 = vmatpush1.msra.mxu0 %v52
    %889 = vmatprep.subr.mxu0 %v876
    %890 = vmatpush1.msra.mxu0 %v873
    %891 = vmatprep.subr.mxu0 0.0
    %892 = vmatpush1.msra.mxu0 0.0
    %893 = vmatprep.subr.mxu0 0.0
    %894 = vmatpush1.msra.mxu0 0.0
    %895 = vmatprep.subr.mxu0 0.0
    %896 = vmatpush1.msra.mxu0 0.0
    %897 = vmatprep.subr.mxu0 0.0
    %898 = vmatpush1.msra.mxu0 0.0
    %899 = vmatprep.subr.mxu0 0.0
    %900 = vmatpush1.msra.mxu0 0.0
    %901 = vmatprep.subr.mxu0 0.0
    %902 = vmatpush1.msra.mxu0 0.0
    %903 = vmatprep.subr.mxu0 0.0
    %904 = vmatpush1.msra.mxu0 0.0
    %905 = vmatprep.subr.mxu0 0.0
    %906 = vmatpush1.msra.mxu0 0.0
    %907 = vmatprep.subr.mxu0 0.0
    %908 = vmatpush1.msra.mxu0 0.0
    %909 = vmatprep.subr.mxu0 0.0
    %910 = vmatpush1.msra.mxu0 0.0
    %911 = vmatprep.subr.mxu0 0.0
    %912 = vmatpush1.msra.mxu0 0.0
    %913 = vmatprep.subr.mxu0 0.0
    %914 = vmatpush1.msra.mxu0 0.0
    %915 = vmatprep.subr.mxu0 0.0
    %916 = vmatpush1.msra.mxu0 0.0
    %917 = vmatprep.subr.mxu0 0.0
    %918 = vmatpush1.msra.mxu0 0.0
    %919 = vmatprep.subr.mxu0 0.0
    %920 = vmatpush1.msra.mxu0 0.0
    %921 = vmatprep.subr.mxu0 0.0
    %922 = vmatpush1.msra.mxu0 0.0
    %923 = vmatprep.subr.mxu0 0.0
    %924 = vmatpush1.msra.mxu0 0.0
    %925 = vmatprep.subr.mxu0 0.0
    %926 = vmatpush1.msra.mxu0 0.0
    %927 = vmatprep.subr.mxu0 0.0
    %928 = vmatpush1.msra.mxu0 0.0
    %929 = vmatprep.subr.mxu0 0.0
    %930 = vmatpush1.msra.mxu0 0.0
    %931 = vmatprep.subr.mxu0 0.0
    %932 = vmatpush1.msra.mxu0 0.0
    %933 = vmatprep.subr.mxu0 0.0
    %934 = vmatpush1.msra.mxu0 0.0
    %935 = vmatprep.subr.mxu0 0.0
    %936 = vmatpush1.msra.mxu0 0.0
    %937 = vmatprep.subr.mxu0 0.0
    %938 = vmatpush1.msra.mxu0 0.0
    %939 = vmatprep.subr.mxu0 0.0
    %940 = vmatpush1.msra.mxu0 0.0
    %941 = vmatprep.subr.mxu0 0.0
    %942 = vmatpush1.msra.mxu0 0.0
    %943 = vmatprep.subr.mxu0 0.0
    %944 = vmatpush1.msra.mxu0 0.0
    %945 = vmatprep.mubr.f32.mxu0 0.0
    %946 = vmatmul.mubr.f32.gmra.mrb[0].mxu0 %v777
    %v947 = vpop.f32.mrb[0].mxu0
    %v948 = vadd.f32 %v361, %v947
    %v949 = vpop.f32.mrb[0].mxu0
    %v950 = vadd.f32 %v363, %v949
    %951 = vmatprep.mubr.f32.mxu0 0.0
    %952 = vmatmul.mubr.f32.gmra.mrb[0].mxu0 %v780
    %v953 = vpop.f32.mrb[0].mxu0
    %v954 = vadd.f32 %v367, %v953
    %v955 = vpop.f32.mrb[0].mxu0
    %v956 = vadd.f32 %v369, %v955
    %957 = vmatprep.mubr.f32.mxu0 0.0
    %958 = vmatmul.mubr.f32.gmra.mrb[0].mxu0 %v783
    %v959 = vpop.f32.mrb[0].mxu0
    %v960 = vadd.f32 %v373, %v959
    %v961 = vpop.f32.mrb[0].mxu0
    %v962 = vadd.f32 %v375, %v961
    %963 = vmatprep.mubr.f32.mxu0 0.0
    %964 = vmatmul.mubr.f32.gmra.mrb[0].mxu0 %v786
    %v965 = vpop.f32.mrb[0].mxu0
    %v966 = vadd.f32 %v379, %v965
    %v967 = vpop.f32.mrb[0].mxu0
    %v968 = vadd.f32 %v381, %v967
    %969 = vmatprep.mubr.f32.mxu0 0.0
    %970 = vmatmul.mubr.f32.gmra.mrb[0].mxu0 %v789
    %v971 = vpop.f32.mrb[0].mxu0
    %v972 = vadd.f32 %v385, %v971
    %v973 = vpop.f32.mrb[0].mxu0
    %v974 = vadd.f32 %v387, %v973
    %975 = vmatprep.mubr.f32.mxu0 0.0
    %976 = vmatmul.mubr.f32.gmra.mrb[0].mxu0 %v792
    %v977 = vpop.f32.mrb[0].mxu0
    %v978 = vadd.f32 %v391, %v977
    %v979 = vpop.f32.mrb[0].mxu0
    %v980 = vadd.f32 %v393, %v979
    %981 = vmatprep.mubr.f32.mxu0 0.0
    %982 = vmatmul.mubr.f32.gmra.mrb[0].mxu0 %v795
    %v983 = vpop.f32.mrb[0].mxu0
    %v984 = vadd.f32 %v397, %v983
    %v985 = vpop.f32.mrb[0].mxu0
    %v986 = vadd.f32 %v399, %v985
    %987 = vmatprep.mubr.f32.mxu0 0.0
    %988 = vmatmul.mubr.f32.gmra.mrb[0].mxu0 %v798
    %v989 = vpop.f32.mrb[0].mxu0
    %v990 = vadd.f32 %v403, %v989
    %v991 = vpop.f32.mrb[0].mxu0
    %v992 = vadd.f32 %v405, %v991
    %993 = vmatprep.mubr.f32.mxu0 0.0
    %994 = vmatmul.mubr.f32.gmra.mrb[0].mxu0 %v801
    %v995 = vpop.f32.mrb[0].mxu0
    %v996 = vadd.f32 %v409, %v995
    %v997 = vpop.f32.mrb[0].mxu0
    %v998 = vadd.f32 %v411, %v997
    %999 = vmatprep.mubr.f32.mxu0 0.0
    %1000 = vmatmul.mubr.f32.gmra.mrb[0].mxu0 %v804
    %v1001 = vpop.f32.mrb[0].mxu0
    %v1002 = vadd.f32 %v415, %v1001
    %v1003 = vpop.f32.mrb[0].mxu0
    %v1004 = vadd.f32 %v417, %v1003
    %1005 = vmatprep.mubr.f32.mxu0 0.0
    %1006 = vmatmul.mubr.f32.gmra.mrb[0].mxu0 %v807
    %v1007 = vpop.f32.mrb[0].mxu0
    %v1008 = vadd.f32 %v421, %v1007
    %v1009 = vpop.f32.mrb[0].mxu0
    %v1010 = vadd.f32 %v423, %v1009
    %1011 = vmatprep.mubr.f32.mxu0 0.0
    %1012 = vmatmul.mubr.f32.gmra.mrb[0].mxu0 %v810
    %v1013 = vpop.f32.mrb[0].mxu0
    %v1014 = vadd.f32 %v427, %v1013
    %v1015 = vpop.f32.mrb[0].mxu0
    %v1016 = vadd.f32 %v429, %v1015
    %1017 = vmatprep.mubr.f32.mxu0 0.0
    %1018 = vmatmul.mubr.f32.gmra.mrb[0].mxu0 %v813
    %v1019 = vpop.f32.mrb[0].mxu0
    %v1020 = vadd.f32 %v433, %v1019
    %v1021 = vpop.f32.mrb[0].mxu0
    %v1022 = vadd.f32 %v435, %v1021
    %1023 = vmatprep.mubr.f32.mxu0 0.0
    %1024 = vmatmul.mubr.f32.gmra.mrb[0].mxu0 %v816
    %v1025 = vpop.f32.mrb[0].mxu0
    %v1026 = vadd.f32 %v439, %v1025
    %v1027 = vpop.f32.mrb[0].mxu0
    %v1028 = vadd.f32 %v441, %v1027
    %1029 = vmatprep.mubr.f32.mxu0 0.0
    %1030 = vmatmul.mubr.f32.gmra.mrb[0].mxu0 %v819
    %v1031 = vpop.f32.mrb[0].mxu0
    %v1032 = vadd.f32 %v445, %v1031
    %v1033 = vpop.f32.mrb[0].mxu0
    %v1034 = vadd.f32 %v447, %v1033
    %1035 = vmatprep.mubr.f32.mxu0 0.0
    %1036 = vmatmul.mubr.f32.gmra.mrb[0].mxu0 %v822
    %v1037 = vpop.f32.mrb[0].mxu0
    %v1038 = vadd.f32 %v451, %v1037
    %v1039 = vpop.f32.mrb[0].mxu0
    %v1040 = vadd.f32 %v453, %v1039
    %1041 = vmatprep.mubr.f32.mxu0 0.0
    %1042 = vmatmul.mubr.f32.gmra.mrb[0].mxu0 %v825
    %v1043 = vpop.f32.mrb[0].mxu0
    %v1044 = vadd.f32 %v457, %v1043
    %v1045 = vpop.f32.mrb[0].mxu0
    %v1046 = vadd.f32 %v459, %v1045
    %1047 = vmatprep.mubr.f32.mxu0 0.0
    %1048 = vmatmul.mubr.f32.gmra.mrb[0].mxu0 %v828
    %v1049 = vpop.f32.mrb[0].mxu0
    %v1050 = vadd.f32 %v463, %v1049
    %v1051 = vpop.f32.mrb[0].mxu0
    %v1052 = vadd.f32 %v465, %v1051
    %1053 = vmatprep.mubr.f32.mxu0 0.0
    %1054 = vmatmul.mubr.f32.gmra.mrb[0].mxu0 %v831
    %v1055 = vpop.f32.mrb[0].mxu0
    %v1056 = vadd.f32 %v469, %v1055
    %v1057 = vpop.f32.mrb[0].mxu0
    %v1058 = vadd.f32 %v471, %v1057
    %1059 = vmatprep.mubr.f32.mxu0 0.0
    %1060 = vmatmul.mubr.f32.gmra.mrb[0].mxu0 %v834
    %v1061 = vpop.f32.mrb[0].mxu0
    %v1062 = vadd.f32 %v475, %v1061
    %v1063 = vpop.f32.mrb[0].mxu0
    %v1064 = vadd.f32 %v477, %v1063
    %1065 = vmatprep.mubr.f32.mxu0 0.0
    %1066 = vmatmul.mubr.f32.gmra.mrb[0].mxu0 %v837
    %v1067 = vpop.f32.mrb[0].mxu0
    %v1068 = vadd.f32 %v481, %v1067
    %v1069 = vpop.f32.mrb[0].mxu0
    %v1070 = vadd.f32 %v483, %v1069
    %1071 = vmatprep.mubr.f32.mxu0 0.0
    %1072 = vmatmul.mubr.f32.gmra.mrb[0].mxu0 %v840
    %v1073 = vpop.f32.mrb[0].mxu0
    %v1074 = vadd.f32 %v487, %v1073
    %v1075 = vpop.f32.mrb[0].mxu0
    %v1076 = vadd.f32 %v489, %v1075
    %1077 = vmatprep.mubr.f32.mxu0 0.0
    %1078 = vmatmul.mubr.f32.gmra.mrb[0].mxu0 %v843
    %v1079 = vpop.f32.mrb[0].mxu0
    %v1080 = vadd.f32 %v493, %v1079
    %v1081 = vpop.f32.mrb[0].mxu0
    %v1082 = vadd.f32 %v495, %v1081
    %1083 = vmatprep.mubr.f32.mxu0 0.0
    %1084 = vmatmul.mubr.f32.gmra.mrb[0].mxu0 %v846
    %v1085 = vpop.f32.mrb[0].mxu0
    %v1086 = vadd.f32 %v499, %v1085
    %v1087 = vpop.f32.mrb[0].mxu0
    %v1088 = vadd.f32 %v501, %v1087
    %1089 = vmatprep.mubr.f32.mxu0 0.0
    %1090 = vmatmul.mubr.f32.gmra.mrb[0].mxu0 %v849
    %v1091 = vpop.f32.mrb[0].mxu0
    %v1092 = vadd.f32 %v505, %v1091
    %v1093 = vpop.f32.mrb[0].mxu0
    %v1094 = vadd.f32 %v507, %v1093
    %1095 = vmatprep.mubr.f32.mxu0 0.0
    %1096 = vmatmul.mubr.f32.gmra.mrb[0].mxu0 %v852
    %v1097 = vpop.f32.mrb[0].mxu0
    %v1098 = vadd.f32 %v511, %v1097
    %v1099 = vpop.f32.mrb[0].mxu0
    %v1100 = vadd.f32 %v513, %v1099
    %1101 = vmatprep.mubr.f32.mxu0 0.0
    %1102 = vmatmul.mubr.f32.gmra.mrb[0].mxu0 %v855
    %v1103 = vpop.f32.mrb[0].mxu0
    %v1104 = vadd.f32 %v517, %v1103
    %v1105 = vpop.f32.mrb[0].mxu0
    %v1106 = vadd.f32 %v519, %v1105
    %1107 = vmatprep.mubr.f32.mxu0 0.0
    %1108 = vmatmul.mubr.f32.gmra.mrb[0].mxu0 %v858
    %v1109 = vpop.f32.mrb[0].mxu0
    %v1110 = vadd.f32 %v523, %v1109
    %v1111 = vpop.f32.mrb[0].mxu0
    %v1112 = vadd.f32 %v525, %v1111
    %1113 = vmatprep.mubr.f32.mxu0 0.0
    %1114 = vmatmul.mubr.f32.gmra.mrb[0].mxu0 %v861
    %v1115 = vpop.f32.mrb[0].mxu0
    %v1116 = vadd.f32 %v529, %v1115
    %v1117 = vpop.f32.mrb[0].mxu0
    %v1118 = vadd.f32 %v531, %v1117
    %1119 = vmatprep.mubr.f32.mxu0 0.0
    %1120 = vmatmul.mubr.f32.gmra.mrb[0].mxu0 %v864
    %v1121 = vpop.f32.mrb[0].mxu0
    %v1122 = vadd.f32 %v535, %v1121
    %v1123 = vpop.f32.mrb[0].mxu0
    %v1124 = vadd.f32 %v537, %v1123
    %1125 = vmatprep.mubr.f32.mxu0 0.0
    %1126 = vmatmul.mubr.f32.gmra.mrb[0].mxu0 %v867
    %v1127 = vpop.f32.mrb[0].mxu0
    %v1128 = vadd.f32 %v541, %v1127
    %v1129 = vpop.f32.mrb[0].mxu0
    %v1130 = vadd.f32 %v543, %v1129
    %1131 = vmatprep.mubr.f32.mxu0 0.0
    %1132 = vmatmul.mubr.f32.gmra.mrb[0].mxu0 %v870
    %v1133 = vpop.f32.mrb[0].mxu0
    %v1134 = vadd.f32 %v547, %v1133
    %v1135 = vpop.f32.mrb[0].mxu0
    %v1136 = vadd.f32 %v549, %v1135
    %1137 = vdwg.mxu0
    %1138 = vmatprep.subr.mxu0 0.0
    %1139 = vmatpush1.msra.mxu0 %v45
    %1140 = vmatprep.subr.mxu0 0.0
    %1141 = vmatpush1.msra.mxu0 %v48
    %1142 = vmatprep.subr.mxu0 0.0
    %1143 = vmatpush1.msra.mxu0 %v51
    %1144 = vmatprep.subr.mxu0 0.0
    %1145 = vmatpush1.msra.mxu0 %v54
    %1146 = vmatprep.subr.mxu0 0.0
    %1147 = vmatpush1.msra.mxu0 %v879
    %1148 = vmatprep.subr.mxu0 0.0
    %1149 = vmatpush1.msra.mxu0 0.0
    %1150 = vmatprep.subr.mxu0 0.0
    %1151 = vmatpush1.msra.mxu0 0.0
    %1152 = vmatprep.subr.mxu0 0.0
    %1153 = vmatpush1.msra.mxu0 0.0
    %1154 = vmatprep.subr.mxu0 0.0
    %1155 = vmatpush1.msra.mxu0 0.0
    %1156 = vmatprep.subr.mxu0 0.0
    %1157 = vmatpush1.msra.mxu0 0.0
    %1158 = vmatprep.subr.mxu0 0.0
    %1159 = vmatpush1.msra.mxu0 0.0
    %1160 = vmatprep.subr.mxu0 0.0
    %1161 = vmatpush1.msra.mxu0 0.0
    %1162 = vmatprep.subr.mxu0 0.0
    %1163 = vmatpush1.msra.mxu0 0.0
    %1164 = vmatprep.subr.mxu0 0.0
    %1165 = vmatpush1.msra.mxu0 0.0
    %1166 = vmatprep.subr.mxu0 0.0
    %1167 = vmatpush1.msra.mxu0 0.0
    %1168 = vmatprep.subr.mxu0 0.0
    %1169 = vmatpush1.msra.mxu0 0.0
    %1170 = vmatprep.subr.mxu0 0.0
    %1171 = vmatpush1.msra.mxu0 0.0
    %1172 = vmatprep.subr.mxu0 0.0
    %1173 = vmatpush1.msra.mxu0 0.0
    %1174 = vmatprep.subr.mxu0 0.0
    %1175 = vmatpush1.msra.mxu0 0.0
    %1176 = vmatprep.subr.mxu0 0.0
    %1177 = vmatpush1.msra.mxu0 0.0
    %1178 = vmatprep.subr.mxu0 0.0
    %1179 = vmatpush1.msra.mxu0 0.0
    %1180 = vmatprep.subr.mxu0 0.0
    %1181 = vmatpush1.msra.mxu0 0.0
    %1182 = vmatprep.subr.mxu0 0.0
    %1183 = vmatpush1.msra.mxu0 0.0
    %1184 = vmatprep.subr.mxu0 0.0
    %1185 = vmatpush1.msra.mxu0 0.0
    %1186 = vmatprep.subr.mxu0 0.0
    %1187 = vmatpush1.msra.mxu0 0.0
    %1188 = vmatprep.subr.mxu0 0.0
    %1189 = vmatpush1.msra.mxu0 0.0
    %1190 = vmatprep.subr.mxu0 0.0
    %1191 = vmatpush1.msra.mxu0 0.0
    %1192 = vmatprep.subr.mxu0 0.0
    %1193 = vmatpush1.msra.mxu0 0.0
    %1194 = vmatprep.subr.mxu0 0.0
    %1195 = vmatpush1.msra.mxu0 0.0
    %1196 = vmatprep.subr.mxu0 0.0
    %1197 = vmatpush1.msra.mxu0 0.0
    %1198 = vmatprep.subr.mxu0 0.0
    %1199 = vmatpush1.msra.mxu0 0.0
    %1200 = vmatprep.subr.mxu0 0.0
    %1201 = vmatpush1.msra.mxu0 0.0
    %1202 = vmatprep.mubr.f32.mxu0 0.0
    %1203 = vmatmul.mubr.f32.gmra.mrb[0].mxu0 %v777
    %v1204 = vpop.f32.mrb[0].mxu0
    %v1205 = vadd.f32 %v618, %v1204
    %v1206 = vpop.f32.mrb[0].mxu0
    %1207 = vmatprep.mubr.f32.mxu0 0.0
    %1208 = vmatmul.mubr.f32.gmra.mrb[0].mxu0 %v780
    %v1209 = vpop.f32.mrb[0].mxu0
    %v1210 = vadd.f32 %v623, %v1209
    %v1211 = vpop.f32.mrb[0].mxu0
    %1212 = vmatprep.mubr.f32.mxu0 0.0
    %1213 = vmatmul.mubr.f32.gmra.mrb[0].mxu0 %v783
    %v1214 = vpop.f32.mrb[0].mxu0
    %v1215 = vadd.f32 %v628, %v1214
    %v1216 = vpop.f32.mrb[0].mxu0
    %1217 = vmatprep.mubr.f32.mxu0 0.0
    %1218 = vmatmul.mubr.f32.gmra.mrb[0].mxu0 %v786
    %v1219 = vpop.f32.mrb[0].mxu0
    %v1220 = vadd.f32 %v633, %v1219
    %v1221 = vpop.f32.mrb[0].mxu0
    %1222 = vmatprep.mubr.f32.mxu0 0.0
    %1223 = vmatmul.mubr.f32.gmra.mrb[0].mxu0 %v789
    %v1224 = vpop.f32.mrb[0].mxu0
    %v1225 = vadd.f32 %v638, %v1224
    %v1226 = vpop.f32.mrb[0].mxu0
    %1227 = vmatprep.mubr.f32.mxu0 0.0
    %1228 = vmatmul.mubr.f32.gmra.mrb[0].mxu0 %v792
    %v1229 = vpop.f32.mrb[0].mxu0
    %v1230 = vadd.f32 %v643, %v1229
    %v1231 = vpop.f32.mrb[0].mxu0
    %1232 = vmatprep.mubr.f32.mxu0 0.0
    %1233 = vmatmul.mubr.f32.gmra.mrb[0].mxu0 %v795
    %v1234 = vpop.f32.mrb[0].mxu0
    %v1235 = vadd.f32 %v648, %v1234
    %v1236 = vpop.f32.mrb[0].mxu0
    %1237 = vmatprep.mubr.f32.mxu0 0.0
    %1238 = vmatmul.mubr.f32.gmra.mrb[0].mxu0 %v798
    %v1239 = vpop.f32.mrb[0].mxu0
    %v1240 = vadd.f32 %v653, %v1239
    %v1241 = vpop.f32.mrb[0].mxu0
    %1242 = vmatprep.mubr.f32.mxu0 0.0
    %1243 = vmatmul.mubr.f32.gmra.mrb[0].mxu0 %v801
    %v1244 = vpop.f32.mrb[0].mxu0
    %v1245 = vadd.f32 %v658, %v1244
    %v1246 = vpop.f32.mrb[0].mxu0
    %1247 = vmatprep.mubr.f32.mxu0 0.0
    %1248 = vmatmul.mubr.f32.gmra.mrb[0].mxu0 %v804
    %v1249 = vpop.f32.mrb[0].mxu0
    %v1250 = vadd.f32 %v663, %v1249
    %v1251 = vpop.f32.mrb[0].mxu0
    %1252 = vmatprep.mubr.f32.mxu0 0.0
    %1253 = vmatmul.mubr.f32.gmra.mrb[0].mxu0 %v807
    %v1254 = vpop.f32.mrb[0].mxu0
    %v1255 = vadd.f32 %v668, %v1254
    %v1256 = vpop.f32.mrb[0].mxu0
    %1257 = vmatprep.mubr.f32.mxu0 0.0
    %1258 = vmatmul.mubr.f32.gmra.mrb[0].mxu0 %v810
    %v1259 = vpop.f32.mrb[0].mxu0
    %v1260 = vadd.f32 %v673, %v1259
    %v1261 = vpop.f32.mrb[0].mxu0
    %1262 = vmatprep.mubr.f32.mxu0 0.0
    %1263 = vmatmul.mubr.f32.gmra.mrb[0].mxu0 %v813
    %v1264 = vpop.f32.mrb[0].mxu0
    %v1265 = vadd.f32 %v678, %v1264
    %v1266 = vpop.f32.mrb[0].mxu0
    %1267 = vmatprep.mubr.f32.mxu0 0.0
    %1268 = vmatmul.mubr.f32.gmra.mrb[0].mxu0 %v816
    %v1269 = vpop.f32.mrb[0].mxu0
    %v1270 = vadd.f32 %v683, %v1269
    %v1271 = vpop.f32.mrb[0].mxu0
    %1272 = vmatprep.mubr.f32.mxu0 0.0
    %1273 = vmatmul.mubr.f32.gmra.mrb[0].mxu0 %v819
    %v1274 = vpop.f32.mrb[0].mxu0
    %v1275 = vadd.f32 %v688, %v1274
    %v1276 = vpop.f32.mrb[0].mxu0
    %1277 = vmatprep.mubr.f32.mxu0 0.0
    %1278 = vmatmul.mubr.f32.gmra.mrb[0].mxu0 %v822
    %v1279 = vpop.f32.mrb[0].mxu0
    %v1280 = vadd.f32 %v693, %v1279
    %v1281 = vpop.f32.mrb[0].mxu0
    %1282 = vmatprep.mubr.f32.mxu0 0.0
    %1283 = vmatmul.mubr.f32.gmra.mrb[0].mxu0 %v825
    %v1284 = vpop.f32.mrb[0].mxu0
    %v1285 = vadd.f32 %v698, %v1284
    %v1286 = vpop.f32.mrb[0].mxu0
    %1287 = vmatprep.mubr.f32.mxu0 0.0
    %1288 = vmatmul.mubr.f32.gmra.mrb[0].mxu0 %v828
    %v1289 = vpop.f32.mrb[0].mxu0
    %v1290 = vadd.f32 %v703, %v1289
    %v1291 = vpop.f32.mrb[0].mxu0
    %1292 = vmatprep.mubr.f32.mxu0 0.0
    %1293 = vmatmul.mubr.f32.gmra.mrb[0].mxu0 %v831
    %v1294 = vpop.f32.mrb[0].mxu0
    %v1295 = vadd.f32 %v708, %v1294
    %v1296 = vpop.f32.mrb[0].mxu0
    %1297 = vmatprep.mubr.f32.mxu0 0.0
    %1298 = vmatmul.mubr.f32.gmra.mrb[0].mxu0 %v834
    %v1299 = vpop.f32.mrb[0].mxu0
    %v1300 = vadd.f32 %v713, %v1299
    %v1301 = vpop.f32.mrb[0].mxu0
    %1302 = vmatprep.mubr.f32.mxu0 0.0
    %1303 = vmatmul.mubr.f32.gmra.mrb[0].mxu0 %v837
    %v1304 = vpop.f32.mrb[0].mxu0
    %v1305 = vadd.f32 %v718, %v1304
    %v1306 = vpop.f32.mrb[0].mxu0
    %1307 = vmatprep.mubr.f32.mxu0 0.0
    %1308 = vmatmul.mubr.f32.gmra.mrb[0].mxu0 %v840
    %v1309 = vpop.f32.mrb[0].mxu0
    %v1310 = vadd.f32 %v723, %v1309
    %v1311 = vpop.f32.mrb[0].mxu0
    %1312 = vmatprep.mubr.f32.mxu0 0.0
    %1313 = vmatmul.mubr.f32.gmra.mrb[0].mxu0 %v843
    %v1314 = vpop.f32.mrb[0].mxu0
    %v1315 = vadd.f32 %v728, %v1314
    %v1316 = vpop.f32.mrb[0].mxu0
    %1317 = vmatprep.mubr.f32.mxu0 0.0
    %1318 = vmatmul.mubr.f32.gmra.mrb[0].mxu0 %v846
    %v1319 = vpop.f32.mrb[0].mxu0
    %v1320 = vadd.f32 %v733, %v1319
    %v1321 = vpop.f32.mrb[0].mxu0
    %1322 = vmatprep.mubr.f32.mxu0 0.0
    %1323 = vmatmul.mubr.f32.gmra.mrb[0].mxu0 %v849
    %v1324 = vpop.f32.mrb[0].mxu0
    %v1325 = vadd.f32 %v738, %v1324
    %v1326 = vpop.f32.mrb[0].mxu0
    %1327 = vmatprep.mubr.f32.mxu0 0.0
    %1328 = vmatmul.mubr.f32.gmra.mrb[0].mxu0 %v852
    %v1329 = vpop.f32.mrb[0].mxu0
    %v1330 = vadd.f32 %v743, %v1329
    %v1331 = vpop.f32.mrb[0].mxu0
    %1332 = vmatprep.mubr.f32.mxu0 0.0
    %1333 = vmatmul.mubr.f32.gmra.mrb[0].mxu0 %v855
    %v1334 = vpop.f32.mrb[0].mxu0
    %v1335 = vadd.f32 %v748, %v1334
    %v1336 = vpop.f32.mrb[0].mxu0
    %1337 = vmatprep.mubr.f32.mxu0 0.0
    %1338 = vmatmul.mubr.f32.gmra.mrb[0].mxu0 %v858
    %v1339 = vpop.f32.mrb[0].mxu0
    %v1340 = vadd.f32 %v753, %v1339
    %v1341 = vpop.f32.mrb[0].mxu0
    %1342 = vmatprep.mubr.f32.mxu0 0.0
    %1343 = vmatmul.mubr.f32.gmra.mrb[0].mxu0 %v861
    %v1344 = vpop.f32.mrb[0].mxu0
    %v1345 = vadd.f32 %v758, %v1344
    %v1346 = vpop.f32.mrb[0].mxu0
    %1347 = vmatprep.mubr.f32.mxu0 0.0
    %1348 = vmatmul.mubr.f32.gmra.mrb[0].mxu0 %v864
    %v1349 = vpop.f32.mrb[0].mxu0
    %v1350 = vadd.f32 %v763, %v1349
    %v1351 = vpop.f32.mrb[0].mxu0
    %1352 = vmatprep.mubr.f32.mxu0 0.0
    %1353 = vmatmul.mubr.f32.gmra.mrb[0].mxu0 %v867
    %v1354 = vpop.f32.mrb[0].mxu0
    %v1355 = vadd.f32 %v768, %v1354
    %v1356 = vpop.f32.mrb[0].mxu0
    %1357 = vmatprep.mubr.f32.mxu0 0.0
    %1358 = vmatmul.mubr.f32.gmra.mrb[0].mxu0 %v870
    %v1359 = vpop.f32.mrb[0].mxu0
    %v1360 = vadd.f32 %v773, %v1359
    %v1361 = vpop.f32.mrb[0].mxu0
    %1362 = vdwg.mxu0
    %s1363 = scalar_lea.vmem [#allocation2], 32
    %v1364 = vld [vmem:[%s1363] sm:$0xff]
    %v1365 = vld [vmem:[%s1363 + $0x8] sm:$0xff]
    %v1366 = vld [vmem:[%s1363 + $0x10] sm:$0xff]
    %v1367 = vld [vmem:[%s1363 + $0x18] sm:$0xff]
    %v1368 = vld [vmem:[%s1363 + $0x20] sm:$0xff]
    %v1369 = vld [vmem:[%s1363 + $0x28] sm:$0xff]
    %v1370 = vld [vmem:[%s1363 + $0x30] sm:$0xff]
    %v1371 = vld [vmem:[%s1363 + $0x38] sm:$0xff]
    %v1372 = vld [vmem:[%s1363 + $0x40] sm:$0xff]
    %v1373 = vld [vmem:[%s1363 + $0x48] sm:$0xff]
    %v1374 = vld [vmem:[%s1363 + $0x50] sm:$0xff]
    %v1375 = vld [vmem:[%s1363 + $0x58] sm:$0xff]
    %v1376 = vld [vmem:[%s1363 + $0x60] sm:$0xff]
    %v1377 = vld [vmem:[%s1363 + $0x68] sm:$0xff]
    %v1378 = vld [vmem:[%s1363 + $0x70] sm:$0xff]
    %v1379 = vld [vmem:[%s1363 + $0x78] sm:$0xff]
    %v1380 = vld [vmem:[%s1363 + $0x80] sm:$0xff]
    %v1381 = vld [vmem:[%s1363 + $0x88] sm:$0xff]
    %v1382 = vld [vmem:[%s1363 + $0x90] sm:$0xff]
    %v1383 = vld [vmem:[%s1363 + $0x98] sm:$0xff]
    %v1384 = vld [vmem:[%s1363 + $0xa0] sm:$0xff]
    %v1385 = vld [vmem:[%s1363 + $0xa8] sm:$0xff]
    %v1386 = vld [vmem:[%s1363 + $0xb0] sm:$0xff]
    %v1387 = vld [vmem:[%s1363 + $0xb8] sm:$0xff]
    %v1388 = vld [vmem:[%s1363 + $0xc0] sm:$0xff]
    %v1389 = vld [vmem:[%s1363 + $0xc8] sm:$0xff]
    %v1390 = vld [vmem:[%s1363 + $0xd0] sm:$0xff]
    %v1391 = vld [vmem:[%s1363 + $0xd8] sm:$0xff]
    %v1392 = vld [vmem:[%s1363 + $0xe0] sm:$0xff]
    %v1393 = vld [vmem:[%s1363 + $0xe8] sm:$0xff]
    %v1394 = vld [vmem:[%s1363 + $0xf0] sm:$0xff]
    %v1395 = vld [vmem:[%s1363 + $0xf8] sm:$0xff]
    %v1397 = vsel %vm187, %v1364, 0
    %v1400 = vsel %vm187, %v1365, 0
    %v1403 = vsel %vm187, %v1366, 0
    %v1406 = vsel %vm187, %v1367, 0
    %v1409 = vsel %vm187, %v1368, 0
    %v1412 = vsel %vm187, %v1369, 0
    %v1415 = vsel %vm187, %v1370, 0
    %v1418 = vsel %vm187, %v1371, 0
    %v1421 = vsel %vm187, %v1372, 0
    %v1424 = vsel %vm187, %v1373, 0
    %v1427 = vsel %vm187, %v1374, 0
    %v1430 = vsel %vm187, %v1375, 0
    %v1433 = vsel %vm187, %v1376, 0
    %v1436 = vsel %vm187, %v1377, 0
    %v1439 = vsel %vm187, %v1378, 0
    %v1442 = vsel %vm187, %v1379, 0
    %v1445 = vsel %vm187, %v1380, 0
    %v1448 = vsel %vm187, %v1381, 0
    %v1451 = vsel %vm187, %v1382, 0
    %v1454 = vsel %vm187, %v1383, 0
    %v1457 = vsel %vm187, %v1384, 0
    %v1460 = vsel %vm187, %v1385, 0
    %v1463 = vsel %vm187, %v1386, 0
    %v1466 = vsel %vm187, %v1387, 0
    %v1469 = vsel %vm187, %v1388, 0
    %v1472 = vsel %vm187, %v1389, 0
    %v1475 = vsel %vm187, %v1390, 0
    %v1478 = vsel %vm187, %v1391, 0
    %v1481 = vsel %vm187, %v1392, 0
    %v1484 = vsel %vm187, %v1393, 0
    %v1487 = vsel %vm187, %v1394, 0
    %v1490 = vsel %vm187, %v1395, 0
    %v1493 = vsel %vm284, %v87, 0
    %v1496 = vsel %vm284, %v88, 0
    %v1499 = vsel %vm284, %v89, 0
    %1501 = vmatprep.subr.mxu0 %v76
    %1502 = vmatpush1.msra.mxu0 %v75
    %1503 = vmatprep.subr.mxu0 %v79
    %1504 = vmatpush1.msra.mxu0 %v78
    %1505 = vmatprep.subr.mxu0 %v82
    %1506 = vmatpush1.msra.mxu0 %v81
    %1507 = vmatprep.subr.mxu0 %v85
    %1508 = vmatpush1.msra.mxu0 %v84
    %1509 = vmatprep.subr.mxu0 %v1496
    %1510 = vmatpush1.msra.mxu0 %v1493
    %1511 = vmatprep.subr.mxu0 0.0
    %1512 = vmatpush1.msra.mxu0 0.0
    %1513 = vmatprep.subr.mxu0 0.0
    %1514 = vmatpush1.msra.mxu0 0.0
    %1515 = vmatprep.subr.mxu0 0.0
    %1516 = vmatpush1.msra.mxu0 0.0
    %1517 = vmatprep.subr.mxu0 0.0
    %1518 = vmatpush1.msra.mxu0 0.0
    %1519 = vmatprep.subr.mxu0 0.0
    %1520 = vmatpush1.msra.mxu0 0.0
    %1521 = vmatprep.subr.mxu0 0.0
    %1522 = vmatpush1.msra.mxu0 0.0
    %1523 = vmatprep.subr.mxu0 0.0
    %1524 = vmatpush1.msra.mxu0 0.0
    %1525 = vmatprep.subr.mxu0 0.0
    %1526 = vmatpush1.msra.mxu0 0.0
    %1527 = vmatprep.subr.mxu0 0.0
    %1528 = vmatpush1.msra.mxu0 0.0
    %1529 = vmatprep.subr.mxu0 0.0
    %1530 = vmatpush1.msra.mxu0 0.0
    %1531 = vmatprep.subr.mxu0 0.0
    %1532 = vmatpush1.msra.mxu0 0.0
    %1533 = vmatprep.subr.mxu0 0.0
    %1534 = vmatpush1.msra.mxu0 0.0
    %1535 = vmatprep.subr.mxu0 0.0
    %1536 = vmatpush1.msra.mxu0 0.0
    %1537 = vmatprep.subr.mxu0 0.0
    %1538 = vmatpush1.msra.mxu0 0.0
    %1539 = vmatprep.subr.mxu0 0.0
    %1540 = vmatpush1.msra.mxu0 0.0
    %1541 = vmatprep.subr.mxu0 0.0
    %1542 = vmatpush1.msra.mxu0 0.0
    %1543 = vmatprep.subr.mxu0 0.0
    %1544 = vmatpush1.msra.mxu0 0.0
    %1545 = vmatprep.subr.mxu0 0.0
    %1546 = vmatpush1.msra.mxu0 0.0
    %1547 = vmatprep.subr.mxu0 0.0
    %1548 = vmatpush1.msra.mxu0 0.0
    %1549 = vmatprep.subr.mxu0 0.0
    %1550 = vmatpush1.msra.mxu0 0.0
    %1551 = vmatprep.subr.mxu0 0.0
    %1552 = vmatpush1.msra.mxu0 0.0
    %1553 = vmatprep.subr.mxu0 0.0
    %1554 = vmatpush1.msra.mxu0 0.0
    %1555 = vmatprep.subr.mxu0 0.0
    %1556 = vmatpush1.msra.mxu0 0.0
    %1557 = vmatprep.subr.mxu0 0.0
    %1558 = vmatpush1.msra.mxu0 0.0
    %1559 = vmatprep.subr.mxu0 0.0
    %1560 = vmatpush1.msra.mxu0 0.0
    %1561 = vmatprep.subr.mxu0 0.0
    %1562 = vmatpush1.msra.mxu0 0.0
    %1563 = vmatprep.subr.mxu0 0.0
    %1564 = vmatpush1.msra.mxu0 0.0
    %1565 = vmatprep.mubr.f32.mxu0 0.0
    %1566 = vmatmul.mubr.f32.gmra.mrb[0].mxu0 %v1397
    %v1567 = vpop.f32.mrb[0].mxu0
    %v1568 = vadd.f32 0.0, %v1567
    %v1569 = vpop.f32.mrb[0].mxu0
    %v1570 = vadd.f32 0.0, %v1569
    %1571 = vmatprep.mubr.f32.mxu0 0.0
    %1572 = vmatmul.mubr.f32.gmra.mrb[0].mxu0 %v1400
    %v1573 = vpop.f32.mrb[0].mxu0
    %v1574 = vadd.f32 0.0, %v1573
    %v1575 = vpop.f32.mrb[0].mxu0
    %v1576 = vadd.f32 0.0, %v1575
    %1577 = vmatprep.mubr.f32.mxu0 0.0
    %1578 = vmatmul.mubr.f32.gmra.mrb[0].mxu0 %v1403
    %v1579 = vpop.f32.mrb[0].mxu0
    %v1580 = vadd.f32 0.0, %v1579
    %v1581 = vpop.f32.mrb[0].mxu0
    %v1582 = vadd.f32 0.0, %v1581
    %1583 = vmatprep.mubr.f32.mxu0 0.0
    %1584 = vmatmul.mubr.f32.gmra.mrb[0].mxu0 %v1406
    %v1585 = vpop.f32.mrb[0].mxu0
    %v1586 = vadd.f32 0.0, %v1585
    %v1587 = vpop.f32.mrb[0].mxu0
    %v1588 = vadd.f32 0.0, %v1587
    %1589 = vmatprep.mubr.f32.mxu0 0.0
    %1590 = vmatmul.mubr.f32.gmra.mrb[0].mxu0 %v1409
    %v1591 = vpop.f32.mrb[0].mxu0
    %v1592 = vadd.f32 0.0, %v1591
    %v1593 = vpop.f32.mrb[0].mxu0
    %v1594 = vadd.f32 0.0, %v1593
    %1595 = vmatprep.mubr.f32.mxu0 0.0
    %1596 = vmatmul.mubr.f32.gmra.mrb[0].mxu0 %v1412
    %v1597 = vpop.f32.mrb[0].mxu0
    %v1598 = vadd.f32 0.0, %v1597
    %v1599 = vpop.f32.mrb[0].mxu0
    %v1600 = vadd.f32 0.0, %v1599
    %1601 = vmatprep.mubr.f32.mxu0 0.0
    %1602 = vmatmul.mubr.f32.gmra.mrb[0].mxu0 %v1415
    %v1603 = vpop.f32.mrb[0].mxu0
    %v1604 = vadd.f32 0.0, %v1603
    %v1605 = vpop.f32.mrb[0].mxu0
    %v1606 = vadd.f32 0.0, %v1605
    %1607 = vmatprep.mubr.f32.mxu0 0.0
    %1608 = vmatmul.mubr.f32.gmra.mrb[0].mxu0 %v1418
    %v1609 = vpop.f32.mrb[0].mxu0
    %v1610 = vadd.f32 0.0, %v1609
    %v1611 = vpop.f32.mrb[0].mxu0
    %v1612 = vadd.f32 0.0, %v1611
    %1613 = vmatprep.mubr.f32.mxu0 0.0
    %1614 = vmatmul.mubr.f32.gmra.mrb[0].mxu0 %v1421
    %v1615 = vpop.f32.mrb[0].mxu0
    %v1616 = vadd.f32 0.0, %v1615
    %v1617 = vpop.f32.mrb[0].mxu0
    %v1618 = vadd.f32 0.0, %v1617
    %1619 = vmatprep.mubr.f32.mxu0 0.0
    %1620 = vmatmul.mubr.f32.gmra.mrb[0].mxu0 %v1424
    %v1621 = vpop.f32.mrb[0].mxu0
    %v1622 = vadd.f32 0.0, %v1621
    %v1623 = vpop.f32.mrb[0].mxu0
    %v1624 = vadd.f32 0.0, %v1623
    %1625 = vmatprep.mubr.f32.mxu0 0.0
    %1626 = vmatmul.mubr.f32.gmra.mrb[0].mxu0 %v1427
    %v1627 = vpop.f32.mrb[0].mxu0
    %v1628 = vadd.f32 0.0, %v1627
    %v1629 = vpop.f32.mrb[0].mxu0
    %v1630 = vadd.f32 0.0, %v1629
    %1631 = vmatprep.mubr.f32.mxu0 0.0
    %1632 = vmatmul.mubr.f32.gmra.mrb[0].mxu0 %v1430
    %v1633 = vpop.f32.mrb[0].mxu0
    %v1634 = vadd.f32 0.0, %v1633
    %v1635 = vpop.f32.mrb[0].mxu0
    %v1636 = vadd.f32 0.0, %v1635
    %1637 = vmatprep.mubr.f32.mxu0 0.0
    %1638 = vmatmul.mubr.f32.gmra.mrb[0].mxu0 %v1433
    %v1639 = vpop.f32.mrb[0].mxu0
    %v1640 = vadd.f32 0.0, %v1639
    %v1641 = vpop.f32.mrb[0].mxu0
    %v1642 = vadd.f32 0.0, %v1641
    %1643 = vmatprep.mubr.f32.mxu0 0.0
    %1644 = vmatmul.mubr.f32.gmra.mrb[0].mxu0 %v1436
    %v1645 = vpop.f32.mrb[0].mxu0
    %v1646 = vadd.f32 0.0, %v1645
    %v1647 = vpop.f32.mrb[0].mxu0
    %v1648 = vadd.f32 0.0, %v1647
    %1649 = vmatprep.mubr.f32.mxu0 0.0
    %1650 = vmatmul.mubr.f32.gmra.mrb[0].mxu0 %v1439
    %v1651 = vpop.f32.mrb[0].mxu0
    %v1652 = vadd.f32 0.0, %v1651
    %v1653 = vpop.f32.mrb[0].mxu0
    %v1654 = vadd.f32 0.0, %v1653
    %1655 = vmatprep.mubr.f32.mxu0 0.0
    %1656 = vmatmul.mubr.f32.gmra.mrb[0].mxu0 %v1442
    %v1657 = vpop.f32.mrb[0].mxu0
    %v1658 = vadd.f32 0.0, %v1657
    %v1659 = vpop.f32.mrb[0].mxu0
    %v1660 = vadd.f32 0.0, %v1659
    %1661 = vmatprep.mubr.f32.mxu0 0.0
    %1662 = vmatmul.mubr.f32.gmra.mrb[0].mxu0 %v1445
    %v1663 = vpop.f32.mrb[0].mxu0
    %v1664 = vadd.f32 0.0, %v1663
    %v1665 = vpop.f32.mrb[0].mxu0
    %v1666 = vadd.f32 0.0, %v1665
    %1667 = vmatprep.mubr.f32.mxu0 0.0
    %1668 = vmatmul.mubr.f32.gmra.mrb[0].mxu0 %v1448
    %v1669 = vpop.f32.mrb[0].mxu0
    %v1670 = vadd.f32 0.0, %v1669
    %v1671 = vpop.f32.mrb[0].mxu0
    %v1672 = vadd.f32 0.0, %v1671
    %1673 = vmatprep.mubr.f32.mxu0 0.0
    %1674 = vmatmul.mubr.f32.gmra.mrb[0].mxu0 %v1451
    %v1675 = vpop.f32.mrb[0].mxu0
    %v1676 = vadd.f32 0.0, %v1675
    %v1677 = vpop.f32.mrb[0].mxu0
    %v1678 = vadd.f32 0.0, %v1677
    %1679 = vmatprep.mubr.f32.mxu0 0.0
    %1680 = vmatmul.mubr.f32.gmra.mrb[0].mxu0 %v1454
    %v1681 = vpop.f32.mrb[0].mxu0
    %v1682 = vadd.f32 0.0, %v1681
    %v1683 = vpop.f32.mrb[0].mxu0
    %v1684 = vadd.f32 0.0, %v1683
    %1685 = vmatprep.mubr.f32.mxu0 0.0
    %1686 = vmatmul.mubr.f32.gmra.mrb[0].mxu0 %v1457
    %v1687 = vpop.f32.mrb[0].mxu0
    %v1688 = vadd.f32 0.0, %v1687
    %v1689 = vpop.f32.mrb[0].mxu0
    %v1690 = vadd.f32 0.0, %v1689
    %1691 = vmatprep.mubr.f32.mxu0 0.0
    %1692 = vmatmul.mubr.f32.gmra.mrb[0].mxu0 %v1460
    %v1693 = vpop.f32.mrb[0].mxu0
    %v1694 = vadd.f32 0.0, %v1693
    %v1695 = vpop.f32.mrb[0].mxu0
    %v1696 = vadd.f32 0.0, %v1695
    %1697 = vmatprep.mubr.f32.mxu0 0.0
    %1698 = vmatmul.mubr.f32.gmra.mrb[0].mxu0 %v1463
    %v1699 = vpop.f32.mrb[0].mxu0
    %v1700 = vadd.f32 0.0, %v1699
    %v1701 = vpop.f32.mrb[0].mxu0
    %v1702 = vadd.f32 0.0, %v1701
    %1703 = vmatprep.mubr.f32.mxu0 0.0
    %1704 = vmatmul.mubr.f32.gmra.mrb[0].mxu0 %v1466
    %v1705 = vpop.f32.mrb[0].mxu0
    %v1706 = vadd.f32 0.0, %v1705
    %v1707 = vpop.f32.mrb[0].mxu0
    %v1708 = vadd.f32 0.0, %v1707
    %1709 = vmatprep.mubr.f32.mxu0 0.0
    %1710 = vmatmul.mubr.f32.gmra.mrb[0].mxu0 %v1469
    %v1711 = vpop.f32.mrb[0].mxu0
    %v1712 = vadd.f32 0.0, %v1711
    %v1713 = vpop.f32.mrb[0].mxu0
    %v1714 = vadd.f32 0.0, %v1713
    %1715 = vmatprep.mubr.f32.mxu0 0.0
    %1716 = vmatmul.mubr.f32.gmra.mrb[0].mxu0 %v1472
    %v1717 = vpop.f32.mrb[0].mxu0
    %v1718 = vadd.f32 0.0, %v1717
    %v1719 = vpop.f32.mrb[0].mxu0
    %v1720 = vadd.f32 0.0, %v1719
    %1721 = vmatprep.mubr.f32.mxu0 0.0
    %1722 = vmatmul.mubr.f32.gmra.mrb[0].mxu0 %v1475
    %v1723 = vpop.f32.mrb[0].mxu0
    %v1724 = vadd.f32 0.0, %v1723
    %v1725 = vpop.f32.mrb[0].mxu0
    %v1726 = vadd.f32 0.0, %v1725
    %1727 = vmatprep.mubr.f32.mxu0 0.0
    %1728 = vmatmul.mubr.f32.gmra.mrb[0].mxu0 %v1478
    %v1729 = vpop.f32.mrb[0].mxu0
    %v1730 = vadd.f32 0.0, %v1729
    %v1731 = vpop.f32.mrb[0].mxu0
    %v1732 = vadd.f32 0.0, %v1731
    %1733 = vmatprep.mubr.f32.mxu0 0.0
    %1734 = vmatmul.mubr.f32.gmra.mrb[0].mxu0 %v1481
    %v1735 = vpop.f32.mrb[0].mxu0
    %v1736 = vadd.f32 0.0, %v1735
    %v1737 = vpop.f32.mrb[0].mxu0
    %v1738 = vadd.f32 0.0, %v1737
    %1739 = vmatprep.mubr.f32.mxu0 0.0
    %1740 = vmatmul.mubr.f32.gmra.mrb[0].mxu0 %v1484
    %v1741 = vpop.f32.mrb[0].mxu0
    %v1742 = vadd.f32 0.0, %v1741
    %v1743 = vpop.f32.mrb[0].mxu0
    %v1744 = vadd.f32 0.0, %v1743
    %1745 = vmatprep.mubr.f32.mxu0 0.0
    %1746 = vmatmul.mubr.f32.gmra.mrb[0].mxu0 %v1487
    %v1747 = vpop.f32.mrb[0].mxu0
    %v1748 = vadd.f32 0.0, %v1747
    %v1749 = vpop.f32.mrb[0].mxu0
    %v1750 = vadd.f32 0.0, %v1749
    %1751 = vmatprep.mubr.f32.mxu0 0.0
    %1752 = vmatmul.mubr.f32.gmra.mrb[0].mxu0 %v1490
    %v1753 = vpop.f32.mrb[0].mxu0
    %v1754 = vadd.f32 0.0, %v1753
    %v1755 = vpop.f32.mrb[0].mxu0
    %v1756 = vadd.f32 0.0, %v1755
    %1757 = vdwg.mxu0
    %1758 = vmatprep.subr.mxu0 0.0
    %1759 = vmatpush1.msra.mxu0 %v77
    %1760 = vmatprep.subr.mxu0 0.0
    %1761 = vmatpush1.msra.mxu0 %v80
    %1762 = vmatprep.subr.mxu0 0.0
    %1763 = vmatpush1.msra.mxu0 %v83
    %1764 = vmatprep.subr.mxu0 0.0
    %1765 = vmatpush1.msra.mxu0 %v86
    %1766 = vmatprep.subr.mxu0 0.0
    %1767 = vmatpush1.msra.mxu0 %v1499
    %1768 = vmatprep.subr.mxu0 0.0
    %1769 = vmatpush1.msra.mxu0 0.0
    %1770 = vmatprep.subr.mxu0 0.0
    %1771 = vmatpush1.msra.mxu0 0.0
    %1772 = vmatprep.subr.mxu0 0.0
    %1773 = vmatpush1.msra.mxu0 0.0
    %1774 = vmatprep.subr.mxu0 0.0
    %1775 = vmatpush1.msra.mxu0 0.0
    %1776 = vmatprep.subr.mxu0 0.0
    %1777 = vmatpush1.msra.mxu0 0.0
    %1778 = vmatprep.subr.mxu0 0.0
    %1779 = vmatpush1.msra.mxu0 0.0
    %1780 = vmatprep.subr.mxu0 0.0
    %1781 = vmatpush1.msra.mxu0 0.0
    %1782 = vmatprep.subr.mxu0 0.0
    %1783 = vmatpush1.msra.mxu0 0.0
    %1784 = vmatprep.subr.mxu0 0.0
    %1785 = vmatpush1.msra.mxu0 0.0
    %1786 = vmatprep.subr.mxu0 0.0
    %1787 = vmatpush1.msra.mxu0 0.0
    %1788 = vmatprep.subr.mxu0 0.0
    %1789 = vmatpush1.msra.mxu0 0.0
    %1790 = vmatprep.subr.mxu0 0.0
    %1791 = vmatpush1.msra.mxu0 0.0
    %1792 = vmatprep.subr.mxu0 0.0
    %1793 = vmatpush1.msra.mxu0 0.0
    %1794 = vmatprep.subr.mxu0 0.0
    %1795 = vmatpush1.msra.mxu0 0.0
    %1796 = vmatprep.subr.mxu0 0.0
    %1797 = vmatpush1.msra.mxu0 0.0
    %1798 = vmatprep.subr.mxu0 0.0
    %1799 = vmatpush1.msra.mxu0 0.0
    %1800 = vmatprep.subr.mxu0 0.0
    %1801 = vmatpush1.msra.mxu0 0.0
    %1802 = vmatprep.subr.mxu0 0.0
    %1803 = vmatpush1.msra.mxu0 0.0
    %1804 = vmatprep.subr.mxu0 0.0
    %1805 = vmatpush1.msra.mxu0 0.0
    %1806 = vmatprep.subr.mxu0 0.0
    %1807 = vmatpush1.msra.mxu0 0.0
    %1808 = vmatprep.subr.mxu0 0.0
    %1809 = vmatpush1.msra.mxu0 0.0
    %1810 = vmatprep.subr.mxu0 0.0
    %1811 = vmatpush1.msra.mxu0 0.0
    %1812 = vmatprep.subr.mxu0 0.0
    %1813 = vmatpush1.msra.mxu0 0.0
    %1814 = vmatprep.subr.mxu0 0.0
    %1815 = vmatpush1.msra.mxu0 0.0
    %1816 = vmatprep.subr.mxu0 0.0
    %1817 = vmatpush1.msra.mxu0 0.0
    %1818 = vmatprep.subr.mxu0 0.0
    %1819 = vmatpush1.msra.mxu0 0.0
    %1820 = vmatprep.subr.mxu0 0.0
    %1821 = vmatpush1.msra.mxu0 0.0
    %1822 = vmatprep.mubr.f32.mxu0 0.0
    %1823 = vmatmul.mubr.f32.gmra.mrb[0].mxu0 %v1397
    %v1824 = vpop.f32.mrb[0].mxu0
    %v1825 = vadd.f32 0.0, %v1824
    %v1826 = vpop.f32.mrb[0].mxu0
    %1827 = vmatprep.mubr.f32.mxu0 0.0
    %1828 = vmatmul.mubr.f32.gmra.mrb[0].mxu0 %v1400
    %v1829 = vpop.f32.mrb[0].mxu0
    %v1830 = vadd.f32 0.0, %v1829
    %v1831 = vpop.f32.mrb[0].mxu0
    %1832 = vmatprep.mubr.f32.mxu0 0.0
    %1833 = vmatmul.mubr.f32.gmra.mrb[0].mxu0 %v1403
    %v1834 = vpop.f32.mrb[0].mxu0
    %v1835 = vadd.f32 0.0, %v1834
    %v1836 = vpop.f32.mrb[0].mxu0
    %1837 = vmatprep.mubr.f32.mxu0 0.0
    %1838 = vmatmul.mubr.f32.gmra.mrb[0].mxu0 %v1406
    %v1839 = vpop.f32.mrb[0].mxu0
    %v1840 = vadd.f32 0.0, %v1839
    %v1841 = vpop.f32.mrb[0].mxu0
    %1842 = vmatprep.mubr.f32.mxu0 0.0
    %1843 = vmatmul.mubr.f32.gmra.mrb[0].mxu0 %v1409
    %v1844 = vpop.f32.mrb[0].mxu0
    %v1845 = vadd.f32 0.0, %v1844
    %v1846 = vpop.f32.mrb[0].mxu0
    %1847 = vmatprep.mubr.f32.mxu0 0.0
    %1848 = vmatmul.mubr.f32.gmra.mrb[0].mxu0 %v1412
    %v1849 = vpop.f32.mrb[0].mxu0
    %v1850 = vadd.f32 0.0, %v1849
    %v1851 = vpop.f32.mrb[0].mxu0
    %1852 = vmatprep.mubr.f32.mxu0 0.0
    %1853 = vmatmul.mubr.f32.gmra.mrb[0].mxu0 %v1415
    %v1854 = vpop.f32.mrb[0].mxu0
    %v1855 = vadd.f32 0.0, %v1854
    %v1856 = vpop.f32.mrb[0].mxu0
    %1857 = vmatprep.mubr.f32.mxu0 0.0
    %1858 = vmatmul.mubr.f32.gmra.mrb[0].mxu0 %v1418
    %v1859 = vpop.f32.mrb[0].mxu0
    %v1860 = vadd.f32 0.0, %v1859
    %v1861 = vpop.f32.mrb[0].mxu0
    %1862 = vmatprep.mubr.f32.mxu0 0.0
    %1863 = vmatmul.mubr.f32.gmra.mrb[0].mxu0 %v1421
    %v1864 = vpop.f32.mrb[0].mxu0
    %v1865 = vadd.f32 0.0, %v1864
    %v1866 = vpop.f32.mrb[0].mxu0
    %1867 = vmatprep.mubr.f32.mxu0 0.0
    %1868 = vmatmul.mubr.f32.gmra.mrb[0].mxu0 %v1424
    %v1869 = vpop.f32.mrb[0].mxu0
    %v1870 = vadd.f32 0.0, %v1869
    %v1871 = vpop.f32.mrb[0].mxu0
    %1872 = vmatprep.mubr.f32.mxu0 0.0
    %1873 = vmatmul.mubr.f32.gmra.mrb[0].mxu0 %v1427
    %v1874 = vpop.f32.mrb[0].mxu0
    %v1875 = vadd.f32 0.0, %v1874
    %v1876 = vpop.f32.mrb[0].mxu0
    %1877 = vmatprep.mubr.f32.mxu0 0.0
    %1878 = vmatmul.mubr.f32.gmra.mrb[0].mxu0 %v1430
    %v1879 = vpop.f32.mrb[0].mxu0
    %v1880 = vadd.f32 0.0, %v1879
    %v1881 = vpop.f32.mrb[0].mxu0
    %1882 = vmatprep.mubr.f32.mxu0 0.0
    %1883 = vmatmul.mubr.f32.gmra.mrb[0].mxu0 %v1433
    %v1884 = vpop.f32.mrb[0].mxu0
    %v1885 = vadd.f32 0.0, %v1884
    %v1886 = vpop.f32.mrb[0].mxu0
    %1887 = vmatprep.mubr.f32.mxu0 0.0
    %1888 = vmatmul.mubr.f32.gmra.mrb[0].mxu0 %v1436
    %v1889 = vpop.f32.mrb[0].mxu0
    %v1890 = vadd.f32 0.0, %v1889
    %v1891 = vpop.f32.mrb[0].mxu0
    %1892 = vmatprep.mubr.f32.mxu0 0.0
    %1893 = vmatmul.mubr.f32.gmra.mrb[0].mxu0 %v1439
    %v1894 = vpop.f32.mrb[0].mxu0
    %v1895 = vadd.f32 0.0, %v1894
    %v1896 = vpop.f32.mrb[0].mxu0
    %1897 = vmatprep.mubr.f32.mxu0 0.0
    %1898 = vmatmul.mubr.f32.gmra.mrb[0].mxu0 %v1442
    %v1899 = vpop.f32.mrb[0].mxu0
    %v1900 = vadd.f32 0.0, %v1899
    %v1901 = vpop.f32.mrb[0].mxu0
    %1902 = vmatprep.mubr.f32.mxu0 0.0
    %1903 = vmatmul.mubr.f32.gmra.mrb[0].mxu0 %v1445
    %v1904 = vpop.f32.mrb[0].mxu0
    %v1905 = vadd.f32 0.0, %v1904
    %v1906 = vpop.f32.mrb[0].mxu0
    %1907 = vmatprep.mubr.f32.mxu0 0.0
    %1908 = vmatmul.mubr.f32.gmra.mrb[0].mxu0 %v1448
    %v1909 = vpop.f32.mrb[0].mxu0
    %v1910 = vadd.f32 0.0, %v1909
    %v1911 = vpop.f32.mrb[0].mxu0
    %1912 = vmatprep.mubr.f32.mxu0 0.0
    %1913 = vmatmul.mubr.f32.gmra.mrb[0].mxu0 %v1451
    %v1914 = vpop.f32.mrb[0].mxu0
    %v1915 = vadd.f32 0.0, %v1914
    %v1916 = vpop.f32.mrb[0].mxu0
    %1917 = vmatprep.mubr.f32.mxu0 0.0
    %1918 = vmatmul.mubr.f32.gmra.mrb[0].mxu0 %v1454
    %v1919 = vpop.f32.mrb[0].mxu0
    %v1920 = vadd.f32 0.0, %v1919
    %v1921 = vpop.f32.mrb[0].mxu0
    %1922 = vmatprep.mubr.f32.mxu0 0.0
    %1923 = vmatmul.mubr.f32.gmra.mrb[0].mxu0 %v1457
    %v1924 = vpop.f32.mrb[0].mxu0
    %v1925 = vadd.f32 0.0, %v1924
    %v1926 = vpop.f32.mrb[0].mxu0
    %1927 = vmatprep.mubr.f32.mxu0 0.0
    %1928 = vmatmul.mubr.f32.gmra.mrb[0].mxu0 %v1460
    %v1929 = vpop.f32.mrb[0].mxu0
    %v1930 = vadd.f32 0.0, %v1929
    %v1931 = vpop.f32.mrb[0].mxu0
    %1932 = vmatprep.mubr.f32.mxu0 0.0
    %1933 = vmatmul.mubr.f32.gmra.mrb[0].mxu0 %v1463
    %v1934 = vpop.f32.mrb[0].mxu0
    %v1935 = vadd.f32 0.0, %v1934
    %v1936 = vpop.f32.mrb[0].mxu0
    %1937 = vmatprep.mubr.f32.mxu0 0.0
    %1938 = vmatmul.mubr.f32.gmra.mrb[0].mxu0 %v1466
    %v1939 = vpop.f32.mrb[0].mxu0
    %v1940 = vadd.f32 0.0, %v1939
    %v1941 = vpop.f32.mrb[0].mxu0
    %1942 = vmatprep.mubr.f32.mxu0 0.0
    %1943 = vmatmul.mubr.f32.gmra.mrb[0].mxu0 %v1469
    %v1944 = vpop.f32.mrb[0].mxu0
    %v1945 = vadd.f32 0.0, %v1944
    %v1946 = vpop.f32.mrb[0].mxu0
    %1947 = vmatprep.mubr.f32.mxu0 0.0
    %1948 = vmatmul.mubr.f32.gmra.mrb[0].mxu0 %v1472
    %v1949 = vpop.f32.mrb[0].mxu0
    %v1950 = vadd.f32 0.0, %v1949
    %v1951 = vpop.f32.mrb[0].mxu0
    %1952 = vmatprep.mubr.f32.mxu0 0.0
    %1953 = vmatmul.mubr.f32.gmra.mrb[0].mxu0 %v1475
    %v1954 = vpop.f32.mrb[0].mxu0
    %v1955 = vadd.f32 0.0, %v1954
    %v1956 = vpop.f32.mrb[0].mxu0
    %1957 = vmatprep.mubr.f32.mxu0 0.0
    %1958 = vmatmul.mubr.f32.gmra.mrb[0].mxu0 %v1478
    %v1959 = vpop.f32.mrb[0].mxu0
    %v1960 = vadd.f32 0.0, %v1959
    %v1961 = vpop.f32.mrb[0].mxu0
    %1962 = vmatprep.mubr.f32.mxu0 0.0
    %1963 = vmatmul.mubr.f32.gmra.mrb[0].mxu0 %v1481
    %v1964 = vpop.f32.mrb[0].mxu0
    %v1965 = vadd.f32 0.0, %v1964
    %v1966 = vpop.f32.mrb[0].mxu0
    %1967 = vmatprep.mubr.f32.mxu0 0.0
    %1968 = vmatmul.mubr.f32.gmra.mrb[0].mxu0 %v1484
    %v1969 = vpop.f32.mrb[0].mxu0
    %v1970 = vadd.f32 0.0, %v1969
    %v1971 = vpop.f32.mrb[0].mxu0
    %1972 = vmatprep.mubr.f32.mxu0 0.0
    %1973 = vmatmul.mubr.f32.gmra.mrb[0].mxu0 %v1487
    %v1974 = vpop.f32.mrb[0].mxu0
    %v1975 = vadd.f32 0.0, %v1974
    %v1976 = vpop.f32.mrb[0].mxu0
    %1977 = vmatprep.mubr.f32.mxu0 0.0
    %1978 = vmatmul.mubr.f32.gmra.mrb[0].mxu0 %v1490
    %v1979 = vpop.f32.mrb[0].mxu0
    %v1980 = vadd.f32 0.0, %v1979
    %v1981 = vpop.f32.mrb[0].mxu0
    %1982 = vdwg.mxu0
    %v1983 = vadd.f32 %v948, %v1568
    %v1984 = vadd.f32 %v950, %v1570
    %v1985 = vadd.f32 %v1205, %v1825
    %v1986 = vadd.f32 %v954, %v1574
    %v1987 = vadd.f32 %v956, %v1576
    %v1988 = vadd.f32 %v1210, %v1830
    %v1989 = vadd.f32 %v960, %v1580
    %v1990 = vadd.f32 %v962, %v1582
    %v1991 = vadd.f32 %v1215, %v1835
    %v1992 = vadd.f32 %v966, %v1586
    %v1993 = vadd.f32 %v968, %v1588
    %v1994 = vadd.f32 %v1220, %v1840
    %v1995 = vadd.f32 %v972, %v1592
    %v1996 = vadd.f32 %v974, %v1594
    %v1997 = vadd.f32 %v1225, %v1845
    %v1998 = vadd.f32 %v978, %v1598
    %v1999 = vadd.f32 %v980, %v1600
    %v2000 = vadd.f32 %v1230, %v1850
    %v2001 = vadd.f32 %v984, %v1604
    %v2002 = vadd.f32 %v986, %v1606
    %v2003 = vadd.f32 %v1235, %v1855
    %v2004 = vadd.f32 %v990, %v1610
    %v2005 = vadd.f32 %v992, %v1612
    %v2006 = vadd.f32 %v1240, %v1860
    %v2007 = vadd.f32 %v996, %v1616
    %v2008 = vadd.f32 %v998, %v1618
    %v2009 = vadd.f32 %v1245, %v1865
    %v2010 = vadd.f32 %v1002, %v1622
    %v2011 = vadd.f32 %v1004, %v1624
    %v2012 = vadd.f32 %v1250, %v1870
    %v2013 = vadd.f32 %v1008, %v1628
    %v2014 = vadd.f32 %v1010, %v1630
    %v2015 = vadd.f32 %v1255, %v1875
    %v2016 = vadd.f32 %v1014, %v1634
    %v2017 = vadd.f32 %v1016, %v1636
    %v2018 = vadd.f32 %v1260, %v1880
    %v2019 = vadd.f32 %v1020, %v1640
    %v2020 = vadd.f32 %v1022, %v1642
    %v2021 = vadd.f32 %v1265, %v1885
    %v2022 = vadd.f32 %v1026, %v1646
    %v2023 = vadd.f32 %v1028, %v1648
    %v2024 = vadd.f32 %v1270, %v1890
    %v2025 = vadd.f32 %v1032, %v1652
    %v2026 = vadd.f32 %v1034, %v1654
    %v2027 = vadd.f32 %v1275, %v1895
    %v2028 = vadd.f32 %v1038, %v1658
    %v2029 = vadd.f32 %v1040, %v1660
    %v2030 = vadd.f32 %v1280, %v1900
    %v2031 = vadd.f32 %v1044, %v1664
    %v2032 = vadd.f32 %v1046, %v1666
    %v2033 = vadd.f32 %v1285, %v1905
    %v2034 = vadd.f32 %v1050, %v1670
    %v2035 = vadd.f32 %v1052, %v1672
    %v2036 = vadd.f32 %v1290, %v1910
    %v2037 = vadd.f32 %v1056, %v1676
    %v2038 = vadd.f32 %v1058, %v1678
    %v2039 = vadd.f32 %v1295, %v1915
    %v2040 = vadd.f32 %v1062, %v1682
    %v2041 = vadd.f32 %v1064, %v1684
    %v2042 = vadd.f32 %v1300, %v1920
    %v2043 = vadd.f32 %v1068, %v1688
    %v2044 = vadd.f32 %v1070, %v1690
    %v2045 = vadd.f32 %v1305, %v1925
    %v2046 = vadd.f32 %v1074, %v1694
    %v2047 = vadd.f32 %v1076, %v1696
    %v2048 = vadd.f32 %v1310, %v1930
    %v2049 = vadd.f32 %v1080, %v1700
    %v2050 = vadd.f32 %v1082, %v1702
    %v2051 = vadd.f32 %v1315, %v1935
    %v2052 = vadd.f32 %v1086, %v1706
    %v2053 = vadd.f32 %v1088, %v1708
    %v2054 = vadd.f32 %v1320, %v1940
    %v2055 = vadd.f32 %v1092, %v1712
    %v2056 = vadd.f32 %v1094, %v1714
    %v2057 = vadd.f32 %v1325, %v1945
    %v2058 = vadd.f32 %v1098, %v1718
    %v2059 = vadd.f32 %v1100, %v1720
    %v2060 = vadd.f32 %v1330, %v1950
    %v2061 = vadd.f32 %v1104, %v1724
    %v2062 = vadd.f32 %v1106, %v1726
    %v2063 = vadd.f32 %v1335, %v1955
    %v2064 = vadd.f32 %v1110, %v1730
    %v2065 = vadd.f32 %v1112, %v1732
    %v2066 = vadd.f32 %v1340, %v1960
    %v2067 = vadd.f32 %v1116, %v1736
    %v2068 = vadd.f32 %v1118, %v1738
    %v2069 = vadd.f32 %v1345, %v1965
    %v2070 = vadd.f32 %v1122, %v1742
    %v2071 = vadd.f32 %v1124, %v1744
    %v2072 = vadd.f32 %v1350, %v1970
    %v2073 = vadd.f32 %v1128, %v1748
    %v2074 = vadd.f32 %v1130, %v1750
    %v2075 = vadd.f32 %v1355, %v1975
    %v2076 = vadd.f32 %v1134, %v1754
    %v2077 = vadd.f32 %v1136, %v1756
    %v2078 = vadd.f32 %v1360, %v1980
    %s2079 = scalar_lea.vmem [#allocation2], 48
    %v2080 = vld [vmem:[%s2079] sm:$0xff]
    %v2081 = vld [vmem:[%s2079 + $0x8] sm:$0xff]
    %v2082 = vld [vmem:[%s2079 + $0x10] sm:$0xff]
    %v2083 = vld [vmem:[%s2079 + $0x18] sm:$0xff]
    %v2084 = vld [vmem:[%s2079 + $0x20] sm:$0xff]
    %v2085 = vld [vmem:[%s2079 + $0x28] sm:$0xff]
    %v2086 = vld [vmem:[%s2079 + $0x30] sm:$0xff]
    %v2087 = vld [vmem:[%s2079 + $0x38] sm:$0xff]
    %v2088 = vld [vmem:[%s2079 + $0x40] sm:$0xff]
    %v2089 = vld [vmem:[%s2079 + $0x48] sm:$0xff]
    %v2090 = vld [vmem:[%s2079 + $0x50] sm:$0xff]
    %v2091 = vld [vmem:[%s2079 + $0x58] sm:$0xff]
    %v2092 = vld [vmem:[%s2079 + $0x60] sm:$0xff]
    %v2093 = vld [vmem:[%s2079 + $0x68] sm:$0xff]
    %v2094 = vld [vmem:[%s2079 + $0x70] sm:$0xff]
    %v2095 = vld [vmem:[%s2079 + $0x78] sm:$0xff]
    %v2096 = vld [vmem:[%s2079 + $0x80] sm:$0xff]
    %v2097 = vld [vmem:[%s2079 + $0x88] sm:$0xff]
    %v2098 = vld [vmem:[%s2079 + $0x90] sm:$0xff]
    %v2099 = vld [vmem:[%s2079 + $0x98] sm:$0xff]
    %v2100 = vld [vmem:[%s2079 + $0xa0] sm:$0xff]
    %v2101 = vld [vmem:[%s2079 + $0xa8] sm:$0xff]
    %v2102 = vld [vmem:[%s2079 + $0xb0] sm:$0xff]
    %v2103 = vld [vmem:[%s2079 + $0xb8] sm:$0xff]
    %v2104 = vld [vmem:[%s2079 + $0xc0] sm:$0xff]
    %v2105 = vld [vmem:[%s2079 + $0xc8] sm:$0xff]
    %v2106 = vld [vmem:[%s2079 + $0xd0] sm:$0xff]
    %v2107 = vld [vmem:[%s2079 + $0xd8] sm:$0xff]
    %v2108 = vld [vmem:[%s2079 + $0xe0] sm:$0xff]
    %v2109 = vld [vmem:[%s2079 + $0xe8] sm:$0xff]
    %v2110 = vld [vmem:[%s2079 + $0xf0] sm:$0xff]
    %v2111 = vld [vmem:[%s2079 + $0xf8] sm:$0xff]
    %v2113 = vsel %vm187, %v2080, 0
    %v2116 = vsel %vm187, %v2081, 0
    %v2119 = vsel %vm187, %v2082, 0
    %v2122 = vsel %vm187, %v2083, 0
    %v2125 = vsel %vm187, %v2084, 0
    %v2128 = vsel %vm187, %v2085, 0
    %v2131 = vsel %vm187, %v2086, 0
    %v2134 = vsel %vm187, %v2087, 0
    %v2137 = vsel %vm187, %v2088, 0
    %v2140 = vsel %vm187, %v2089, 0
    %v2143 = vsel %vm187, %v2090, 0
    %v2146 = vsel %vm187, %v2091, 0
    %v2149 = vsel %vm187, %v2092, 0
    %v2152 = vsel %vm187, %v2093, 0
    %v2155 = vsel %vm187, %v2094, 0
    %v2158 = vsel %vm187, %v2095, 0
    %v2161 = vsel %vm187, %v2096, 0
    %v2164 = vsel %vm187, %v2097, 0
    %v2167 = vsel %vm187, %v2098, 0
    %v2170 = vsel %vm187, %v2099, 0
    %v2173 = vsel %vm187, %v2100, 0
    %v2176 = vsel %vm187, %v2101, 0
    %v2179 = vsel %vm187, %v2102, 0
    %v2182 = vsel %vm187, %v2103, 0
    %v2185 = vsel %vm187, %v2104, 0
    %v2188 = vsel %vm187, %v2105, 0
    %v2191 = vsel %vm187, %v2106, 0
    %v2194 = vsel %vm187, %v2107, 0
    %v2197 = vsel %vm187, %v2108, 0
    %v2200 = vsel %vm187, %v2109, 0
    %v2203 = vsel %vm187, %v2110, 0
    %v2206 = vsel %vm187, %v2111, 0
    %v2209 = vsel %vm284, %v103, 0
    %v2212 = vsel %vm284, %v104, 0
    %v2215 = vsel %vm284, %v105, 0
    %2217 = vmatprep.subr.mxu0 %v92
    %2218 = vmatpush1.msra.mxu0 %v91
    %2219 = vmatprep.subr.mxu0 %v95
    %2220 = vmatpush1.msra.mxu0 %v94
    %2221 = vmatprep.subr.mxu0 %v98
    %2222 = vmatpush1.msra.mxu0 %v97
    %2223 = vmatprep.subr.mxu0 %v101
    %2224 = vmatpush1.msra.mxu0 %v100
    %2225 = vmatprep.subr.mxu0 %v2212
    %2226 = vmatpush1.msra.mxu0 %v2209
    %2227 = vmatprep.subr.mxu0 0.0
    %2228 = vmatpush1.msra.mxu0 0.0
    %2229 = vmatprep.subr.mxu0 0.0
    %2230 = vmatpush1.msra.mxu0 0.0
    %2231 = vmatprep.subr.mxu0 0.0
    %2232 = vmatpush1.msra.mxu0 0.0
    %2233 = vmatprep.subr.mxu0 0.0
    %2234 = vmatpush1.msra.mxu0 0.0
    %2235 = vmatprep.subr.mxu0 0.0
    %2236 = vmatpush1.msra.mxu0 0.0
    %2237 = vmatprep.subr.mxu0 0.0
    %2238 = vmatpush1.msra.mxu0 0.0
    %2239 = vmatprep.subr.mxu0 0.0
    %2240 = vmatpush1.msra.mxu0 0.0
    %2241 = vmatprep.subr.mxu0 0.0
    %2242 = vmatpush1.msra.mxu0 0.0
    %2243 = vmatprep.subr.mxu0 0.0
    %2244 = vmatpush1.msra.mxu0 0.0
    %2245 = vmatprep.subr.mxu0 0.0
    %2246 = vmatpush1.msra.mxu0 0.0
    %2247 = vmatprep.subr.mxu0 0.0
    %2248 = vmatpush1.msra.mxu0 0.0
    %2249 = vmatprep.subr.mxu0 0.0
    %2250 = vmatpush1.msra.mxu0 0.0
    %2251 = vmatprep.subr.mxu0 0.0
    %2252 = vmatpush1.msra.mxu0 0.0
    %2253 = vmatprep.subr.mxu0 0.0
    %2254 = vmatpush1.msra.mxu0 0.0
    %2255 = vmatprep.subr.mxu0 0.0
    %2256 = vmatpush1.msra.mxu0 0.0
    %2257 = vmatprep.subr.mxu0 0.0
    %2258 = vmatpush1.msra.mxu0 0.0
    %2259 = vmatprep.subr.mxu0 0.0
    %2260 = vmatpush1.msra.mxu0 0.0
    %2261 = vmatprep.subr.mxu0 0.0
    %2262 = vmatpush1.msra.mxu0 0.0
    %2263 = vmatprep.subr.mxu0 0.0
    %2264 = vmatpush1.msra.mxu0 0.0
    %2265 = vmatprep.subr.mxu0 0.0
    %2266 = vmatpush1.msra.mxu0 0.0
    %2267 = vmatprep.subr.mxu0 0.0
    %2268 = vmatpush1.msra.mxu0 0.0
    %2269 = vmatprep.subr.mxu0 0.0
    %2270 = vmatpush1.msra.mxu0 0.0
    %2271 = vmatprep.subr.mxu0 0.0
    %2272 = vmatpush1.msra.mxu0 0.0
    %2273 = vmatprep.subr.mxu0 0.0
    %2274 = vmatpush1.msra.mxu0 0.0
    %2275 = vmatprep.subr.mxu0 0.0
    %2276 = vmatpush1.msra.mxu0 0.0
    %2277 = vmatprep.subr.mxu0 0.0
    %2278 = vmatpush1.msra.mxu0 0.0
    %2279 = vmatprep.subr.mxu0 0.0
    %2280 = vmatpush1.msra.mxu0 0.0
    %2281 = vmatprep.mubr.f32.mxu0 0.0
    %2282 = vmatmul.mubr.f32.gmra.mrb[0].mxu0 %v2113
    %v2283 = vpop.f32.mrb[0].mxu0
    %v2284 = vadd.f32 0.0, %v2283
    %v2285 = vpop.f32.mrb[0].mxu0
    %v2286 = vadd.f32 0.0, %v2285
    %2287 = vmatprep.mubr.f32.mxu0 0.0
    %2288 = vmatmul.mubr.f32.gmra.mrb[0].mxu0 %v2116
    %v2289 = vpop.f32.mrb[0].mxu0
    %v2290 = vadd.f32 0.0, %v2289
    %v2291 = vpop.f32.mrb[0].mxu0
    %v2292 = vadd.f32 0.0, %v2291
    %2293 = vmatprep.mubr.f32.mxu0 0.0
    %2294 = vmatmul.mubr.f32.gmra.mrb[0].mxu0 %v2119
    %v2295 = vpop.f32.mrb[0].mxu0
    %v2296 = vadd.f32 0.0, %v2295
    %v2297 = vpop.f32.mrb[0].mxu0
    %v2298 = vadd.f32 0.0, %v2297
    %2299 = vmatprep.mubr.f32.mxu0 0.0
    %2300 = vmatmul.mubr.f32.gmra.mrb[0].mxu0 %v2122
    %v2301 = vpop.f32.mrb[0].mxu0
    %v2302 = vadd.f32 0.0, %v2301
    %v2303 = vpop.f32.mrb[0].mxu0
    %v2304 = vadd.f32 0.0, %v2303
    %2305 = vmatprep.mubr.f32.mxu0 0.0
    %2306 = vmatmul.mubr.f32.gmra.mrb[0].mxu0 %v2125
    %v2307 = vpop.f32.mrb[0].mxu0
    %v2308 = vadd.f32 0.0, %v2307
    %v2309 = vpop.f32.mrb[0].mxu0
    %v2310 = vadd.f32 0.0, %v2309
    %2311 = vmatprep.mubr.f32.mxu0 0.0
    %2312 = vmatmul.mubr.f32.gmra.mrb[0].mxu0 %v2128
    %v2313 = vpop.f32.mrb[0].mxu0
    %v2314 = vadd.f32 0.0, %v2313
    %v2315 = vpop.f32.mrb[0].mxu0
    %v2316 = vadd.f32 0.0, %v2315
    %2317 = vmatprep.mubr.f32.mxu0 0.0
    %2318 = vmatmul.mubr.f32.gmra.mrb[0].mxu0 %v2131
    %v2319 = vpop.f32.mrb[0].mxu0
    %v2320 = vadd.f32 0.0, %v2319
    %v2321 = vpop.f32.mrb[0].mxu0
    %v2322 = vadd.f32 0.0, %v2321
    %2323 = vmatprep.mubr.f32.mxu0 0.0
    %2324 = vmatmul.mubr.f32.gmra.mrb[0].mxu0 %v2134
    %v2325 = vpop.f32.mrb[0].mxu0
    %v2326 = vadd.f32 0.0, %v2325
    %v2327 = vpop.f32.mrb[0].mxu0
    %v2328 = vadd.f32 0.0, %v2327
    %2329 = vmatprep.mubr.f32.mxu0 0.0
    %2330 = vmatmul.mubr.f32.gmra.mrb[0].mxu0 %v2137
    %v2331 = vpop.f32.mrb[0].mxu0
    %v2332 = vadd.f32 0.0, %v2331
    %v2333 = vpop.f32.mrb[0].mxu0
    %v2334 = vadd.f32 0.0, %v2333
    %2335 = vmatprep.mubr.f32.mxu0 0.0
    %2336 = vmatmul.mubr.f32.gmra.mrb[0].mxu0 %v2140
    %v2337 = vpop.f32.mrb[0].mxu0
    %v2338 = vadd.f32 0.0, %v2337
    %v2339 = vpop.f32.mrb[0].mxu0
    %v2340 = vadd.f32 0.0, %v2339
    %2341 = vmatprep.mubr.f32.mxu0 0.0
    %2342 = vmatmul.mubr.f32.gmra.mrb[0].mxu0 %v2143
    %v2343 = vpop.f32.mrb[0].mxu0
    %v2344 = vadd.f32 0.0, %v2343
    %v2345 = vpop.f32.mrb[0].mxu0
    %v2346 = vadd.f32 0.0, %v2345
    %2347 = vmatprep.mubr.f32.mxu0 0.0
    %2348 = vmatmul.mubr.f32.gmra.mrb[0].mxu0 %v2146
    %v2349 = vpop.f32.mrb[0].mxu0
    %v2350 = vadd.f32 0.0, %v2349
    %v2351 = vpop.f32.mrb[0].mxu0
    %v2352 = vadd.f32 0.0, %v2351
    %2353 = vmatprep.mubr.f32.mxu0 0.0
    %2354 = vmatmul.mubr.f32.gmra.mrb[0].mxu0 %v2149
    %v2355 = vpop.f32.mrb[0].mxu0
    %v2356 = vadd.f32 0.0, %v2355
    %v2357 = vpop.f32.mrb[0].mxu0
    %v2358 = vadd.f32 0.0, %v2357
    %2359 = vmatprep.mubr.f32.mxu0 0.0
    %2360 = vmatmul.mubr.f32.gmra.mrb[0].mxu0 %v2152
    %v2361 = vpop.f32.mrb[0].mxu0
    %v2362 = vadd.f32 0.0, %v2361
    %v2363 = vpop.f32.mrb[0].mxu0
    %v2364 = vadd.f32 0.0, %v2363
    %2365 = vmatprep.mubr.f32.mxu0 0.0
    %2366 = vmatmul.mubr.f32.gmra.mrb[0].mxu0 %v2155
    %v2367 = vpop.f32.mrb[0].mxu0
    %v2368 = vadd.f32 0.0, %v2367
    %v2369 = vpop.f32.mrb[0].mxu0
    %v2370 = vadd.f32 0.0, %v2369
    %2371 = vmatprep.mubr.f32.mxu0 0.0
    %2372 = vmatmul.mubr.f32.gmra.mrb[0].mxu0 %v2158
    %v2373 = vpop.f32.mrb[0].mxu0
    %v2374 = vadd.f32 0.0, %v2373
    %v2375 = vpop.f32.mrb[0].mxu0
    %v2376 = vadd.f32 0.0, %v2375
    %2377 = vmatprep.mubr.f32.mxu0 0.0
    %2378 = vmatmul.mubr.f32.gmra.mrb[0].mxu0 %v2161
    %v2379 = vpop.f32.mrb[0].mxu0
    %v2380 = vadd.f32 0.0, %v2379
    %v2381 = vpop.f32.mrb[0].mxu0
    %v2382 = vadd.f32 0.0, %v2381
    %2383 = vmatprep.mubr.f32.mxu0 0.0
    %2384 = vmatmul.mubr.f32.gmra.mrb[0].mxu0 %v2164
    %v2385 = vpop.f32.mrb[0].mxu0
    %v2386 = vadd.f32 0.0, %v2385
    %v2387 = vpop.f32.mrb[0].mxu0
    %v2388 = vadd.f32 0.0, %v2387
    %2389 = vmatprep.mubr.f32.mxu0 0.0
    %2390 = vmatmul.mubr.f32.gmra.mrb[0].mxu0 %v2167
    %v2391 = vpop.f32.mrb[0].mxu0
    %v2392 = vadd.f32 0.0, %v2391
    %v2393 = vpop.f32.mrb[0].mxu0
    %v2394 = vadd.f32 0.0, %v2393
    %2395 = vmatprep.mubr.f32.mxu0 0.0
    %2396 = vmatmul.mubr.f32.gmra.mrb[0].mxu0 %v2170
    %v2397 = vpop.f32.mrb[0].mxu0
    %v2398 = vadd.f32 0.0, %v2397
    %v2399 = vpop.f32.mrb[0].mxu0
    %v2400 = vadd.f32 0.0, %v2399
    %2401 = vmatprep.mubr.f32.mxu0 0.0
    %2402 = vmatmul.mubr.f32.gmra.mrb[0].mxu0 %v2173
    %v2403 = vpop.f32.mrb[0].mxu0
    %v2404 = vadd.f32 0.0, %v2403
    %v2405 = vpop.f32.mrb[0].mxu0
    %v2406 = vadd.f32 0.0, %v2405
    %2407 = vmatprep.mubr.f32.mxu0 0.0
    %2408 = vmatmul.mubr.f32.gmra.mrb[0].mxu0 %v2176
    %v2409 = vpop.f32.mrb[0].mxu0
    %v2410 = vadd.f32 0.0, %v2409
    %v2411 = vpop.f32.mrb[0].mxu0
    %v2412 = vadd.f32 0.0, %v2411
    %2413 = vmatprep.mubr.f32.mxu0 0.0
    %2414 = vmatmul.mubr.f32.gmra.mrb[0].mxu0 %v2179
    %v2415 = vpop.f32.mrb[0].mxu0
    %v2416 = vadd.f32 0.0, %v2415
    %v2417 = vpop.f32.mrb[0].mxu0
    %v2418 = vadd.f32 0.0, %v2417
    %2419 = vmatprep.mubr.f32.mxu0 0.0
    %2420 = vmatmul.mubr.f32.gmra.mrb[0].mxu0 %v2182
    %v2421 = vpop.f32.mrb[0].mxu0
    %v2422 = vadd.f32 0.0, %v2421
    %v2423 = vpop.f32.mrb[0].mxu0
    %v2424 = vadd.f32 0.0, %v2423
    %2425 = vmatprep.mubr.f32.mxu0 0.0
    %2426 = vmatmul.mubr.f32.gmra.mrb[0].mxu0 %v2185
    %v2427 = vpop.f32.mrb[0].mxu0
    %v2428 = vadd.f32 0.0, %v2427
    %v2429 = vpop.f32.mrb[0].mxu0
    %v2430 = vadd.f32 0.0, %v2429
    %2431 = vmatprep.mubr.f32.mxu0 0.0
    %2432 = vmatmul.mubr.f32.gmra.mrb[0].mxu0 %v2188
    %v2433 = vpop.f32.mrb[0].mxu0
    %v2434 = vadd.f32 0.0, %v2433
    %v2435 = vpop.f32.mrb[0].mxu0
    %v2436 = vadd.f32 0.0, %v2435
    %2437 = vmatprep.mubr.f32.mxu0 0.0
    %2438 = vmatmul.mubr.f32.gmra.mrb[0].mxu0 %v2191
    %v2439 = vpop.f32.mrb[0].mxu0
    %v2440 = vadd.f32 0.0, %v2439
    %v2441 = vpop.f32.mrb[0].mxu0
    %v2442 = vadd.f32 0.0, %v2441
    %2443 = vmatprep.mubr.f32.mxu0 0.0
    %2444 = vmatmul.mubr.f32.gmra.mrb[0].mxu0 %v2194
    %v2445 = vpop.f32.mrb[0].mxu0
    %v2446 = vadd.f32 0.0, %v2445
    %v2447 = vpop.f32.mrb[0].mxu0
    %v2448 = vadd.f32 0.0, %v2447
    %2449 = vmatprep.mubr.f32.mxu0 0.0
    %2450 = vmatmul.mubr.f32.gmra.mrb[0].mxu0 %v2197
    %v2451 = vpop.f32.mrb[0].mxu0
    %v2452 = vadd.f32 0.0, %v2451
    %v2453 = vpop.f32.mrb[0].mxu0
    %v2454 = vadd.f32 0.0, %v2453
    %2455 = vmatprep.mubr.f32.mxu0 0.0
    %2456 = vmatmul.mubr.f32.gmra.mrb[0].mxu0 %v2200
    %v2457 = vpop.f32.mrb[0].mxu0
    %v2458 = vadd.f32 0.0, %v2457
    %v2459 = vpop.f32.mrb[0].mxu0
    %v2460 = vadd.f32 0.0, %v2459
    %2461 = vmatprep.mubr.f32.mxu0 0.0
    %2462 = vmatmul.mubr.f32.gmra.mrb[0].mxu0 %v2203
    %v2463 = vpop.f32.mrb[0].mxu0
    %v2464 = vadd.f32 0.0, %v2463
    %v2465 = vpop.f32.mrb[0].mxu0
    %v2466 = vadd.f32 0.0, %v2465
    %2467 = vmatprep.mubr.f32.mxu0 0.0
    %2468 = vmatmul.mubr.f32.gmra.mrb[0].mxu0 %v2206
    %v2469 = vpop.f32.mrb[0].mxu0
    %v2470 = vadd.f32 0.0, %v2469
    %v2471 = vpop.f32.mrb[0].mxu0
    %v2472 = vadd.f32 0.0, %v2471
    %2473 = vdwg.mxu0
    %2474 = vmatprep.subr.mxu0 0.0
    %2475 = vmatpush1.msra.mxu0 %v93
    %2476 = vmatprep.subr.mxu0 0.0
    %2477 = vmatpush1.msra.mxu0 %v96
    %2478 = vmatprep.subr.mxu0 0.0
    %2479 = vmatpush1.msra.mxu0 %v99
    %2480 = vmatprep.subr.mxu0 0.0
    %2481 = vmatpush1.msra.mxu0 %v102
    %2482 = vmatprep.subr.mxu0 0.0
    %2483 = vmatpush1.msra.mxu0 %v2215
    %2484 = vmatprep.subr.mxu0 0.0
    %2485 = vmatpush1.msra.mxu0 0.0
    %2486 = vmatprep.subr.mxu0 0.0
    %2487 = vmatpush1.msra.mxu0 0.0
    %2488 = vmatprep.subr.mxu0 0.0
    %2489 = vmatpush1.msra.mxu0 0.0
    %2490 = vmatprep.subr.mxu0 0.0
    %2491 = vmatpush1.msra.mxu0 0.0
    %2492 = vmatprep.subr.mxu0 0.0
    %2493 = vmatpush1.msra.mxu0 0.0
    %2494 = vmatprep.subr.mxu0 0.0
    %2495 = vmatpush1.msra.mxu0 0.0
    %2496 = vmatprep.subr.mxu0 0.0
    %2497 = vmatpush1.msra.mxu0 0.0
    %2498 = vmatprep.subr.mxu0 0.0
    %2499 = vmatpush1.msra.mxu0 0.0
    %2500 = vmatprep.subr.mxu0 0.0
    %2501 = vmatpush1.msra.mxu0 0.0
    %2502 = vmatprep.subr.mxu0 0.0
    %2503 = vmatpush1.msra.mxu0 0.0
    %2504 = vmatprep.subr.mxu0 0.0
    %2505 = vmatpush1.msra.mxu0 0.0
    %2506 = vmatprep.subr.mxu0 0.0
    %2507 = vmatpush1.msra.mxu0 0.0
    %2508 = vmatprep.subr.mxu0 0.0
    %2509 = vmatpush1.msra.mxu0 0.0
    %2510 = vmatprep.subr.mxu0 0.0
    %2511 = vmatpush1.msra.mxu0 0.0
    %2512 = vmatprep.subr.mxu0 0.0
    %2513 = vmatpush1.msra.mxu0 0.0
    %2514 = vmatprep.subr.mxu0 0.0
    %2515 = vmatpush1.msra.mxu0 0.0
    %2516 = vmatprep.subr.mxu0 0.0
    %2517 = vmatpush1.msra.mxu0 0.0
    %2518 = vmatprep.subr.mxu0 0.0
    %2519 = vmatpush1.msra.mxu0 0.0
    %2520 = vmatprep.subr.mxu0 0.0
    %2521 = vmatpush1.msra.mxu0 0.0
    %2522 = vmatprep.subr.mxu0 0.0
    %2523 = vmatpush1.msra.mxu0 0.0
    %2524 = vmatprep.subr.mxu0 0.0
    %2525 = vmatpush1.msra.mxu0 0.0
    %2526 = vmatprep.subr.mxu0 0.0
    %2527 = vmatpush1.msra.mxu0 0.0
    %2528 = vmatprep.subr.mxu0 0.0
    %2529 = vmatpush1.msra.mxu0 0.0
    %2530 = vmatprep.subr.mxu0 0.0
    %2531 = vmatpush1.msra.mxu0 0.0
    %2532 = vmatprep.subr.mxu0 0.0
    %2533 = vmatpush1.msra.mxu0 0.0
    %2534 = vmatprep.subr.mxu0 0.0
    %2535 = vmatpush1.msra.mxu0 0.0
    %2536 = vmatprep.subr.mxu0 0.0
    %2537 = vmatpush1.msra.mxu0 0.0
    %2538 = vmatprep.mubr.f32.mxu0 0.0
    %2539 = vmatmul.mubr.f32.gmra.mrb[0].mxu0 %v2113
    %v2540 = vpop.f32.mrb[0].mxu0
    %v2541 = vadd.f32 0.0, %v2540
    %v2542 = vpop.f32.mrb[0].mxu0
    %2543 = vmatprep.mubr.f32.mxu0 0.0
    %2544 = vmatmul.mubr.f32.gmra.mrb[0].mxu0 %v2116
    %v2545 = vpop.f32.mrb[0].mxu0
    %v2546 = vadd.f32 0.0, %v2545
    %v2547 = vpop.f32.mrb[0].mxu0
    %2548 = vmatprep.mubr.f32.mxu0 0.0
    %2549 = vmatmul.mubr.f32.gmra.mrb[0].mxu0 %v2119
    %v2550 = vpop.f32.mrb[0].mxu0
    %v2551 = vadd.f32 0.0, %v2550
    %v2552 = vpop.f32.mrb[0].mxu0
    %2553 = vmatprep.mubr.f32.mxu0 0.0
    %2554 = vmatmul.mubr.f32.gmra.mrb[0].mxu0 %v2122
    %v2555 = vpop.f32.mrb[0].mxu0
    %v2556 = vadd.f32 0.0, %v2555
    %v2557 = vpop.f32.mrb[0].mxu0
    %2558 = vmatprep.mubr.f32.mxu0 0.0
    %2559 = vmatmul.mubr.f32.gmra.mrb[0].mxu0 %v2125
    %v2560 = vpop.f32.mrb[0].mxu0
    %v2561 = vadd.f32 0.0, %v2560
    %v2562 = vpop.f32.mrb[0].mxu0
    %2563 = vmatprep.mubr.f32.mxu0 0.0
    %2564 = vmatmul.mubr.f32.gmra.mrb[0].mxu0 %v2128
    %v2565 = vpop.f32.mrb[0].mxu0
    %v2566 = vadd.f32 0.0, %v2565
    %v2567 = vpop.f32.mrb[0].mxu0
    %2568 = vmatprep.mubr.f32.mxu0 0.0
    %2569 = vmatmul.mubr.f32.gmra.mrb[0].mxu0 %v2131
    %v2570 = vpop.f32.mrb[0].mxu0
    %v2571 = vadd.f32 0.0, %v2570
    %v2572 = vpop.f32.mrb[0].mxu0
    %2573 = vmatprep.mubr.f32.mxu0 0.0
    %2574 = vmatmul.mubr.f32.gmra.mrb[0].mxu0 %v2134
    %v2575 = vpop.f32.mrb[0].mxu0
    %v2576 = vadd.f32 0.0, %v2575
    %v2577 = vpop.f32.mrb[0].mxu0
    %2578 = vmatprep.mubr.f32.mxu0 0.0
    %2579 = vmatmul.mubr.f32.gmra.mrb[0].mxu0 %v2137
    %v2580 = vpop.f32.mrb[0].mxu0
    %v2581 = vadd.f32 0.0, %v2580
    %v2582 = vpop.f32.mrb[0].mxu0
    %2583 = vmatprep.mubr.f32.mxu0 0.0
    %2584 = vmatmul.mubr.f32.gmra.mrb[0].mxu0 %v2140
    %v2585 = vpop.f32.mrb[0].mxu0
    %v2586 = vadd.f32 0.0, %v2585
    %v2587 = vpop.f32.mrb[0].mxu0
    %2588 = vmatprep.mubr.f32.mxu0 0.0
    %2589 = vmatmul.mubr.f32.gmra.mrb[0].mxu0 %v2143
    %v2590 = vpop.f32.mrb[0].mxu0
    %v2591 = vadd.f32 0.0, %v2590
    %v2592 = vpop.f32.mrb[0].mxu0
    %2593 = vmatprep.mubr.f32.mxu0 0.0
    %2594 = vmatmul.mubr.f32.gmra.mrb[0].mxu0 %v2146
    %v2595 = vpop.f32.mrb[0].mxu0
    %v2596 = vadd.f32 0.0, %v2595
    %v2597 = vpop.f32.mrb[0].mxu0
    %2598 = vmatprep.mubr.f32.mxu0 0.0
    %2599 = vmatmul.mubr.f32.gmra.mrb[0].mxu0 %v2149
    %v2600 = vpop.f32.mrb[0].mxu0
    %v2601 = vadd.f32 0.0, %v2600
    %v2602 = vpop.f32.mrb[0].mxu0
    %2603 = vmatprep.mubr.f32.mxu0 0.0
    %2604 = vmatmul.mubr.f32.gmra.mrb[0].mxu0 %v2152
    %v2605 = vpop.f32.mrb[0].mxu0
    %v2606 = vadd.f32 0.0, %v2605
    %v2607 = vpop.f32.mrb[0].mxu0
    %2608 = vmatprep.mubr.f32.mxu0 0.0
    %2609 = vmatmul.mubr.f32.gmra.mrb[0].mxu0 %v2155
    %v2610 = vpop.f32.mrb[0].mxu0
    %v2611 = vadd.f32 0.0, %v2610
    %v2612 = vpop.f32.mrb[0].mxu0
    %2613 = vmatprep.mubr.f32.mxu0 0.0
    %2614 = vmatmul.mubr.f32.gmra.mrb[0].mxu0 %v2158
    %v2615 = vpop.f32.mrb[0].mxu0
    %v2616 = vadd.f32 0.0, %v2615
    %v2617 = vpop.f32.mrb[0].mxu0
    %2618 = vmatprep.mubr.f32.mxu0 0.0
    %2619 = vmatmul.mubr.f32.gmra.mrb[0].mxu0 %v2161
    %v2620 = vpop.f32.mrb[0].mxu0
    %v2621 = vadd.f32 0.0, %v2620
    %v2622 = vpop.f32.mrb[0].mxu0
    %2623 = vmatprep.mubr.f32.mxu0 0.0
    %2624 = vmatmul.mubr.f32.gmra.mrb[0].mxu0 %v2164
    %v2625 = vpop.f32.mrb[0].mxu0
    %v2626 = vadd.f32 0.0, %v2625
    %v2627 = vpop.f32.mrb[0].mxu0
    %2628 = vmatprep.mubr.f32.mxu0 0.0
    %2629 = vmatmul.mubr.f32.gmra.mrb[0].mxu0 %v2167
    %v2630 = vpop.f32.mrb[0].mxu0
    %v2631 = vadd.f32 0.0, %v2630
    %v2632 = vpop.f32.mrb[0].mxu0
    %2633 = vmatprep.mubr.f32.mxu0 0.0
    %2634 = vmatmul.mubr.f32.gmra.mrb[0].mxu0 %v2170
    %v2635 = vpop.f32.mrb[0].mxu0
    %v2636 = vadd.f32 0.0, %v2635
    %v2637 = vpop.f32.mrb[0].mxu0
    %2638 = vmatprep.mubr.f32.mxu0 0.0
    %2639 = vmatmul.mubr.f32.gmra.mrb[0].mxu0 %v2173
    %v2640 = vpop.f32.mrb[0].mxu0
    %v2641 = vadd.f32 0.0, %v2640
    %v2642 = vpop.f32.mrb[0].mxu0
    %2643 = vmatprep.mubr.f32.mxu0 0.0
    %2644 = vmatmul.mubr.f32.gmra.mrb[0].mxu0 %v2176
    %v2645 = vpop.f32.mrb[0].mxu0
    %v2646 = vadd.f32 0.0, %v2645
    %v2647 = vpop.f32.mrb[0].mxu0
    %2648 = vmatprep.mubr.f32.mxu0 0.0
    %2649 = vmatmul.mubr.f32.gmra.mrb[0].mxu0 %v2179
    %v2650 = vpop.f32.mrb[0].mxu0
    %v2651 = vadd.f32 0.0, %v2650
    %v2652 = vpop.f32.mrb[0].mxu0
    %2653 = vmatprep.mubr.f32.mxu0 0.0
    %2654 = vmatmul.mubr.f32.gmra.mrb[0].mxu0 %v2182
    %v2655 = vpop.f32.mrb[0].mxu0
    %v2656 = vadd.f32 0.0, %v2655
    %v2657 = vpop.f32.mrb[0].mxu0
    %2658 = vmatprep.mubr.f32.mxu0 0.0
    %2659 = vmatmul.mubr.f32.gmra.mrb[0].mxu0 %v2185
    %v2660 = vpop.f32.mrb[0].mxu0
    %v2661 = vadd.f32 0.0, %v2660
    %v2662 = vpop.f32.mrb[0].mxu0
    %2663 = vmatprep.mubr.f32.mxu0 0.0
    %2664 = vmatmul.mubr.f32.gmra.mrb[0].mxu0 %v2188
    %v2665 = vpop.f32.mrb[0].mxu0
    %v2666 = vadd.f32 0.0, %v2665
    %v2667 = vpop.f32.mrb[0].mxu0
    %2668 = vmatprep.mubr.f32.mxu0 0.0
    %2669 = vmatmul.mubr.f32.gmra.mrb[0].mxu0 %v2191
    %v2670 = vpop.f32.mrb[0].mxu0
    %v2671 = vadd.f32 0.0, %v2670
    %v2672 = vpop.f32.mrb[0].mxu0
    %2673 = vmatprep.mubr.f32.mxu0 0.0
    %2674 = vmatmul.mubr.f32.gmra.mrb[0].mxu0 %v2194
    %v2675 = vpop.f32.mrb[0].mxu0
    %v2676 = vadd.f32 0.0, %v2675
    %v2677 = vpop.f32.mrb[0].mxu0
    %2678 = vmatprep.mubr.f32.mxu0 0.0
    %2679 = vmatmul.mubr.f32.gmra.mrb[0].mxu0 %v2197
    %v2680 = vpop.f32.mrb[0].mxu0
    %v2681 = vadd.f32 0.0, %v2680
    %v2682 = vpop.f32.mrb[0].mxu0
    %2683 = vmatprep.mubr.f32.mxu0 0.0
    %2684 = vmatmul.mubr.f32.gmra.mrb[0].mxu0 %v2200
    %v2685 = vpop.f32.mrb[0].mxu0
    %v2686 = vadd.f32 0.0, %v2685
    %v2687 = vpop.f32.mrb[0].mxu0
    %2688 = vmatprep.mubr.f32.mxu0 0.0
    %2689 = vmatmul.mubr.f32.gmra.mrb[0].mxu0 %v2203
    %v2690 = vpop.f32.mrb[0].mxu0
    %v2691 = vadd.f32 0.0, %v2690
    %v2692 = vpop.f32.mrb[0].mxu0
    %2693 = vmatprep.mubr.f32.mxu0 0.0
    %2694 = vmatmul.mubr.f32.gmra.mrb[0].mxu0 %v2206
    %v2695 = vpop.f32.mrb[0].mxu0
    %v2696 = vadd.f32 0.0, %v2695
    %v2697 = vpop.f32.mrb[0].mxu0
    %2698 = vdwg.mxu0
    %v2699 = vadd.f32 %v1983, %v2284
    %v2700 = vadd.f32 %v1984, %v2286
    %v2701 = vadd.f32 %v1985, %v2541
    %v2702 = vadd.f32 %v1986, %v2290
    %v2703 = vadd.f32 %v1987, %v2292
    %v2704 = vadd.f32 %v1988, %v2546
    %v2705 = vadd.f32 %v1989, %v2296
    %v2706 = vadd.f32 %v1990, %v2298
    %v2707 = vadd.f32 %v1991, %v2551
    %v2708 = vadd.f32 %v1992, %v2302
    %v2709 = vadd.f32 %v1993, %v2304
    %v2710 = vadd.f32 %v1994, %v2556
    %v2711 = vadd.f32 %v1995, %v2308
    %v2712 = vadd.f32 %v1996, %v2310
    %v2713 = vadd.f32 %v1997, %v2561
    %v2714 = vadd.f32 %v1998, %v2314
    %v2715 = vadd.f32 %v1999, %v2316
    %v2716 = vadd.f32 %v2000, %v2566
    %v2717 = vadd.f32 %v2001, %v2320
    %v2718 = vadd.f32 %v2002, %v2322
    %v2719 = vadd.f32 %v2003, %v2571
    %v2720 = vadd.f32 %v2004, %v2326
    %v2721 = vadd.f32 %v2005, %v2328
    %v2722 = vadd.f32 %v2006, %v2576
    %v2723 = vadd.f32 %v2007, %v2332
    %v2724 = vadd.f32 %v2008, %v2334
    %v2725 = vadd.f32 %v2009, %v2581
    %v2726 = vadd.f32 %v2010, %v2338
    %v2727 = vadd.f32 %v2011, %v2340
    %v2728 = vadd.f32 %v2012, %v2586
    %v2729 = vadd.f32 %v2013, %v2344
    %v2730 = vadd.f32 %v2014, %v2346
    %v2731 = vadd.f32 %v2015, %v2591
    %v2732 = vadd.f32 %v2016, %v2350
    %v2733 = vadd.f32 %v2017, %v2352
    %v2734 = vadd.f32 %v2018, %v2596
    %v2735 = vadd.f32 %v2019, %v2356
    %v2736 = vadd.f32 %v2020, %v2358
    %v2737 = vadd.f32 %v2021, %v2601
    %v2738 = vadd.f32 %v2022, %v2362
    %v2739 = vadd.f32 %v2023, %v2364
    %v2740 = vadd.f32 %v2024, %v2606
    %v2741 = vadd.f32 %v2025, %v2368
    %v2742 = vadd.f32 %v2026, %v2370
    %v2743 = vadd.f32 %v2027, %v2611
    %v2744 = vadd.f32 %v2028, %v2374
    %v2745 = vadd.f32 %v2029, %v2376
    %v2746 = vadd.f32 %v2030, %v2616
    %v2747 = vadd.f32 %v2031, %v2380
    %v2748 = vadd.f32 %v2032, %v2382
    %v2749 = vadd.f32 %v2033, %v2621
    %v2750 = vadd.f32 %v2034, %v2386
    %v2751 = vadd.f32 %v2035, %v2388
    %v2752 = vadd.f32 %v2036, %v2626
    %v2753 = vadd.f32 %v2037, %v2392
    %v2754 = vadd.f32 %v2038, %v2394
    %v2755 = vadd.f32 %v2039, %v2631
    %v2756 = vadd.f32 %v2040, %v2398
    %v2757 = vadd.f32 %v2041, %v2400
    %v2758 = vadd.f32 %v2042, %v2636
    %v2759 = vadd.f32 %v2043, %v2404
    %v2760 = vadd.f32 %v2044, %v2406
    %v2761 = vadd.f32 %v2045, %v2641
    %v2762 = vadd.f32 %v2046, %v2410
    %v2763 = vadd.f32 %v2047, %v2412
    %v2764 = vadd.f32 %v2048, %v2646
    %v2765 = vadd.f32 %v2049, %v2416
    %v2766 = vadd.f32 %v2050, %v2418
    %v2767 = vadd.f32 %v2051, %v2651
    %v2768 = vadd.f32 %v2052, %v2422
    %v2769 = vadd.f32 %v2053, %v2424
    %v2770 = vadd.f32 %v2054, %v2656
    %v2771 = vadd.f32 %v2055, %v2428
    %v2772 = vadd.f32 %v2056, %v2430
    %v2773 = vadd.f32 %v2057, %v2661
    %v2774 = vadd.f32 %v2058, %v2434
    %v2775 = vadd.f32 %v2059, %v2436
    %v2776 = vadd.f32 %v2060, %v2666
    %v2777 = vadd.f32 %v2061, %v2440
    %v2778 = vadd.f32 %v2062, %v2442
    %v2779 = vadd.f32 %v2063, %v2671
    %v2780 = vadd.f32 %v2064, %v2446
    %v2781 = vadd.f32 %v2065, %v2448
    %v2782 = vadd.f32 %v2066, %v2676
    %v2783 = vadd.f32 %v2067, %v2452
    %v2784 = vadd.f32 %v2068, %v2454
    %v2785 = vadd.f32 %v2069, %v2681
    %v2786 = vadd.f32 %v2070, %v2458
    %v2787 = vadd.f32 %v2071, %v2460
    %v2788 = vadd.f32 %v2072, %v2686
    %v2789 = vadd.f32 %v2073, %v2464
    %v2790 = vadd.f32 %v2074, %v2466
    %v2791 = vadd.f32 %v2075, %v2691
    %v2792 = vadd.f32 %v2076, %v2470
    %v2793 = vadd.f32 %v2077, %v2472
    %v2794 = vadd.f32 %v2078, %v2696
    %s2795 = scalar_lea.vmem [#allocation2], 64
    %v2796 = vld [vmem:[%s2795] sm:$0xff]
    %v2797 = vld [vmem:[%s2795 + $0x8] sm:$0xff]
    %v2798 = vld [vmem:[%s2795 + $0x10] sm:$0xff]
    %v2799 = vld [vmem:[%s2795 + $0x18] sm:$0xff]
    %v2800 = vld [vmem:[%s2795 + $0x20] sm:$0xff]
    %v2801 = vld [vmem:[%s2795 + $0x28] sm:$0xff]
    %v2802 = vld [vmem:[%s2795 + $0x30] sm:$0xff]
    %v2803 = vld [vmem:[%s2795 + $0x38] sm:$0xff]
    %v2804 = vld [vmem:[%s2795 + $0x40] sm:$0xff]
    %v2805 = vld [vmem:[%s2795 + $0x48] sm:$0xff]
    %v2806 = vld [vmem:[%s2795 + $0x50] sm:$0xff]
    %v2807 = vld [vmem:[%s2795 + $0x58] sm:$0xff]
    %v2808 = vld [vmem:[%s2795 + $0x60] sm:$0xff]
    %v2809 = vld [vmem:[%s2795 + $0x68] sm:$0xff]
    %v2810 = vld [vmem:[%s2795 + $0x70] sm:$0xff]
    %v2811 = vld [vmem:[%s2795 + $0x78] sm:$0xff]
    %v2812 = vld [vmem:[%s2795 + $0x80] sm:$0xff]
    %v2813 = vld [vmem:[%s2795 + $0x88] sm:$0xff]
    %v2814 = vld [vmem:[%s2795 + $0x90] sm:$0xff]
    %v2815 = vld [vmem:[%s2795 + $0x98] sm:$0xff]
    %v2816 = vld [vmem:[%s2795 + $0xa0] sm:$0xff]
    %v2817 = vld [vmem:[%s2795 + $0xa8] sm:$0xff]
    %v2818 = vld [vmem:[%s2795 + $0xb0] sm:$0xff]
    %v2819 = vld [vmem:[%s2795 + $0xb8] sm:$0xff]
    %v2820 = vld [vmem:[%s2795 + $0xc0] sm:$0xff]
    %v2821 = vld [vmem:[%s2795 + $0xc8] sm:$0xff]
    %v2822 = vld [vmem:[%s2795 + $0xd0] sm:$0xff]
    %v2823 = vld [vmem:[%s2795 + $0xd8] sm:$0xff]
    %v2824 = vld [vmem:[%s2795 + $0xe0] sm:$0xff]
    %v2825 = vld [vmem:[%s2795 + $0xe8] sm:$0xff]
    %v2826 = vld [vmem:[%s2795 + $0xf0] sm:$0xff]
    %v2827 = vld [vmem:[%s2795 + $0xf8] sm:$0xff]
    %v2829 = vsel %vm187, %v2796, 0
    %v2832 = vsel %vm187, %v2797, 0
    %v2835 = vsel %vm187, %v2798, 0
    %v2838 = vsel %vm187, %v2799, 0
    %v2841 = vsel %vm187, %v2800, 0
    %v2844 = vsel %vm187, %v2801, 0
    %v2847 = vsel %vm187, %v2802, 0
    %v2850 = vsel %vm187, %v2803, 0
    %v2853 = vsel %vm187, %v2804, 0
    %v2856 = vsel %vm187, %v2805, 0
    %v2859 = vsel %vm187, %v2806, 0
    %v2862 = vsel %vm187, %v2807, 0
    %v2865 = vsel %vm187, %v2808, 0
    %v2868 = vsel %vm187, %v2809, 0
    %v2871 = vsel %vm187, %v2810, 0
    %v2874 = vsel %vm187, %v2811, 0
    %v2877 = vsel %vm187, %v2812, 0
    %v2880 = vsel %vm187, %v2813, 0
    %v2883 = vsel %vm187, %v2814, 0
    %v2886 = vsel %vm187, %v2815, 0
    %v2889 = vsel %vm187, %v2816, 0
    %v2892 = vsel %vm187, %v2817, 0
    %v2895 = vsel %vm187, %v2818, 0
    %v2898 = vsel %vm187, %v2819, 0
    %v2901 = vsel %vm187, %v2820, 0
    %v2904 = vsel %vm187, %v2821, 0
    %v2907 = vsel %vm187, %v2822, 0
    %v2910 = vsel %vm187, %v2823, 0
    %v2913 = vsel %vm187, %v2824, 0
    %v2916 = vsel %vm187, %v2825, 0
    %v2919 = vsel %vm187, %v2826, 0
    %v2922 = vsel %vm187, %v2827, 0
    %v2925 = vsel %vm284, %v119, 0
    %v2928 = vsel %vm284, %v120, 0
    %v2931 = vsel %vm284, %v121, 0
    %2933 = vmatprep.subr.mxu0 %v108
    %2934 = vmatpush1.msra.mxu0 %v107
    %2935 = vmatprep.subr.mxu0 %v111
    %2936 = vmatpush1.msra.mxu0 %v110
    %2937 = vmatprep.subr.mxu0 %v114
    %2938 = vmatpush1.msra.mxu0 %v113
    %2939 = vmatprep.subr.mxu0 %v117
    %2940 = vmatpush1.msra.mxu0 %v116
    %2941 = vmatprep.subr.mxu0 %v2928
    %2942 = vmatpush1.msra.mxu0 %v2925
    %2943 = vmatprep.subr.mxu0 0.0
    %2944 = vmatpush1.msra.mxu0 0.0
    %2945 = vmatprep.subr.mxu0 0.0
    %2946 = vmatpush1.msra.mxu0 0.0
    %2947 = vmatprep.subr.mxu0 0.0
    %2948 = vmatpush1.msra.mxu0 0.0
    %2949 = vmatprep.subr.mxu0 0.0
    %2950 = vmatpush1.msra.mxu0 0.0
    %2951 = vmatprep.subr.mxu0 0.0
    %2952 = vmatpush1.msra.mxu0 0.0
    %2953 = vmatprep.subr.mxu0 0.0
    %2954 = vmatpush1.msra.mxu0 0.0
    %2955 = vmatprep.subr.mxu0 0.0
    %2956 = vmatpush1.msra.mxu0 0.0
    %2957 = vmatprep.subr.mxu0 0.0
    %2958 = vmatpush1.msra.mxu0 0.0
    %2959 = vmatprep.subr.mxu0 0.0
    %2960 = vmatpush1.msra.mxu0 0.0
    %2961 = vmatprep.subr.mxu0 0.0
    %2962 = vmatpush1.msra.mxu0 0.0
    %2963 = vmatprep.subr.mxu0 0.0
    %2964 = vmatpush1.msra.mxu0 0.0
    %2965 = vmatprep.subr.mxu0 0.0
    %2966 = vmatpush1.msra.mxu0 0.0
    %2967 = vmatprep.subr.mxu0 0.0
    %2968 = vmatpush1.msra.mxu0 0.0
    %2969 = vmatprep.subr.mxu0 0.0
    %2970 = vmatpush1.msra.mxu0 0.0
    %2971 = vmatprep.subr.mxu0 0.0
    %2972 = vmatpush1.msra.mxu0 0.0
    %2973 = vmatprep.subr.mxu0 0.0
    %2974 = vmatpush1.msra.mxu0 0.0
    %2975 = vmatprep.subr.mxu0 0.0
    %2976 = vmatpush1.msra.mxu0 0.0
    %2977 = vmatprep.subr.mxu0 0.0
    %2978 = vmatpush1.msra.mxu0 0.0
    %2979 = vmatprep.subr.mxu0 0.0
    %2980 = vmatpush1.msra.mxu0 0.0
    %2981 = vmatprep.subr.mxu0 0.0
    %2982 = vmatpush1.msra.mxu0 0.0
    %2983 = vmatprep.subr.mxu0 0.0
    %2984 = vmatpush1.msra.mxu0 0.0
    %2985 = vmatprep.subr.mxu0 0.0
    %2986 = vmatpush1.msra.mxu0 0.0
    %2987 = vmatprep.subr.mxu0 0.0
    %2988 = vmatpush1.msra.mxu0 0.0
    %2989 = vmatprep.subr.mxu0 0.0
    %2990 = vmatpush1.msra.mxu0 0.0
    %2991 = vmatprep.subr.mxu0 0.0
    %2992 = vmatpush1.msra.mxu0 0.0
    %2993 = vmatprep.subr.mxu0 0.0
    %2994 = vmatpush1.msra.mxu0 0.0
    %2995 = vmatprep.subr.mxu0 0.0
    %2996 = vmatpush1.msra.mxu0 0.0
    %2997 = vmatprep.mubr.f32.mxu0 0.0
    %2998 = vmatmul.mubr.f32.gmra.mrb[0].mxu0 %v2829
    %v2999 = vpop.f32.mrb[0].mxu0
    %v3000 = vadd.f32 0.0, %v2999
    %v3001 = vpop.f32.mrb[0].mxu0
    %v3002 = vadd.f32 0.0, %v3001
    %3003 = vmatprep.mubr.f32.mxu0 0.0
    %3004 = vmatmul.mubr.f32.gmra.mrb[0].mxu0 %v2832
    %v3005 = vpop.f32.mrb[0].mxu0
    %v3006 = vadd.f32 0.0, %v3005
    %v3007 = vpop.f32.mrb[0].mxu0
    %v3008 = vadd.f32 0.0, %v3007
    %3009 = vmatprep.mubr.f32.mxu0 0.0
    %3010 = vmatmul.mubr.f32.gmra.mrb[0].mxu0 %v2835
    %v3011 = vpop.f32.mrb[0].mxu0
    %v3012 = vadd.f32 0.0, %v3011
    %v3013 = vpop.f32.mrb[0].mxu0
    %v3014 = vadd.f32 0.0, %v3013
    %3015 = vmatprep.mubr.f32.mxu0 0.0
    %3016 = vmatmul.mubr.f32.gmra.mrb[0].mxu0 %v2838
    %v3017 = vpop.f32.mrb[0].mxu0
    %v3018 = vadd.f32 0.0, %v3017
    %v3019 = vpop.f32.mrb[0].mxu0
    %v3020 = vadd.f32 0.0, %v3019
    %3021 = vmatprep.mubr.f32.mxu0 0.0
    %3022 = vmatmul.mubr.f32.gmra.mrb[0].mxu0 %v2841
    %v3023 = vpop.f32.mrb[0].mxu0
    %v3024 = vadd.f32 0.0, %v3023
    %v3025 = vpop.f32.mrb[0].mxu0
    %v3026 = vadd.f32 0.0, %v3025
    %3027 = vmatprep.mubr.f32.mxu0 0.0
    %3028 = vmatmul.mubr.f32.gmra.mrb[0].mxu0 %v2844
    %v3029 = vpop.f32.mrb[0].mxu0
    %v3030 = vadd.f32 0.0, %v3029
    %v3031 = vpop.f32.mrb[0].mxu0
    %v3032 = vadd.f32 0.0, %v3031
    %3033 = vmatprep.mubr.f32.mxu0 0.0
    %3034 = vmatmul.mubr.f32.gmra.mrb[0].mxu0 %v2847
    %v3035 = vpop.f32.mrb[0].mxu0
    %v3036 = vadd.f32 0.0, %v3035
    %v3037 = vpop.f32.mrb[0].mxu0
    %v3038 = vadd.f32 0.0, %v3037
    %3039 = vmatprep.mubr.f32.mxu0 0.0
    %3040 = vmatmul.mubr.f32.gmra.mrb[0].mxu0 %v2850
    %v3041 = vpop.f32.mrb[0].mxu0
    %v3042 = vadd.f32 0.0, %v3041
    %v3043 = vpop.f32.mrb[0].mxu0
    %v3044 = vadd.f32 0.0, %v3043
    %3045 = vmatprep.mubr.f32.mxu0 0.0
    %3046 = vmatmul.mubr.f32.gmra.mrb[0].mxu0 %v2853
    %v3047 = vpop.f32.mrb[0].mxu0
    %v3048 = vadd.f32 0.0, %v3047
    %v3049 = vpop.f32.mrb[0].mxu0
    %v3050 = vadd.f32 0.0, %v3049
    %3051 = vmatprep.mubr.f32.mxu0 0.0
    %3052 = vmatmul.mubr.f32.gmra.mrb[0].mxu0 %v2856
    %v3053 = vpop.f32.mrb[0].mxu0
    %v3054 = vadd.f32 0.0, %v3053
    %v3055 = vpop.f32.mrb[0].mxu0
    %v3056 = vadd.f32 0.0, %v3055
    %3057 = vmatprep.mubr.f32.mxu0 0.0
    %3058 = vmatmul.mubr.f32.gmra.mrb[0].mxu0 %v2859
    %v3059 = vpop.f32.mrb[0].mxu0
    %v3060 = vadd.f32 0.0, %v3059
    %v3061 = vpop.f32.mrb[0].mxu0
    %v3062 = vadd.f32 0.0, %v3061
    %3063 = vmatprep.mubr.f32.mxu0 0.0
    %3064 = vmatmul.mubr.f32.gmra.mrb[0].mxu0 %v2862
    %v3065 = vpop.f32.mrb[0].mxu0
    %v3066 = vadd.f32 0.0, %v3065
    %v3067 = vpop.f32.mrb[0].mxu0
    %v3068 = vadd.f32 0.0, %v3067
    %3069 = vmatprep.mubr.f32.mxu0 0.0
    %3070 = vmatmul.mubr.f32.gmra.mrb[0].mxu0 %v2865
    %v3071 = vpop.f32.mrb[0].mxu0
    %v3072 = vadd.f32 0.0, %v3071
    %v3073 = vpop.f32.mrb[0].mxu0
    %v3074 = vadd.f32 0.0, %v3073
    %3075 = vmatprep.mubr.f32.mxu0 0.0
    %3076 = vmatmul.mubr.f32.gmra.mrb[0].mxu0 %v2868
    %v3077 = vpop.f32.mrb[0].mxu0
    %v3078 = vadd.f32 0.0, %v3077
    %v3079 = vpop.f32.mrb[0].mxu0
    %v3080 = vadd.f32 0.0, %v3079
    %3081 = vmatprep.mubr.f32.mxu0 0.0
    %3082 = vmatmul.mubr.f32.gmra.mrb[0].mxu0 %v2871
    %v3083 = vpop.f32.mrb[0].mxu0
    %v3084 = vadd.f32 0.0, %v3083
    %v3085 = vpop.f32.mrb[0].mxu0
    %v3086 = vadd.f32 0.0, %v3085
    %3087 = vmatprep.mubr.f32.mxu0 0.0
    %3088 = vmatmul.mubr.f32.gmra.mrb[0].mxu0 %v2874
    %v3089 = vpop.f32.mrb[0].mxu0
    %v3090 = vadd.f32 0.0, %v3089
    %v3091 = vpop.f32.mrb[0].mxu0
    %v3092 = vadd.f32 0.0, %v3091
    %3093 = vmatprep.mubr.f32.mxu0 0.0
    %3094 = vmatmul.mubr.f32.gmra.mrb[0].mxu0 %v2877
    %v3095 = vpop.f32.mrb[0].mxu0
    %v3096 = vadd.f32 0.0, %v3095
    %v3097 = vpop.f32.mrb[0].mxu0
    %v3098 = vadd.f32 0.0, %v3097
    %3099 = vmatprep.mubr.f32.mxu0 0.0
    %3100 = vmatmul.mubr.f32.gmra.mrb[0].mxu0 %v2880
    %v3101 = vpop.f32.mrb[0].mxu0
    %v3102 = vadd.f32 0.0, %v3101
    %v3103 = vpop.f32.mrb[0].mxu0
    %v3104 = vadd.f32 0.0, %v3103
    %3105 = vmatprep.mubr.f32.mxu0 0.0
    %3106 = vmatmul.mubr.f32.gmra.mrb[0].mxu0 %v2883
    %v3107 = vpop.f32.mrb[0].mxu0
    %v3108 = vadd.f32 0.0, %v3107
    %v3109 = vpop.f32.mrb[0].mxu0
    %v3110 = vadd.f32 0.0, %v3109
    %3111 = vmatprep.mubr.f32.mxu0 0.0
    %3112 = vmatmul.mubr.f32.gmra.mrb[0].mxu0 %v2886
    %v3113 = vpop.f32.mrb[0].mxu0
    %v3114 = vadd.f32 0.0, %v3113
    %v3115 = vpop.f32.mrb[0].mxu0
    %v3116 = vadd.f32 0.0, %v3115
    %3117 = vmatprep.mubr.f32.mxu0 0.0
    %3118 = vmatmul.mubr.f32.gmra.mrb[0].mxu0 %v2889
    %v3119 = vpop.f32.mrb[0].mxu0
    %v3120 = vadd.f32 0.0, %v3119
    %v3121 = vpop.f32.mrb[0].mxu0
    %v3122 = vadd.f32 0.0, %v3121
    %3123 = vmatprep.mubr.f32.mxu0 0.0
    %3124 = vmatmul.mubr.f32.gmra.mrb[0].mxu0 %v2892
    %v3125 = vpop.f32.mrb[0].mxu0
    %v3126 = vadd.f32 0.0, %v3125
    %v3127 = vpop.f32.mrb[0].mxu0
    %v3128 = vadd.f32 0.0, %v3127
    %3129 = vmatprep.mubr.f32.mxu0 0.0
    %3130 = vmatmul.mubr.f32.gmra.mrb[0].mxu0 %v2895
    %v3131 = vpop.f32.mrb[0].mxu0
    %v3132 = vadd.f32 0.0, %v3131
    %v3133 = vpop.f32.mrb[0].mxu0
    %v3134 = vadd.f32 0.0, %v3133
    %3135 = vmatprep.mubr.f32.mxu0 0.0
    %3136 = vmatmul.mubr.f32.gmra.mrb[0].mxu0 %v2898
    %v3137 = vpop.f32.mrb[0].mxu0
    %v3138 = vadd.f32 0.0, %v3137
    %v3139 = vpop.f32.mrb[0].mxu0
    %v3140 = vadd.f32 0.0, %v3139
    %3141 = vmatprep.mubr.f32.mxu0 0.0
    %3142 = vmatmul.mubr.f32.gmra.mrb[0].mxu0 %v2901
    %v3143 = vpop.f32.mrb[0].mxu0
    %v3144 = vadd.f32 0.0, %v3143
    %v3145 = vpop.f32.mrb[0].mxu0
    %v3146 = vadd.f32 0.0, %v3145
    %3147 = vmatprep.mubr.f32.mxu0 0.0
    %3148 = vmatmul.mubr.f32.gmra.mrb[0].mxu0 %v2904
    %v3149 = vpop.f32.mrb[0].mxu0
    %v3150 = vadd.f32 0.0, %v3149
    %v3151 = vpop.f32.mrb[0].mxu0
    %v3152 = vadd.f32 0.0, %v3151
    %3153 = vmatprep.mubr.f32.mxu0 0.0
    %3154 = vmatmul.mubr.f32.gmra.mrb[0].mxu0 %v2907
    %v3155 = vpop.f32.mrb[0].mxu0
    %v3156 = vadd.f32 0.0, %v3155
    %v3157 = vpop.f32.mrb[0].mxu0
    %v3158 = vadd.f32 0.0, %v3157
    %3159 = vmatprep.mubr.f32.mxu0 0.0
    %3160 = vmatmul.mubr.f32.gmra.mrb[0].mxu0 %v2910
    %v3161 = vpop.f32.mrb[0].mxu0
    %v3162 = vadd.f32 0.0, %v3161
    %v3163 = vpop.f32.mrb[0].mxu0
    %v3164 = vadd.f32 0.0, %v3163
    %3165 = vmatprep.mubr.f32.mxu0 0.0
    %3166 = vmatmul.mubr.f32.gmra.mrb[0].mxu0 %v2913
    %v3167 = vpop.f32.mrb[0].mxu0
    %v3168 = vadd.f32 0.0, %v3167
    %v3169 = vpop.f32.mrb[0].mxu0
    %v3170 = vadd.f32 0.0, %v3169
    %3171 = vmatprep.mubr.f32.mxu0 0.0
    %3172 = vmatmul.mubr.f32.gmra.mrb[0].mxu0 %v2916
    %v3173 = vpop.f32.mrb[0].mxu0
    %v3174 = vadd.f32 0.0, %v3173
    %v3175 = vpop.f32.mrb[0].mxu0
    %v3176 = vadd.f32 0.0, %v3175
    %3177 = vmatprep.mubr.f32.mxu0 0.0
    %3178 = vmatmul.mubr.f32.gmra.mrb[0].mxu0 %v2919
    %v3179 = vpop.f32.mrb[0].mxu0
    %v3180 = vadd.f32 0.0, %v3179
    %v3181 = vpop.f32.mrb[0].mxu0
    %v3182 = vadd.f32 0.0, %v3181
    %3183 = vmatprep.mubr.f32.mxu0 0.0
    %3184 = vmatmul.mubr.f32.gmra.mrb[0].mxu0 %v2922
    %v3185 = vpop.f32.mrb[0].mxu0
    %v3186 = vadd.f32 0.0, %v3185
    %v3187 = vpop.f32.mrb[0].mxu0
    %v3188 = vadd.f32 0.0, %v3187
    %3189 = vdwg.mxu0
    %3190 = vmatprep.subr.mxu0 0.0
    %3191 = vmatpush1.msra.mxu0 %v109
    %3192 = vmatprep.subr.mxu0 0.0
    %3193 = vmatpush1.msra.mxu0 %v112
    %3194 = vmatprep.subr.mxu0 0.0
    %3195 = vmatpush1.msra.mxu0 %v115
    %3196 = vmatprep.subr.mxu0 0.0
    %3197 = vmatpush1.msra.mxu0 %v118
    %3198 = vmatprep.subr.mxu0 0.0
    %3199 = vmatpush1.msra.mxu0 %v2931
    %3200 = vmatprep.subr.mxu0 0.0
    %3201 = vmatpush1.msra.mxu0 0.0
    %3202 = vmatprep.subr.mxu0 0.0
    %3203 = vmatpush1.msra.mxu0 0.0
    %3204 = vmatprep.subr.mxu0 0.0
    %3205 = vmatpush1.msra.mxu0 0.0
    %3206 = vmatprep.subr.mxu0 0.0
    %3207 = vmatpush1.msra.mxu0 0.0
    %3208 = vmatprep.subr.mxu0 0.0
    %3209 = vmatpush1.msra.mxu0 0.0
    %3210 = vmatprep.subr.mxu0 0.0
    %3211 = vmatpush1.msra.mxu0 0.0
    %3212 = vmatprep.subr.mxu0 0.0
    %3213 = vmatpush1.msra.mxu0 0.0
    %3214 = vmatprep.subr.mxu0 0.0
    %3215 = vmatpush1.msra.mxu0 0.0
    %3216 = vmatprep.subr.mxu0 0.0
    %3217 = vmatpush1.msra.mxu0 0.0
    %3218 = vmatprep.subr.mxu0 0.0
    %3219 = vmatpush1.msra.mxu0 0.0
    %3220 = vmatprep.subr.mxu0 0.0
    %3221 = vmatpush1.msra.mxu0 0.0
    %3222 = vmatprep.subr.mxu0 0.0
    %3223 = vmatpush1.msra.mxu0 0.0
    %3224 = vmatprep.subr.mxu0 0.0
    %3225 = vmatpush1.msra.mxu0 0.0
    %3226 = vmatprep.subr.mxu0 0.0
    %3227 = vmatpush1.msra.mxu0 0.0
    %3228 = vmatprep.subr.mxu0 0.0
    %3229 = vmatpush1.msra.mxu0 0.0
    %3230 = vmatprep.subr.mxu0 0.0
    %3231 = vmatpush1.msra.mxu0 0.0
    %3232 = vmatprep.subr.mxu0 0.0
    %3233 = vmatpush1.msra.mxu0 0.0
    %3234 = vmatprep.subr.mxu0 0.0
    %3235 = vmatpush1.msra.mxu0 0.0
    %3236 = vmatprep.subr.mxu0 0.0
    %3237 = vmatpush1.msra.mxu0 0.0
    %3238 = vmatprep.subr.mxu0 0.0
    %3239 = vmatpush1.msra.mxu0 0.0
    %3240 = vmatprep.subr.mxu0 0.0
    %3241 = vmatpush1.msra.mxu0 0.0
    %3242 = vmatprep.subr.mxu0 0.0
    %3243 = vmatpush1.msra.mxu0 0.0
    %3244 = vmatprep.subr.mxu0 0.0
    %3245 = vmatpush1.msra.mxu0 0.0
    %3246 = vmatprep.subr.mxu0 0.0
    %3247 = vmatpush1.msra.mxu0 0.0
    %3248 = vmatprep.subr.mxu0 0.0
    %3249 = vmatpush1.msra.mxu0 0.0
    %3250 = vmatprep.subr.mxu0 0.0
    %3251 = vmatpush1.msra.mxu0 0.0
    %3252 = vmatprep.subr.mxu0 0.0
    %3253 = vmatpush1.msra.mxu0 0.0
    %3254 = vmatprep.mubr.f32.mxu0 0.0
    %3255 = vmatmul.mubr.f32.gmra.mrb[0].mxu0 %v2829
    %v3256 = vpop.f32.mrb[0].mxu0
    %v3257 = vadd.f32 0.0, %v3256
    %v3258 = vpop.f32.mrb[0].mxu0
    %3259 = vmatprep.mubr.f32.mxu0 0.0
    %3260 = vmatmul.mubr.f32.gmra.mrb[0].mxu0 %v2832
    %v3261 = vpop.f32.mrb[0].mxu0
    %v3262 = vadd.f32 0.0, %v3261
    %v3263 = vpop.f32.mrb[0].mxu0
    %3264 = vmatprep.mubr.f32.mxu0 0.0
    %3265 = vmatmul.mubr.f32.gmra.mrb[0].mxu0 %v2835
    %v3266 = vpop.f32.mrb[0].mxu0
    %v3267 = vadd.f32 0.0, %v3266
    %v3268 = vpop.f32.mrb[0].mxu0
    %3269 = vmatprep.mubr.f32.mxu0 0.0
    %3270 = vmatmul.mubr.f32.gmra.mrb[0].mxu0 %v2838
    %v3271 = vpop.f32.mrb[0].mxu0
    %v3272 = vadd.f32 0.0, %v3271
    %v3273 = vpop.f32.mrb[0].mxu0
    %3274 = vmatprep.mubr.f32.mxu0 0.0
    %3275 = vmatmul.mubr.f32.gmra.mrb[0].mxu0 %v2841
    %v3276 = vpop.f32.mrb[0].mxu0
    %v3277 = vadd.f32 0.0, %v3276
    %v3278 = vpop.f32.mrb[0].mxu0
    %3279 = vmatprep.mubr.f32.mxu0 0.0
    %3280 = vmatmul.mubr.f32.gmra.mrb[0].mxu0 %v2844
    %v3281 = vpop.f32.mrb[0].mxu0
    %v3282 = vadd.f32 0.0, %v3281
    %v3283 = vpop.f32.mrb[0].mxu0
    %3284 = vmatprep.mubr.f32.mxu0 0.0
    %3285 = vmatmul.mubr.f32.gmra.mrb[0].mxu0 %v2847
    %v3286 = vpop.f32.mrb[0].mxu0
    %v3287 = vadd.f32 0.0, %v3286
    %v3288 = vpop.f32.mrb[0].mxu0
    %3289 = vmatprep.mubr.f32.mxu0 0.0
    %3290 = vmatmul.mubr.f32.gmra.mrb[0].mxu0 %v2850
    %v3291 = vpop.f32.mrb[0].mxu0
    %v3292 = vadd.f32 0.0, %v3291
    %v3293 = vpop.f32.mrb[0].mxu0
    %3294 = vmatprep.mubr.f32.mxu0 0.0
    %3295 = vmatmul.mubr.f32.gmra.mrb[0].mxu0 %v2853
    %v3296 = vpop.f32.mrb[0].mxu0
    %v3297 = vadd.f32 0.0, %v3296
    %v3298 = vpop.f32.mrb[0].mxu0
    %3299 = vmatprep.mubr.f32.mxu0 0.0
    %3300 = vmatmul.mubr.f32.gmra.mrb[0].mxu0 %v2856
    %v3301 = vpop.f32.mrb[0].mxu0
    %v3302 = vadd.f32 0.0, %v3301
    %v3303 = vpop.f32.mrb[0].mxu0
    %3304 = vmatprep.mubr.f32.mxu0 0.0
    %3305 = vmatmul.mubr.f32.gmra.mrb[0].mxu0 %v2859
    %v3306 = vpop.f32.mrb[0].mxu0
    %v3307 = vadd.f32 0.0, %v3306
    %v3308 = vpop.f32.mrb[0].mxu0
    %3309 = vmatprep.mubr.f32.mxu0 0.0
    %3310 = vmatmul.mubr.f32.gmra.mrb[0].mxu0 %v2862
    %v3311 = vpop.f32.mrb[0].mxu0
    %v3312 = vadd.f32 0.0, %v3311
    %v3313 = vpop.f32.mrb[0].mxu0
    %3314 = vmatprep.mubr.f32.mxu0 0.0
    %3315 = vmatmul.mubr.f32.gmra.mrb[0].mxu0 %v2865
    %v3316 = vpop.f32.mrb[0].mxu0
    %v3317 = vadd.f32 0.0, %v3316
    %v3318 = vpop.f32.mrb[0].mxu0
    %3319 = vmatprep.mubr.f32.mxu0 0.0
    %3320 = vmatmul.mubr.f32.gmra.mrb[0].mxu0 %v2868
    %v3321 = vpop.f32.mrb[0].mxu0
    %v3322 = vadd.f32 0.0, %v3321
    %v3323 = vpop.f32.mrb[0].mxu0
    %3324 = vmatprep.mubr.f32.mxu0 0.0
    %3325 = vmatmul.mubr.f32.gmra.mrb[0].mxu0 %v2871
    %v3326 = vpop.f32.mrb[0].mxu0
    %v3327 = vadd.f32 0.0, %v3326
    %v3328 = vpop.f32.mrb[0].mxu0
    %3329 = vmatprep.mubr.f32.mxu0 0.0
    %3330 = vmatmul.mubr.f32.gmra.mrb[0].mxu0 %v2874
    %v3331 = vpop.f32.mrb[0].mxu0
    %v3332 = vadd.f32 0.0, %v3331
    %v3333 = vpop.f32.mrb[0].mxu0
    %3334 = vmatprep.mubr.f32.mxu0 0.0
    %3335 = vmatmul.mubr.f32.gmra.mrb[0].mxu0 %v2877
    %v3336 = vpop.f32.mrb[0].mxu0
    %v3337 = vadd.f32 0.0, %v3336
    %v3338 = vpop.f32.mrb[0].mxu0
    %3339 = vmatprep.mubr.f32.mxu0 0.0
    %3340 = vmatmul.mubr.f32.gmra.mrb[0].mxu0 %v2880
    %v3341 = vpop.f32.mrb[0].mxu0
    %v3342 = vadd.f32 0.0, %v3341
    %v3343 = vpop.f32.mrb[0].mxu0
    %3344 = vmatprep.mubr.f32.mxu0 0.0
    %3345 = vmatmul.mubr.f32.gmra.mrb[0].mxu0 %v2883
    %v3346 = vpop.f32.mrb[0].mxu0
    %v3347 = vadd.f32 0.0, %v3346
    %v3348 = vpop.f32.mrb[0].mxu0
    %3349 = vmatprep.mubr.f32.mxu0 0.0
    %3350 = vmatmul.mubr.f32.gmra.mrb[0].mxu0 %v2886
    %v3351 = vpop.f32.mrb[0].mxu0
    %v3352 = vadd.f32 0.0, %v3351
    %v3353 = vpop.f32.mrb[0].mxu0
    %3354 = vmatprep.mubr.f32.mxu0 0.0
    %3355 = vmatmul.mubr.f32.gmra.mrb[0].mxu0 %v2889
    %v3356 = vpop.f32.mrb[0].mxu0
    %v3357 = vadd.f32 0.0, %v3356
    %v3358 = vpop.f32.mrb[0].mxu0
    %3359 = vmatprep.mubr.f32.mxu0 0.0
    %3360 = vmatmul.mubr.f32.gmra.mrb[0].mxu0 %v2892
    %v3361 = vpop.f32.mrb[0].mxu0
    %v3362 = vadd.f32 0.0, %v3361
    %v3363 = vpop.f32.mrb[0].mxu0
    %3364 = vmatprep.mubr.f32.mxu0 0.0
    %3365 = vmatmul.mubr.f32.gmra.mrb[0].mxu0 %v2895
    %v3366 = vpop.f32.mrb[0].mxu0
    %v3367 = vadd.f32 0.0, %v3366
    %v3368 = vpop.f32.mrb[0].mxu0
    %3369 = vmatprep.mubr.f32.mxu0 0.0
    %3370 = vmatmul.mubr.f32.gmra.mrb[0].mxu0 %v2898
    %v3371 = vpop.f32.mrb[0].mxu0
    %v3372 = vadd.f32 0.0, %v3371
    %v3373 = vpop.f32.mrb[0].mxu0
    %3374 = vmatprep.mubr.f32.mxu0 0.0
    %3375 = vmatmul.mubr.f32.gmra.mrb[0].mxu0 %v2901
    %v3376 = vpop.f32.mrb[0].mxu0
    %v3377 = vadd.f32 0.0, %v3376
    %v3378 = vpop.f32.mrb[0].mxu0
    %3379 = vmatprep.mubr.f32.mxu0 0.0
    %3380 = vmatmul.mubr.f32.gmra.mrb[0].mxu0 %v2904
    %v3381 = vpop.f32.mrb[0].mxu0
    %v3382 = vadd.f32 0.0, %v3381
    %v3383 = vpop.f32.mrb[0].mxu0
    %3384 = vmatprep.mubr.f32.mxu0 0.0
    %3385 = vmatmul.mubr.f32.gmra.mrb[0].mxu0 %v2907
    %v3386 = vpop.f32.mrb[0].mxu0
    %v3387 = vadd.f32 0.0, %v3386
    %v3388 = vpop.f32.mrb[0].mxu0
    %3389 = vmatprep.mubr.f32.mxu0 0.0
    %3390 = vmatmul.mubr.f32.gmra.mrb[0].mxu0 %v2910
    %v3391 = vpop.f32.mrb[0].mxu0
    %v3392 = vadd.f32 0.0, %v3391
    %v3393 = vpop.f32.mrb[0].mxu0
    %3394 = vmatprep.mubr.f32.mxu0 0.0
    %3395 = vmatmul.mubr.f32.gmra.mrb[0].mxu0 %v2913
    %v3396 = vpop.f32.mrb[0].mxu0
    %v3397 = vadd.f32 0.0, %v3396
    %v3398 = vpop.f32.mrb[0].mxu0
    %3399 = vmatprep.mubr.f32.mxu0 0.0
    %3400 = vmatmul.mubr.f32.gmra.mrb[0].mxu0 %v2916
    %v3401 = vpop.f32.mrb[0].mxu0
    %v3402 = vadd.f32 0.0, %v3401
    %v3403 = vpop.f32.mrb[0].mxu0
    %3404 = vmatprep.mubr.f32.mxu0 0.0
    %3405 = vmatmul.mubr.f32.gmra.mrb[0].mxu0 %v2919
    %v3406 = vpop.f32.mrb[0].mxu0
    %v3407 = vadd.f32 0.0, %v3406
    %v3408 = vpop.f32.mrb[0].mxu0
    %3409 = vmatprep.mubr.f32.mxu0 0.0
    %3410 = vmatmul.mubr.f32.gmra.mrb[0].mxu0 %v2922
    %v3411 = vpop.f32.mrb[0].mxu0
    %v3412 = vadd.f32 0.0, %v3411
    %v3413 = vpop.f32.mrb[0].mxu0
    %3414 = vdwg.mxu0
    %v3415 = vadd.f32 %v2699, %v3000
    %v3416 = vadd.f32 %v2700, %v3002
    %v3417 = vadd.f32 %v2701, %v3257
    %v3418 = vadd.f32 %v2702, %v3006
    %v3419 = vadd.f32 %v2703, %v3008
    %v3420 = vadd.f32 %v2704, %v3262
    %v3421 = vadd.f32 %v2705, %v3012
    %v3422 = vadd.f32 %v2706, %v3014
    %v3423 = vadd.f32 %v2707, %v3267
    %v3424 = vadd.f32 %v2708, %v3018
    %v3425 = vadd.f32 %v2709, %v3020
    %v3426 = vadd.f32 %v2710, %v3272
    %v3427 = vadd.f32 %v2711, %v3024
    %v3428 = vadd.f32 %v2712, %v3026
    %v3429 = vadd.f32 %v2713, %v3277
    %v3430 = vadd.f32 %v2714, %v3030
    %v3431 = vadd.f32 %v2715, %v3032
    %v3432 = vadd.f32 %v2716, %v3282
    %v3433 = vadd.f32 %v2717, %v3036
    %v3434 = vadd.f32 %v2718, %v3038
    %v3435 = vadd.f32 %v2719, %v3287
    %v3436 = vadd.f32 %v2720, %v3042
    %v3437 = vadd.f32 %v2721, %v3044
    %v3438 = vadd.f32 %v2722, %v3292
    %v3439 = vadd.f32 %v2723, %v3048
    %v3440 = vadd.f32 %v2724, %v3050
    %v3441 = vadd.f32 %v2725, %v3297
    %v3442 = vadd.f32 %v2726, %v3054
    %v3443 = vadd.f32 %v2727, %v3056
    %v3444 = vadd.f32 %v2728, %v3302
    %v3445 = vadd.f32 %v2729, %v3060
    %v3446 = vadd.f32 %v2730, %v3062
    %v3447 = vadd.f32 %v2731, %v3307
    %v3448 = vadd.f32 %v2732, %v3066
    %v3449 = vadd.f32 %v2733, %v3068
    %v3450 = vadd.f32 %v2734, %v3312
    %v3451 = vadd.f32 %v2735, %v3072
    %v3452 = vadd.f32 %v2736, %v3074
    %v3453 = vadd.f32 %v2737, %v3317
    %v3454 = vadd.f32 %v2738, %v3078
    %v3455 = vadd.f32 %v2739, %v3080
    %v3456 = vadd.f32 %v2740, %v3322
    %v3457 = vadd.f32 %v2741, %v3084
    %v3458 = vadd.f32 %v2742, %v3086
    %v3459 = vadd.f32 %v2743, %v3327
    %v3460 = vadd.f32 %v2744, %v3090
    %v3461 = vadd.f32 %v2745, %v3092
    %v3462 = vadd.f32 %v2746, %v3332
    %v3463 = vadd.f32 %v2747, %v3096
    %v3464 = vadd.f32 %v2748, %v3098
    %v3465 = vadd.f32 %v2749, %v3337
    %v3466 = vadd.f32 %v2750, %v3102
    %v3467 = vadd.f32 %v2751, %v3104
    %v3468 = vadd.f32 %v2752, %v3342
    %v3469 = vadd.f32 %v2753, %v3108
    %v3470 = vadd.f32 %v2754, %v3110
    %v3471 = vadd.f32 %v2755, %v3347
    %v3472 = vadd.f32 %v2756, %v3114
    %v3473 = vadd.f32 %v2757, %v3116
    %v3474 = vadd.f32 %v2758, %v3352
    %v3475 = vadd.f32 %v2759, %v3120
    %v3476 = vadd.f32 %v2760, %v3122
    %v3477 = vadd.f32 %v2761, %v3357
    %v3478 = vadd.f32 %v2762, %v3126
    %v3479 = vadd.f32 %v2763, %v3128
    %v3480 = vadd.f32 %v2764, %v3362
    %v3481 = vadd.f32 %v2765, %v3132
    %v3482 = vadd.f32 %v2766, %v3134
    %v3483 = vadd.f32 %v2767, %v3367
    %v3484 = vadd.f32 %v2768, %v3138
    %v3485 = vadd.f32 %v2769, %v3140
    %v3486 = vadd.f32 %v2770, %v3372
    %v3487 = vadd.f32 %v2771, %v3144
    %v3488 = vadd.f32 %v2772, %v3146
    %v3489 = vadd.f32 %v2773, %v3377
    %v3490 = vadd.f32 %v2774, %v3150
    %v3491 = vadd.f32 %v2775, %v3152
    %v3492 = vadd.f32 %v2776, %v3382
    %v3493 = vadd.f32 %v2777, %v3156
    %v3494 = vadd.f32 %v2778, %v3158
    %v3495 = vadd.f32 %v2779, %v3387
    %v3496 = vadd.f32 %v2780, %v3162
    %v3497 = vadd.f32 %v2781, %v3164
    %v3498 = vadd.f32 %v2782, %v3392
    %v3499 = vadd.f32 %v2783, %v3168
    %v3500 = vadd.f32 %v2784, %v3170
    %v3501 = vadd.f32 %v2785, %v3397
    %v3502 = vadd.f32 %v2786, %v3174
    %v3503 = vadd.f32 %v2787, %v3176
    %v3504 = vadd.f32 %v2788, %v3402
    %v3505 = vadd.f32 %v2789, %v3180
    %v3506 = vadd.f32 %v2790, %v3182
    %v3507 = vadd.f32 %v2791, %v3407
    %v3508 = vadd.f32 %v2792, %v3186
    %v3509 = vadd.f32 %v2793, %v3188
    %v3510 = vadd.f32 %v2794, %v3412
    %v3511 = vmax.f32 %v3415, %v3421
    %v3512 = vmax.f32 %v3511, %v3427
    %v3513 = vmax.f32 %v3512, %v3433
    %v3514 = vmax.f32 %v3513, %v3439
    %v3515 = vmax.f32 %v3514, %v3445
    %v3516 = vmax.f32 %v3515, %v3451
    %v3517 = vmax.f32 %v3516, %v3457
    %v3518 = vmax.f32 %v3517, %v3463
    %v3519 = vmax.f32 %v3518, %v3469
    %v3520 = vmax.f32 %v3519, %v3475
    %v3521 = vmax.f32 %v3520, %v3481
    %v3522 = vmax.f32 %v3521, %v3487
    %v3523 = vmax.f32 %v3522, %v3493
    %v3524 = vmax.f32 %v3523, %v3499
    %v3525 = vmax.f32 %v3524, %v3505
    %v3526 = vmax.f32 %v3416, %v3422
    %v3527 = vmax.f32 %v3526, %v3428
    %v3528 = vmax.f32 %v3527, %v3434
    %v3529 = vmax.f32 %v3528, %v3440
    %v3530 = vmax.f32 %v3529, %v3446
    %v3531 = vmax.f32 %v3530, %v3452
    %v3532 = vmax.f32 %v3531, %v3458
    %v3533 = vmax.f32 %v3532, %v3464
    %v3534 = vmax.f32 %v3533, %v3470
    %v3535 = vmax.f32 %v3534, %v3476
    %v3536 = vmax.f32 %v3535, %v3482
    %v3537 = vmax.f32 %v3536, %v3488
    %v3538 = vmax.f32 %v3537, %v3494
    %v3539 = vmax.f32 %v3538, %v3500
    %v3540 = vmax.f32 %v3539, %v3506
    %v3541 = vmax.f32 %v3417, %v3423
    %v3542 = vmax.f32 %v3541, %v3429
    %v3543 = vmax.f32 %v3542, %v3435
    %v3544 = vmax.f32 %v3543, %v3441
    %v3545 = vmax.f32 %v3544, %v3447
    %v3546 = vmax.f32 %v3545, %v3453
    %v3547 = vmax.f32 %v3546, %v3459
    %v3548 = vmax.f32 %v3547, %v3465
    %v3549 = vmax.f32 %v3548, %v3471
    %v3550 = vmax.f32 %v3549, %v3477
    %v3551 = vmax.f32 %v3550, %v3483
    %v3552 = vmax.f32 %v3551, %v3489
    %v3553 = vmax.f32 %v3552, %v3495
    %v3554 = vmax.f32 %v3553, %v3501
    %v3555 = vmax.f32 %v3554, %v3507
    %v3556 = vmax.f32 %v3418, %v3424
    %v3557 = vmax.f32 %v3556, %v3430
    %v3558 = vmax.f32 %v3557, %v3436
    %v3559 = vmax.f32 %v3558, %v3442
    %v3560 = vmax.f32 %v3559, %v3448
    %v3561 = vmax.f32 %v3560, %v3454
    %v3562 = vmax.f32 %v3561, %v3460
    %v3563 = vmax.f32 %v3562, %v3466
    %v3564 = vmax.f32 %v3563, %v3472
    %v3565 = vmax.f32 %v3564, %v3478
    %v3566 = vmax.f32 %v3565, %v3484
    %v3567 = vmax.f32 %v3566, %v3490
    %v3568 = vmax.f32 %v3567, %v3496
    %v3569 = vmax.f32 %v3568, %v3502
    %v3570 = vmax.f32 %v3569, %v3508
    %v3571 = vmax.f32 %v3419, %v3425
    %v3572 = vmax.f32 %v3571, %v3431
    %v3573 = vmax.f32 %v3572, %v3437
    %v3574 = vmax.f32 %v3573, %v3443
    %v3575 = vmax.f32 %v3574, %v3449
    %v3576 = vmax.f32 %v3575, %v3455
    %v3577 = vmax.f32 %v3576, %v3461
    %v3578 = vmax.f32 %v3577, %v3467
    %v3579 = vmax.f32 %v3578, %v3473
    %v3580 = vmax.f32 %v3579, %v3479
    %v3581 = vmax.f32 %v3580, %v3485
    %v3582 = vmax.f32 %v3581, %v3491
    %v3583 = vmax.f32 %v3582, %v3497
    %v3584 = vmax.f32 %v3583, %v3503
    %v3585 = vmax.f32 %v3584, %v3509
    %v3586 = vmax.f32 %v3420, %v3426
    %v3587 = vmax.f32 %v3586, %v3432
    %v3588 = vmax.f32 %v3587, %v3438
    %v3589 = vmax.f32 %v3588, %v3444
    %v3590 = vmax.f32 %v3589, %v3450
    %v3591 = vmax.f32 %v3590, %v3456
    %v3592 = vmax.f32 %v3591, %v3462
    %v3593 = vmax.f32 %v3592, %v3468
    %v3594 = vmax.f32 %v3593, %v3474
    %v3595 = vmax.f32 %v3594, %v3480
    %v3596 = vmax.f32 %v3595, %v3486
    %v3597 = vmax.f32 %v3596, %v3492
    %v3598 = vmax.f32 %v3597, %v3498
    %v3599 = vmax.f32 %v3598, %v3504
    %v3600 = vmax.f32 %v3599, %v3510
    %v3601 = vmax.f32 %v3525, -1e+30
    %v3602 = vmax.f32 %v3540, -1e+30
    %v3603 = vmax.f32 %v3555, -1e+30
    %v3604 = vmax.f32 %v3570, -1e+30
    %v3605 = vmax.f32 %v3585, -1e+30
    %v3606 = vmax.f32 %v3600, -1e+30
    %v3607 = vld [vmem:[%s2] sm:$0x7]
    %v3609 = vlaneseq
    %v3610 = vshrl.u32 %v3609, 7
    %v3611 = vsub.s32 0, %v3610
    %v3612 = vrot.slane %v3607, %v3611
    %v3613 = vlaneseq
    %v3614 = vshrl.u32 %v3613, 7
    %v3615 = vsub.s32 1, %v3614
    %v3616 = vrot.slane %v3607, %v3615
    %v3617 = vlaneseq
    %v3618 = vshrl.u32 %v3617, 7
    %v3619 = vsub.s32 2, %v3618
    %v3620 = vrot.slane %v3607, %v3619
    %v3624 = vadd.f32 %v3601, %v3612
    %v3625 = vadd.f32 %v3602, %v3616
    %v3626 = vadd.f32 %v3603, %v3620
    %v3627 = vadd.f32 %v3604, %v3612
    %v3628 = vadd.f32 %v3605, %v3616
    %v3629 = vadd.f32 %v3606, %v3620
    %v3630 = vmax.f32 %v3624, 0.0
    %v3631 = vmax.f32 %v3625, 0.0
    %v3632 = vmax.f32 %v3626, 0.0
    %v3633 = vmax.f32 %v3627, 0.0
    %v3634 = vmax.f32 %v3628, 0.0
    %v3635 = vmax.f32 %v3629, 0.0
    %3636 = vst [vmem:[#allocation7] sm:$0xff] %v3630
    %3637 = vst [vmem:[#allocation7 + $0x8] sm:$0xff] %v3631
    %3638 = vst [vmem:[#allocation7 + $0x10] sm:$0xff] %v3632
    %3639 = vst [vmem:[#allocation7 + $0x18] sm:$0xff] %v3633
    %3640 = vst [vmem:[#allocation7 + $0x20] sm:$0xff] %v3634
    %3641 = vst [vmem:[#allocation7 + $0x28] sm:$0xff] %v3635
    // Predicated region
    $region22: #{tpu_custom_call.1} parent=1 // pred_check
      _
    $region23: #{tpu_custom_call.1} parent=1 // pred_check_branch
      %3643 = sbr.rel (0) target = $region25
    $region24: #{tpu_custom_call.1} parent=1 // pred_region
      %s3645 = ssub.s32 768, 768
      %3646 = vsyncadd [#allocation4], %s3645
      %s3647 = sshll.u32 [#allocation7], 4
      %s3648 = int_to_ptr.vmem [resolvable:$true] %s3647
      %3653 = dma.vmem_to_hbm [thread:$0]  %s3648, 768, %s3, [#allocation4], 384, 384, 24
    $region25: #{tpu_custom_call.1} parent=1 // pred_fallthru
      _
    // Predicated region
    $region26: #{tpu_custom_call.1} parent=1 // pred_check
      _
    $region27: #{tpu_custom_call.1} parent=1 // pred_check_branch
      %3655 = sbr.rel (0) target = $region29
    $region28: #{tpu_custom_call.1} parent=1 // pred_region
      %3656 = dma.done [#allocation4], 768
    $region29: #{tpu_custom_call.1} parent=1 // pred_fallthru
      _
    %3657 = vsyncpa [#allocation3], 1
    %3658 = vsyncpa [#allocation6], 1
    %3659 = vsyncpa [#allocation4], 1

</llo_original>
